<compile_context>
chip_gen: v7x
topology: tpu7x:2x2x1
jax: 0.10.0
libtpu: 0.0.40
codegen_flags: <defaults>
</compile_context>

<pallas_src>
import functools

import jax
import jax.numpy as jnp
from jax.experimental import pallas as pl
from jax.experimental.pallas import tpu as pltpu


def _round_up(x, m):
    return (x + m - 1) // m * m


def _tensorcores_per_chip():
    """Best-effort TensorCores-per-chip detection (v7x / v4 / v5p -> 2)."""
    # TODO(synk): switch to pltpu.get_tpu_info() core-count fields once their
    # names are stable across jax versions; device_kind matching is the
    # robust fallback (worst case -> 1 step, still correct everywhere).
    try:
        kind = jax.devices()[0].device_kind.lower()
    except Exception:  # pragma: no cover - defensive
        return 1
    for tag in ("v7", "7x", "tpu7", "v4", "v5p"):
        if tag in kind:
            return 2
    return 1


def mlp_kernel(x_ref, w1_ref, b1_ref, gw2_ref, c2_ref, o_ref):
    # ---- Linear 1 on the MXU: (T, K) @ (K, H), fp32 accumulation ----
    w1 = w1_ref[...]                         # bf16 (pre-cast in wrapper) or fp32
    x = x_ref[...].astype(w1.dtype)          # per-tile cast only (VPU, cheap)
    h = jnp.dot(x, w1, preferred_element_type=jnp.float32) + b1_ref[...]

    # ---- ReLU (VPU) ----
    h = jnp.maximum(h, 0.0)

    # ---- LayerNorm statistics over the hidden dim (fp32, eps = 1e-5) ----
    inv_h = 1.0 / h.shape[-1]                               # static constant
    mean = jnp.sum(h, axis=-1, keepdims=True) * inv_h       # (T, 1)
    c = h - mean
    var = jnp.sum(c * c, axis=-1) * inv_h                   # (T,)

    # ---- Folded LN-affine + Linear-2 (N=1): one VPU mul + lane reduction ----
    #   out = rstd * sum(c * (gamma*w2), -1) + (sum(beta*w2) + b2)
    dot = jnp.sum(c * gw2_ref[...], axis=-1)                # (T,)
    out = dot * jax.lax.rsqrt(var + 1e-5) + c2_ref[0, 0]
    o_ref[...] = out[None, :].astype(o_ref.dtype)           # lane-dense (1, T)


def mlp_forward(x, w1, b1, gamma, beta, w2, b2, *,
                max_tile_rows=2048, use_bf16_matmul=True):
    B, num_inputs = x.shape
    num_hiddens = w1.shape[1]

    # --- Generation-aware tile sizing (one step per TensorCore) ---
    n_cores = _tensorcores_per_chip()
    t = _round_up(pl.cdiv(B, n_cores), 128)        # lane-dense output stores
    t = min(t, _round_up(max_tile_rows, 128))      # VMEM cap for huge batches
    grid_steps = pl.cdiv(B, t)                     # no jnp.pad; last tile may
                                                   # overhang, junk rows are
                                                   # sliced off below.

    # --- Wrapper-side parameter prep (done once, not per grid step) ---
    w1_in = w1.astype(jnp.bfloat16) if use_bf16_matmul else w1
    b1_2d = b1.reshape(1, num_hiddens).astype(jnp.float32)
    w2_row = w2.reshape(num_hiddens)
    gw2 = (gamma * w2_row).reshape(1, num_hiddens).astype(jnp.float32)
    c2 = (jnp.sum(beta * w2_row) + b2.reshape(())).reshape(1, 1).astype(jnp.float32)

    params_map = lambda i: (0, 0)                  # resident block every step

    # TODO(synk): when num_inputs*num_hiddens outgrows v7x's 64 MiB VMEM
    # (32 MiB scoped default), give the invariant param specs
    # pipeline_mode=pl.Buffered(1) and K-tile W1 on an inner 'arbitrary'
    # grid axis with an fp32 acc scratch; at these sizes whole-W1 residency
    # is fine and extra grid axes would only add loop overhead.
    out = pl.pallas_call(
        mlp_kernel,
        out_shape=jax.ShapeDtypeStruct((grid_steps, t), jnp.float32),
        grid_spec=pltpu.PrefetchScalarGridSpec(
            num_scalar_prefetch=0,
            grid=(grid_steps,),
            in_specs=[
                pl.BlockSpec((t, num_inputs), lambda i: (i, 0)),      # x tile
                pl.BlockSpec((num_inputs, num_hiddens), params_map),  # W1 (bf16)
                pl.BlockSpec((1, num_hiddens), params_map),           # b1
                pl.BlockSpec((1, num_hiddens), params_map),           # gamma*w2
                pl.BlockSpec((1, 1), params_map),                     # sum(beta*w2)+b2
            ],
            # Lane-dense output slab: one (1, t) row per grid step.
            out_specs=pl.BlockSpec((1, t), lambda i: (i, 0)),
        ),
        compiler_params=pltpu.CompilerParams(
            dimension_semantics=("parallel",),     # shard row tiles across TCs
            vmem_limit_bytes=32 * 1024 * 1024,
        ),
    )(x, w1_in, b1_2d, gw2, c2)

    # (grid_steps, t) slab -> (B, 1); drops any overhanging junk rows.
    return out.reshape(grid_steps * t, 1)[:B]


if __name__ == "__main__":
    # Small shapes consistent with the module's forward (X: (batch, num_inputs)).
    B = 512            # 1 step on v5e/v6e, 2 "parallel" steps on v7x
    num_inputs = 64
    num_hiddens = 128

    key = jax.random.PRNGKey(0)
    kx, kw1, kb1, kw2, kb2 = jax.random.split(key, 5)

    x = jax.random.normal(kx, (B, num_inputs), dtype=jnp.float32)

    # Deterministic synthetic parameters (shapes match nn.Linear / nn.LayerNorm).
    bound1 = 1.0 / jnp.sqrt(num_inputs)
    w1 = jax.random.uniform(kw1, (num_inputs, num_hiddens),
                            minval=-bound1, maxval=bound1, dtype=jnp.float32)
    b1 = jax.random.uniform(kb1, (num_hiddens,),
                            minval=-bound1, maxval=bound1, dtype=jnp.float32)
    gamma = jnp.ones((num_hiddens,), dtype=jnp.float32)
    beta = jnp.zeros((num_hiddens,), dtype=jnp.float32)
    bound2 = 1.0 / jnp.sqrt(num_hiddens)
    w2 = jax.random.uniform(kw2, (num_hiddens, 1),
                            minval=-bound2, maxval=bound2, dtype=jnp.float32)
    b2 = jax.random.uniform(kb2, (1,),
                            minval=-bound2, maxval=bound2, dtype=jnp.float32)

    out = mlp_forward(x, w1, b1, gamma, beta, w2, b2)
    jax.block_until_ready(out)
    assert out.shape == (B, 1)

    # Matched-precision reference (bf16 MXU operands, fp32 accumulation + LN).
    h = jnp.dot(x.astype(jnp.bfloat16), w1.astype(jnp.bfloat16),
                preferred_element_type=jnp.float32) + b1
    h = jnp.maximum(h, 0.0)
    mu = jnp.mean(h, axis=-1, keepdims=True)
    var = jnp.mean((h - mu) ** 2, axis=-1, keepdims=True)
    hn = (h - mu) * jax.lax.rsqrt(var + 1e-5) * gamma + beta
    ref = jnp.dot(hn, w2, precision=jax.lax.Precision.HIGHEST) + b2
    assert jnp.allclose(out, ref, atol=1e-4, rtol=1e-4), \
        float(jnp.max(jnp.abs(out - ref)))

    # Loose sanity check against the full-fp32 module semantics.
    h32 = jnp.maximum(jnp.dot(x, w1, precision=jax.lax.Precision.HIGHEST) + b1, 0.0)
    mu32 = jnp.mean(h32, axis=-1, keepdims=True)
    var32 = jnp.mean((h32 - mu32) ** 2, axis=-1, keepdims=True)
    hn32 = (h32 - mu32) / jnp.sqrt(var32 + 1e-5) * gamma + beta
    ref32 = jnp.dot(hn32, w2, precision=jax.lax.Precision.HIGHEST) + b2
    assert jnp.allclose(out, ref32, atol=1e-1, rtol=1e-1), \
        float(jnp.max(jnp.abs(out - ref32)))

    print("KERNEL_OK")
</pallas_src>

<mosaic_0001>
module attributes {stable_mosaic.version = 11 : i64} {
  func.func @mlp_kernel(%arg0: i32, %arg1: memref<512x64xf32, #tpu.memory_space<vmem>>, %arg2: memref<64x128xbf16, #tpu.memory_space<vmem>>, %arg3: memref<1x128xf32, #tpu.memory_space<vmem>>, %arg4: memref<1x128xf32, #tpu.memory_space<vmem>>, %arg5: memref<1x1xf32, #tpu.memory_space<vmem>>, %arg6: memref<1x512xf32, #tpu.memory_space<vmem>>) attributes {dimension_semantics = [#tpu.dimension_semantics<parallel>], iteration_bounds = array<i64: 1>, scalar_prefetch = 0 : i64, scratch_operands = 0 : i64, tpu.core_type = #tpu.core_type<tc>, window_params = [{transform_indices = @transform_0, window_bounds = array<i64: 512, 64>}, {pipeline_mode = #tpu.pipeline_mode<synchronous>, transform_indices = @transform_1, window_bounds = array<i64: 64, 128>}, {pipeline_mode = #tpu.pipeline_mode<synchronous>, transform_indices = @transform_2, window_bounds = array<i64: 1, 128>}, {pipeline_mode = #tpu.pipeline_mode<synchronous>, transform_indices = @transform_3, window_bounds = array<i64: 1, 128>}, {pipeline_mode = #tpu.pipeline_mode<synchronous>, transform_indices = @transform_4, window_bounds = array<i64: 1, 1>}, {transform_indices = @transform_5, window_bounds = array<i64: 1, 512>}]} {
    %c0 = arith.constant 0 : index
    %c0_0 = arith.constant 0 : index
    %0 = vector.load %arg2[%c0, %c0_0] : memref<64x128xbf16, #tpu.memory_space<vmem>>, vector<64x128xbf16>
    %c0_1 = arith.constant 0 : index
    %c0_2 = arith.constant 0 : index
    %1 = vector.load %arg1[%c0_1, %c0_2] : memref<512x64xf32, #tpu.memory_space<vmem>>, vector<512x64xf32>
    %2 = arith.truncf %1 : vector<512x64xf32> to vector<512x64xbf16>
    %cst = arith.constant dense<0.000000e+00> : vector<512x128xf32>
    %3 = tpu.matmul %2, %0, %cst {dimension_numbers = #tpu.dot_dimension_numbers<[1], [0], [0], [1], [0, 0, 1, 1], [], []>} : vector<512x64xbf16>, vector<64x128xbf16>, vector<512x128xf32> -> vector<512x128xf32>
    %c0_3 = arith.constant 0 : index
    %c0_4 = arith.constant 0 : index
    %4 = vector.load %arg3[%c0_3, %c0_4] : memref<1x128xf32, #tpu.memory_space<vmem>>, vector<1x128xf32>
    %5 = vector.broadcast %4 : vector<1x128xf32> to vector<512x128xf32>
    %6 = arith.addf %3, %5 : vector<512x128xf32>
    %cst_5 = arith.constant 0.000000e+00 : f32
    %7 = vector.broadcast %cst_5 : f32 to vector<512x128xf32>
    %8 = arith.maximumf %6, %7 : vector<512x128xf32>
    %cst_6 = arith.constant dense<0.000000e+00> : vector<512xf32>
    %9 = vector.multi_reduction <add>, %8, %cst_6 [1] : vector<512x128xf32> to vector<512xf32>
    %10 = vector.shape_cast %9 : vector<512xf32> to vector<512x1xf32>
    %cst_7 = arith.constant 7.812500e-03 : f32
    %11 = vector.broadcast %cst_7 : f32 to vector<512x1xf32>
    %12 = arith.mulf %10, %11 : vector<512x1xf32>
    %13 = vector.broadcast %12 : vector<512x1xf32> to vector<512x128xf32>
    %14 = arith.subf %8, %13 : vector<512x128xf32>
    %15 = arith.mulf %14, %14 : vector<512x128xf32>
    %cst_8 = arith.constant dense<0.000000e+00> : vector<512xf32>
    %16 = vector.multi_reduction <add>, %15, %cst_8 [1] : vector<512x128xf32> to vector<512xf32>
    %cst_9 = arith.constant 7.812500e-03 : f32
    %17 = vector.broadcast %cst_9 : f32 to vector<512xf32>
    %18 = arith.mulf %16, %17 : vector<512xf32>
    %c0_10 = arith.constant 0 : index
    %c0_11 = arith.constant 0 : index
    %19 = vector.load %arg4[%c0_10, %c0_11] : memref<1x128xf32, #tpu.memory_space<vmem>>, vector<1x128xf32>
    %20 = vector.broadcast %19 : vector<1x128xf32> to vector<512x128xf32>
    %21 = arith.mulf %14, %20 : vector<512x128xf32>
    %cst_12 = arith.constant dense<0.000000e+00> : vector<512xf32>
    %22 = vector.multi_reduction <add>, %21, %cst_12 [1] : vector<512x128xf32> to vector<512xf32>
    %cst_13 = arith.constant 9.99999974E-6 : f32
    %23 = vector.broadcast %cst_13 : f32 to vector<512xf32>
    %24 = arith.addf %18, %23 : vector<512xf32>
    %25 = math.rsqrt %24 : vector<512xf32>
    %26 = arith.mulf %22, %25 : vector<512xf32>
    %c0_14 = arith.constant 0 : index
    %c0_15 = arith.constant 0 : index
    %27 = vector.load %arg5[%c0_14, %c0_15] : memref<1x1xf32, #tpu.memory_space<vmem>>, vector<1x1xf32>
    %28 = vector.extract %27[0, 0] : f32 from vector<1x1xf32>
    %29 = vector.broadcast %28 : f32 to vector<512xf32>
    %30 = arith.addf %26, %29 : vector<512xf32>
    %31 = vector.shape_cast %30 : vector<512xf32> to vector<1x512xf32>
    %c0_16 = arith.constant 0 : index
    %c0_17 = arith.constant 0 : index
    %32 = vector.load %arg6[%c0_16, %c0_17] : memref<1x512xf32, #tpu.memory_space<vmem>>, vector<1x512xf32>
    tpu.vector_store %arg6[%c0_16, %c0_17], %31 {strides = array<i32>} : memref<1x512xf32, #tpu.memory_space<vmem>>, vector<1x512xf32>,
    return
  }
  func.func @transform_0(%arg0: i32) -> (i32, i32) {
    %c0_i32 = arith.constant 0 : i32
    %c0_i32_0 = arith.constant 0 : i32
    return %arg0, %c0_i32 : i32, i32
  }
  func.func @transform_1(%arg0: i32) -> (i32, i32) {
    %c0_i32 = arith.constant 0 : i32
    %c0_i32_0 = arith.constant 0 : i32
    %c0_i32_1 = arith.constant 0 : i32
    return %c0_i32, %c0_i32_0 : i32, i32
  }
  func.func @transform_2(%arg0: i32) -> (i32, i32) {
    %c0_i32 = arith.constant 0 : i32
    %c0_i32_0 = arith.constant 0 : i32
    %c0_i32_1 = arith.constant 0 : i32
    return %c0_i32, %c0_i32_0 : i32, i32
  }
  func.func @transform_3(%arg0: i32) -> (i32, i32) {
    %c0_i32 = arith.constant 0 : i32
    %c0_i32_0 = arith.constant 0 : i32
    %c0_i32_1 = arith.constant 0 : i32
    return %c0_i32, %c0_i32_0 : i32, i32
  }
  func.func @transform_4(%arg0: i32) -> (i32, i32) {
    %c0_i32 = arith.constant 0 : i32
    %c0_i32_0 = arith.constant 0 : i32
    %c0_i32_1 = arith.constant 0 : i32
    return %c0_i32, %c0_i32_0 : i32, i32
  }
  func.func @transform_5(%arg0: i32) -> (i32, i32) {
    %c0_i32 = arith.constant 0 : i32
    %c0_i32_0 = arith.constant 0 : i32
    return %arg0, %c0_i32 : i32, i32
  }
}

</mosaic_0001>

<llo_original>
// kernel: tpu_custom_call.1
$region0: #{tpu_custom_call.1}
  #allocation0 [shape = 'u32[]', space=smem, size = 0x4, offset = 0x4, fixed_abs, tag = 'smem constant byte address 0x4 - core index']
  #allocation1 [shape = 'u32[144,128]{1,0:T(1,128)}', space=vmem, size = 0x12000, scoped, tag = 'internal scratch']
  #allocation2 [shape = 'f32[1,1]{1,0:T(1,128)S(1)}', space=vmem, size = 0x200, scoped, tag = 'scoped memory for tpu_custom_call.1']
  %s0 = inlined_call_operand.vmem [shape: f32[512,64], index: 0, kind: input, shape index: {}]
  %s1 = inlined_call_operand.vmem [shape: bf16[64,128], index: 1, kind: input, shape index: {}]
  %s2 = inlined_call_operand.vmem [shape: f32[1,128], index: 2, kind: input, shape index: {}]
  %s3 = inlined_call_operand.vmem [shape: f32[1,128], index: 3, kind: input, shape index: {}]
  %s4 = inlined_call_operand.<no memory space> [shape: f32[1,1], index: 4, kind: input, shape index: {}]
  %s5 = inlined_call_operand.hbm [shape: f32[1,512], index: 5, kind: output, shape index: {}]
  %s6 = sld [smem:[#allocation0]]
  $region30: #{tpu_custom_call.1} parent=0
    _
  %s8 = ssub.s32 1, %s6
  %s9 = scalar_select 0, %s8, %s6
  %v10 = vstv %s4
  %11 = vst [vmem:[#allocation2] sm:$0x1] %v10
  $region1: #{tpu_custom_call.1} parent=0
    #allocation3 [shape = 'u8[2048]{0}', space=vmem, size = 0x800, scoped, tag = 'output window, operand 0, single buffered']
    #allocation4 [shape = 's32[1]{0}', space=sflag, size = 0x4, scoped, tag = 'scoped memory for tpu_custom_call.1']
    %12 = vsyncpa [#allocation4], 0
    // Predicated region
    $region2: #{tpu_custom_call.1} parent=1 // pred_check
      _
    $region3: #{tpu_custom_call.1} parent=1 // pred_check_branch
      %14 = sbr.rel (0) target = $region5
    $region4: #{tpu_custom_call.1} parent=1 // pred_region
      _
    $region5: #{tpu_custom_call.1} parent=1 // pred_fallthru
      _
    // Predicated region
    $region6: #{tpu_custom_call.1} parent=1 // pred_check
      _
    $region7: #{tpu_custom_call.1} parent=1 // pred_check_branch
      %16 = sbr.rel (0) target = $region9
    $region8: #{tpu_custom_call.1} parent=1 // pred_region
      _
    $region9: #{tpu_custom_call.1} parent=1 // pred_fallthru
      _
    // Predicated region
    $region10: #{tpu_custom_call.1} parent=1 // pred_check
      _
    $region11: #{tpu_custom_call.1} parent=1 // pred_check_branch
      %18 = sbr.rel (0) target = $region13
    $region12: #{tpu_custom_call.1} parent=1 // pred_region
      _
    $region13: #{tpu_custom_call.1} parent=1 // pred_fallthru
      _
    // Predicated region
    $region14: #{tpu_custom_call.1} parent=1 // pred_check
      _
    $region15: #{tpu_custom_call.1} parent=1 // pred_check_branch
      %20 = sbr.rel (0) target = $region17
    $region16: #{tpu_custom_call.1} parent=1 // pred_region
      _
    $region17: #{tpu_custom_call.1} parent=1 // pred_fallthru
      _
    // Predicated region
    $region18: #{tpu_custom_call.1} parent=1 // pred_check
      _
    $region19: #{tpu_custom_call.1} parent=1 // pred_check_branch
      %22 = sbr.rel (0) target = $region21
    $region20: #{tpu_custom_call.1} parent=1 // pred_region
      _
    $region21: #{tpu_custom_call.1} parent=1 // pred_fallthru
      _
    %v24 = vld [vmem:[%s1] sm:$0xf]
    %v25 = vld [vmem:[%s1 + $0x4] sm:$0xf]
    %v26 = vld [vmem:[%s1 + $0x8] sm:$0xf]
    %v27 = vld [vmem:[%s1 + $0xc] sm:$0xf]
    %v28 = vld [vmem:[%s1 + $0x10] sm:$0xf]
    %v29 = vld [vmem:[%s1 + $0x14] sm:$0xf]
    %v30 = vld [vmem:[%s1 + $0x18] sm:$0xf]
    %v31 = vld [vmem:[%s1 + $0x1c] sm:$0xf]
    %v32 = vld [vmem:[%s0] sm:$0xff]
    %v33 = vld [vmem:[%s0 + $0x8] sm:$0xff]
    %v34 = vld [vmem:[%s0 + $0x10] sm:$0xff]
    %v35 = vld [vmem:[%s0 + $0x18] sm:$0xff]
    %v36 = vld [vmem:[%s0 + $0x20] sm:$0xff]
    %v37 = vld [vmem:[%s0 + $0x28] sm:$0xff]
    %v38 = vld [vmem:[%s0 + $0x30] sm:$0xff]
    %v39 = vld [vmem:[%s0 + $0x38] sm:$0xff]
    %v40 = vld [vmem:[%s0 + $0x40] sm:$0xff]
    %v41 = vld [vmem:[%s0 + $0x48] sm:$0xff]
    %v42 = vld [vmem:[%s0 + $0x50] sm:$0xff]
    %v43 = vld [vmem:[%s0 + $0x58] sm:$0xff]
    %v44 = vld [vmem:[%s0 + $0x60] sm:$0xff]
    %v45 = vld [vmem:[%s0 + $0x68] sm:$0xff]
    %v46 = vld [vmem:[%s0 + $0x70] sm:$0xff]
    %v47 = vld [vmem:[%s0 + $0x78] sm:$0xff]
    %v48 = vld [vmem:[%s0 + $0x80] sm:$0xff]
    %v49 = vld [vmem:[%s0 + $0x88] sm:$0xff]
    %v50 = vld [vmem:[%s0 + $0x90] sm:$0xff]
    %v51 = vld [vmem:[%s0 + $0x98] sm:$0xff]
    %v52 = vld [vmem:[%s0 + $0xa0] sm:$0xff]
    %v53 = vld [vmem:[%s0 + $0xa8] sm:$0xff]
    %v54 = vld [vmem:[%s0 + $0xb0] sm:$0xff]
    %v55 = vld [vmem:[%s0 + $0xb8] sm:$0xff]
    %v56 = vld [vmem:[%s0 + $0xc0] sm:$0xff]
    %v57 = vld [vmem:[%s0 + $0xc8] sm:$0xff]
    %v58 = vld [vmem:[%s0 + $0xd0] sm:$0xff]
    %v59 = vld [vmem:[%s0 + $0xd8] sm:$0xff]
    %v60 = vld [vmem:[%s0 + $0xe0] sm:$0xff]
    %v61 = vld [vmem:[%s0 + $0xe8] sm:$0xff]
    %v62 = vld [vmem:[%s0 + $0xf0] sm:$0xff]
    %v63 = vld [vmem:[%s0 + $0xf8] sm:$0xff]
    %v64 = vld [vmem:[%s0 + $0x100] sm:$0xff]
    %v65 = vld [vmem:[%s0 + $0x108] sm:$0xff]
    %v66 = vld [vmem:[%s0 + $0x110] sm:$0xff]
    %v67 = vld [vmem:[%s0 + $0x118] sm:$0xff]
    %v68 = vld [vmem:[%s0 + $0x120] sm:$0xff]
    %v69 = vld [vmem:[%s0 + $0x128] sm:$0xff]
    %v70 = vld [vmem:[%s0 + $0x130] sm:$0xff]
    %v71 = vld [vmem:[%s0 + $0x138] sm:$0xff]
    %v72 = vld [vmem:[%s0 + $0x140] sm:$0xff]
    %v73 = vld [vmem:[%s0 + $0x148] sm:$0xff]
    %v74 = vld [vmem:[%s0 + $0x150] sm:$0xff]
    %v75 = vld [vmem:[%s0 + $0x158] sm:$0xff]
    %v76 = vld [vmem:[%s0 + $0x160] sm:$0xff]
    %v77 = vld [vmem:[%s0 + $0x168] sm:$0xff]
    %v78 = vld [vmem:[%s0 + $0x170] sm:$0xff]
    %v79 = vld [vmem:[%s0 + $0x178] sm:$0xff]
    %v80 = vld [vmem:[%s0 + $0x180] sm:$0xff]
    %v81 = vld [vmem:[%s0 + $0x188] sm:$0xff]
    %v82 = vld [vmem:[%s0 + $0x190] sm:$0xff]
    %v83 = vld [vmem:[%s0 + $0x198] sm:$0xff]
    %v84 = vld [vmem:[%s0 + $0x1a0] sm:$0xff]
    %v85 = vld [vmem:[%s0 + $0x1a8] sm:$0xff]
    %v86 = vld [vmem:[%s0 + $0x1b0] sm:$0xff]
    %v87 = vld [vmem:[%s0 + $0x1b8] sm:$0xff]
    %v88 = vld [vmem:[%s0 + $0x1c0] sm:$0xff]
    %v89 = vld [vmem:[%s0 + $0x1c8] sm:$0xff]
    %v90 = vld [vmem:[%s0 + $0x1d0] sm:$0xff]
    %v91 = vld [vmem:[%s0 + $0x1d8] sm:$0xff]
    %v92 = vld [vmem:[%s0 + $0x1e0] sm:$0xff]
    %v93 = vld [vmem:[%s0 + $0x1e8] sm:$0xff]
    %v94 = vld [vmem:[%s0 + $0x1f0] sm:$0xff]
    %v95 = vld [vmem:[%s0 + $0x1f8] sm:$0xff]
    %v96 = vpack.c.bf16 %v33, %v32
    %v97 = vpack.c.bf16 %v35, %v34
    %v98 = vpack.c.bf16 %v37, %v36
    %v99 = vpack.c.bf16 %v39, %v38
    %v100 = vpack.c.bf16 %v41, %v40
    %v101 = vpack.c.bf16 %v43, %v42
    %v102 = vpack.c.bf16 %v45, %v44
    %v103 = vpack.c.bf16 %v47, %v46
    %v104 = vpack.c.bf16 %v49, %v48
    %v105 = vpack.c.bf16 %v51, %v50
    %v106 = vpack.c.bf16 %v53, %v52
    %v107 = vpack.c.bf16 %v55, %v54
    %v108 = vpack.c.bf16 %v57, %v56
    %v109 = vpack.c.bf16 %v59, %v58
    %v110 = vpack.c.bf16 %v61, %v60
    %v111 = vpack.c.bf16 %v63, %v62
    %v112 = vpack.c.bf16 %v65, %v64
    %v113 = vpack.c.bf16 %v67, %v66
    %v114 = vpack.c.bf16 %v69, %v68
    %v115 = vpack.c.bf16 %v71, %v70
    %v116 = vpack.c.bf16 %v73, %v72
    %v117 = vpack.c.bf16 %v75, %v74
    %v118 = vpack.c.bf16 %v77, %v76
    %v119 = vpack.c.bf16 %v79, %v78
    %v120 = vpack.c.bf16 %v81, %v80
    %v121 = vpack.c.bf16 %v83, %v82
    %v122 = vpack.c.bf16 %v85, %v84
    %v123 = vpack.c.bf16 %v87, %v86
    %v124 = vpack.c.bf16 %v89, %v88
    %v125 = vpack.c.bf16 %v91, %v90
    %v126 = vpack.c.bf16 %v93, %v92
    %v127 = vpack.c.bf16 %v95, %v94
    %v128 = vld [vmem:[%s2] sm:$0x1]
    %v130 = vlaneseq
    %v131 = vshrl.u32 %v130, 7
    %v132 = vsub.s32 0, %v131
    %v133 = vrot.slane %v128, %v132
    %v143 = vunpack.c.l.b16 %v24
    %v144 = vunpack.c.l.b16 %v25
    %v145 = vunpack.c.l.b16 %v26
    %v146 = vunpack.c.l.b16 %v27
    %v147 = vunpack.c.l.b16 %v28
    %v148 = vunpack.c.l.b16 %v29
    %v149 = vunpack.c.l.b16 %v30
    %v150 = vunpack.c.l.b16 %v31
    %v151 = vpack.c.b16 %v144, %v143
    %v152 = vpack.c.b16 %v146, %v145
    %v153 = vpack.c.b16 %v148, %v147
    %v154 = vpack.c.b16 %v150, %v149
    %vm159 = vcmask 523264
    %v161 = vsel %vm159, %v96, 0
    %v164 = vsel %vm159, %v97, 0
    %v167 = vsel %vm159, %v98, 0
    %v170 = vsel %vm159, %v99, 0
    %v173 = vsel %vm159, %v100, 0
    %v176 = vsel %vm159, %v101, 0
    %v179 = vsel %vm159, %v102, 0
    %v182 = vsel %vm159, %v103, 0
    %v185 = vsel %vm159, %v104, 0
    %v188 = vsel %vm159, %v105, 0
    %v191 = vsel %vm159, %v106, 0
    %v194 = vsel %vm159, %v107, 0
    %v197 = vsel %vm159, %v108, 0
    %v200 = vsel %vm159, %v109, 0
    %v203 = vsel %vm159, %v110, 0
    %v206 = vsel %vm159, %v111, 0
    %v209 = vsel %vm159, %v112, 0
    %v212 = vsel %vm159, %v113, 0
    %v215 = vsel %vm159, %v114, 0
    %v218 = vsel %vm159, %v115, 0
    %v221 = vsel %vm159, %v116, 0
    %v224 = vsel %vm159, %v117, 0
    %v227 = vsel %vm159, %v118, 0
    %v230 = vsel %vm159, %v119, 0
    %v233 = vsel %vm159, %v120, 0
    %v236 = vsel %vm159, %v121, 0
    %v239 = vsel %vm159, %v122, 0
    %v242 = vsel %vm159, %v123, 0
    %v245 = vsel %vm159, %v124, 0
    %v248 = vsel %vm159, %v125, 0
    %v251 = vsel %vm159, %v126, 0
    %v254 = vsel %vm159, %v127, 0
    %256 = vmatprep.subr.bf16.mxu0 0
    %257 = vmatpush1.bf16.msra.mxu0 %v151
    %258 = vmatprep.subr.bf16.mxu0 0
    %259 = vmatpush1.bf16.msra.mxu0 %v152
    %260 = vmatprep.subr.bf16.mxu0 0
    %261 = vmatpush1.bf16.msra.mxu0 %v153
    %262 = vmatprep.subr.bf16.mxu0 0
    %263 = vmatpush1.bf16.msra.mxu0 %v154
    %264 = vmatprep.subr.bf16.mxu0 0
    %265 = vmatpush1.bf16.msra.mxu0 0
    %266 = vmatprep.subr.bf16.mxu0 0
    %267 = vmatpush1.bf16.msra.mxu0 0
    %268 = vmatprep.subr.bf16.mxu0 0
    %269 = vmatpush1.bf16.msra.mxu0 0
    %270 = vmatprep.subr.bf16.mxu0 0
    %271 = vmatpush1.bf16.msra.mxu0 0
    %272 = vmatprep.subr.bf16.mxu0 0
    %273 = vmatpush1.bf16.msra.mxu0 0
    %274 = vmatprep.subr.bf16.mxu0 0
    %275 = vmatpush1.bf16.msra.mxu0 0
    %276 = vmatprep.subr.bf16.mxu0 0
    %277 = vmatpush1.bf16.msra.mxu0 0
    %278 = vmatprep.subr.bf16.mxu0 0
    %279 = vmatpush1.bf16.msra.mxu0 0
    %280 = vmatprep.subr.bf16.mxu0 0
    %281 = vmatpush1.bf16.msra.mxu0 0
    %282 = vmatprep.subr.bf16.mxu0 0
    %283 = vmatpush1.bf16.msra.mxu0 0
    %284 = vmatprep.subr.bf16.mxu0 0
    %285 = vmatpush1.bf16.msra.mxu0 0
    %286 = vmatprep.subr.bf16.mxu0 0
    %287 = vmatpush1.bf16.msra.mxu0 0
    %288 = vmatprep.mubr.bf16.mxu0 0
    %289 = vmatmul.mubr.bf16.gmra.mrb[0].mxu0 %v161
    %v290 = vpop.f32.mrb[0].mxu0
    %v291 = vadd.f32 %v133, %v290
    %v292 = vpop.f32.mrb[0].mxu0
    %v293 = vpop.f32.mrb[0].mxu0
    %v294 = vadd.f32 %v133, %v293
    %v295 = vpop.f32.mrb[0].mxu0
    %296 = vmatprep.mubr.bf16.mxu0 0
    %297 = vmatmul.mubr.bf16.gmra.mrb[0].mxu0 %v164
    %v298 = vpop.f32.mrb[0].mxu0
    %v299 = vadd.f32 %v133, %v298
    %v300 = vpop.f32.mrb[0].mxu0
    %v301 = vpop.f32.mrb[0].mxu0
    %v302 = vadd.f32 %v133, %v301
    %v303 = vpop.f32.mrb[0].mxu0
    %304 = vmatprep.mubr.bf16.mxu0 0
    %305 = vmatmul.mubr.bf16.gmra.mrb[0].mxu0 %v167
    %v306 = vpop.f32.mrb[0].mxu0
    %v307 = vadd.f32 %v133, %v306
    %v308 = vpop.f32.mrb[0].mxu0
    %v309 = vpop.f32.mrb[0].mxu0
    %v310 = vadd.f32 %v133, %v309
    %v311 = vpop.f32.mrb[0].mxu0
    %312 = vmatprep.mubr.bf16.mxu0 0
    %313 = vmatmul.mubr.bf16.gmra.mrb[0].mxu0 %v170
    %v314 = vpop.f32.mrb[0].mxu0
    %v315 = vadd.f32 %v133, %v314
    %v316 = vpop.f32.mrb[0].mxu0
    %v317 = vpop.f32.mrb[0].mxu0
    %v318 = vadd.f32 %v133, %v317
    %v319 = vpop.f32.mrb[0].mxu0
    %320 = vmatprep.mubr.bf16.mxu0 0
    %321 = vmatmul.mubr.bf16.gmra.mrb[0].mxu0 %v173
    %v322 = vpop.f32.mrb[0].mxu0
    %v323 = vadd.f32 %v133, %v322
    %v324 = vpop.f32.mrb[0].mxu0
    %v325 = vpop.f32.mrb[0].mxu0
    %v326 = vadd.f32 %v133, %v325
    %v327 = vpop.f32.mrb[0].mxu0
    %328 = vmatprep.mubr.bf16.mxu0 0
    %329 = vmatmul.mubr.bf16.gmra.mrb[0].mxu0 %v176
    %v330 = vpop.f32.mrb[0].mxu0
    %v331 = vadd.f32 %v133, %v330
    %v332 = vpop.f32.mrb[0].mxu0
    %v333 = vpop.f32.mrb[0].mxu0
    %v334 = vadd.f32 %v133, %v333
    %v335 = vpop.f32.mrb[0].mxu0
    %336 = vmatprep.mubr.bf16.mxu0 0
    %337 = vmatmul.mubr.bf16.gmra.mrb[0].mxu0 %v179
    %v338 = vpop.f32.mrb[0].mxu0
    %v339 = vadd.f32 %v133, %v338
    %v340 = vpop.f32.mrb[0].mxu0
    %v341 = vpop.f32.mrb[0].mxu0
    %v342 = vadd.f32 %v133, %v341
    %v343 = vpop.f32.mrb[0].mxu0
    %344 = vmatprep.mubr.bf16.mxu0 0
    %345 = vmatmul.mubr.bf16.gmra.mrb[0].mxu0 %v182
    %v346 = vpop.f32.mrb[0].mxu0
    %v347 = vadd.f32 %v133, %v346
    %v348 = vpop.f32.mrb[0].mxu0
    %v349 = vpop.f32.mrb[0].mxu0
    %v350 = vadd.f32 %v133, %v349
    %v351 = vpop.f32.mrb[0].mxu0
    %352 = vmatprep.mubr.bf16.mxu0 0
    %353 = vmatmul.mubr.bf16.gmra.mrb[0].mxu0 %v185
    %v354 = vpop.f32.mrb[0].mxu0
    %v355 = vadd.f32 %v133, %v354
    %v356 = vpop.f32.mrb[0].mxu0
    %v357 = vpop.f32.mrb[0].mxu0
    %v358 = vadd.f32 %v133, %v357
    %v359 = vpop.f32.mrb[0].mxu0
    %360 = vmatprep.mubr.bf16.mxu0 0
    %361 = vmatmul.mubr.bf16.gmra.mrb[0].mxu0 %v188
    %v362 = vpop.f32.mrb[0].mxu0
    %v363 = vadd.f32 %v133, %v362
    %v364 = vpop.f32.mrb[0].mxu0
    %v365 = vpop.f32.mrb[0].mxu0
    %v366 = vadd.f32 %v133, %v365
    %v367 = vpop.f32.mrb[0].mxu0
    %368 = vmatprep.mubr.bf16.mxu0 0
    %369 = vmatmul.mubr.bf16.gmra.mrb[0].mxu0 %v191
    %v370 = vpop.f32.mrb[0].mxu0
    %v371 = vadd.f32 %v133, %v370
    %v372 = vpop.f32.mrb[0].mxu0
    %v373 = vpop.f32.mrb[0].mxu0
    %v374 = vadd.f32 %v133, %v373
    %v375 = vpop.f32.mrb[0].mxu0
    %376 = vmatprep.mubr.bf16.mxu0 0
    %377 = vmatmul.mubr.bf16.gmra.mrb[0].mxu0 %v194
    %v378 = vpop.f32.mrb[0].mxu0
    %v379 = vadd.f32 %v133, %v378
    %v380 = vpop.f32.mrb[0].mxu0
    %v381 = vpop.f32.mrb[0].mxu0
    %v382 = vadd.f32 %v133, %v381
    %v383 = vpop.f32.mrb[0].mxu0
    %384 = vmatprep.mubr.bf16.mxu0 0
    %385 = vmatmul.mubr.bf16.gmra.mrb[0].mxu0 %v197
    %v386 = vpop.f32.mrb[0].mxu0
    %v387 = vadd.f32 %v133, %v386
    %v388 = vpop.f32.mrb[0].mxu0
    %v389 = vpop.f32.mrb[0].mxu0
    %v390 = vadd.f32 %v133, %v389
    %v391 = vpop.f32.mrb[0].mxu0
    %392 = vmatprep.mubr.bf16.mxu0 0
    %393 = vmatmul.mubr.bf16.gmra.mrb[0].mxu0 %v200
    %v394 = vpop.f32.mrb[0].mxu0
    %v395 = vadd.f32 %v133, %v394
    %v396 = vpop.f32.mrb[0].mxu0
    %v397 = vpop.f32.mrb[0].mxu0
    %v398 = vadd.f32 %v133, %v397
    %v399 = vpop.f32.mrb[0].mxu0
    %400 = vmatprep.mubr.bf16.mxu0 0
    %401 = vmatmul.mubr.bf16.gmra.mrb[0].mxu0 %v203
    %v402 = vpop.f32.mrb[0].mxu0
    %v403 = vadd.f32 %v133, %v402
    %v404 = vpop.f32.mrb[0].mxu0
    %v405 = vpop.f32.mrb[0].mxu0
    %v406 = vadd.f32 %v133, %v405
    %v407 = vpop.f32.mrb[0].mxu0
    %408 = vmatprep.mubr.bf16.mxu0 0
    %409 = vmatmul.mubr.bf16.gmra.mrb[0].mxu0 %v206
    %v410 = vpop.f32.mrb[0].mxu0
    %v411 = vadd.f32 %v133, %v410
    %v412 = vpop.f32.mrb[0].mxu0
    %v413 = vpop.f32.mrb[0].mxu0
    %v414 = vadd.f32 %v133, %v413
    %v415 = vpop.f32.mrb[0].mxu0
    %416 = vmatprep.mubr.bf16.mxu0 0
    %417 = vmatmul.mubr.bf16.gmra.mrb[0].mxu0 %v209
    %v418 = vpop.f32.mrb[0].mxu0
    %v419 = vadd.f32 %v133, %v418
    %v420 = vpop.f32.mrb[0].mxu0
    %v421 = vpop.f32.mrb[0].mxu0
    %v422 = vadd.f32 %v133, %v421
    %v423 = vpop.f32.mrb[0].mxu0
    %424 = vmatprep.mubr.bf16.mxu0 0
    %425 = vmatmul.mubr.bf16.gmra.mrb[0].mxu0 %v212
    %v426 = vpop.f32.mrb[0].mxu0
    %v427 = vadd.f32 %v133, %v426
    %v428 = vpop.f32.mrb[0].mxu0
    %v429 = vpop.f32.mrb[0].mxu0
    %v430 = vadd.f32 %v133, %v429
    %v431 = vpop.f32.mrb[0].mxu0
    %432 = vmatprep.mubr.bf16.mxu0 0
    %433 = vmatmul.mubr.bf16.gmra.mrb[0].mxu0 %v215
    %v434 = vpop.f32.mrb[0].mxu0
    %v435 = vadd.f32 %v133, %v434
    %v436 = vpop.f32.mrb[0].mxu0
    %v437 = vpop.f32.mrb[0].mxu0
    %v438 = vadd.f32 %v133, %v437
    %v439 = vpop.f32.mrb[0].mxu0
    %440 = vmatprep.mubr.bf16.mxu0 0
    %441 = vmatmul.mubr.bf16.gmra.mrb[0].mxu0 %v218
    %v442 = vpop.f32.mrb[0].mxu0
    %v443 = vadd.f32 %v133, %v442
    %v444 = vpop.f32.mrb[0].mxu0
    %v445 = vpop.f32.mrb[0].mxu0
    %v446 = vadd.f32 %v133, %v445
    %v447 = vpop.f32.mrb[0].mxu0
    %448 = vmatprep.mubr.bf16.mxu0 0
    %449 = vmatmul.mubr.bf16.gmra.mrb[0].mxu0 %v221
    %v450 = vpop.f32.mrb[0].mxu0
    %v451 = vadd.f32 %v133, %v450
    %v452 = vpop.f32.mrb[0].mxu0
    %v453 = vpop.f32.mrb[0].mxu0
    %v454 = vadd.f32 %v133, %v453
    %v455 = vpop.f32.mrb[0].mxu0
    %456 = vmatprep.mubr.bf16.mxu0 0
    %457 = vmatmul.mubr.bf16.gmra.mrb[0].mxu0 %v224
    %v458 = vpop.f32.mrb[0].mxu0
    %v459 = vadd.f32 %v133, %v458
    %v460 = vpop.f32.mrb[0].mxu0
    %v461 = vpop.f32.mrb[0].mxu0
    %v462 = vadd.f32 %v133, %v461
    %v463 = vpop.f32.mrb[0].mxu0
    %464 = vmatprep.mubr.bf16.mxu0 0
    %465 = vmatmul.mubr.bf16.gmra.mrb[0].mxu0 %v227
    %v466 = vpop.f32.mrb[0].mxu0
    %v467 = vadd.f32 %v133, %v466
    %v468 = vpop.f32.mrb[0].mxu0
    %v469 = vpop.f32.mrb[0].mxu0
    %v470 = vadd.f32 %v133, %v469
    %v471 = vpop.f32.mrb[0].mxu0
    %472 = vmatprep.mubr.bf16.mxu0 0
    %473 = vmatmul.mubr.bf16.gmra.mrb[0].mxu0 %v230
    %v474 = vpop.f32.mrb[0].mxu0
    %v475 = vadd.f32 %v133, %v474
    %v476 = vpop.f32.mrb[0].mxu0
    %v477 = vpop.f32.mrb[0].mxu0
    %v478 = vadd.f32 %v133, %v477
    %v479 = vpop.f32.mrb[0].mxu0
    %480 = vmatprep.mubr.bf16.mxu0 0
    %481 = vmatmul.mubr.bf16.gmra.mrb[0].mxu0 %v233
    %v482 = vpop.f32.mrb[0].mxu0
    %v483 = vadd.f32 %v133, %v482
    %v484 = vpop.f32.mrb[0].mxu0
    %v485 = vpop.f32.mrb[0].mxu0
    %v486 = vadd.f32 %v133, %v485
    %v487 = vpop.f32.mrb[0].mxu0
    %488 = vmatprep.mubr.bf16.mxu0 0
    %489 = vmatmul.mubr.bf16.gmra.mrb[0].mxu0 %v236
    %v490 = vpop.f32.mrb[0].mxu0
    %v491 = vadd.f32 %v133, %v490
    %v492 = vpop.f32.mrb[0].mxu0
    %v493 = vpop.f32.mrb[0].mxu0
    %v494 = vadd.f32 %v133, %v493
    %v495 = vpop.f32.mrb[0].mxu0
    %496 = vmatprep.mubr.bf16.mxu0 0
    %497 = vmatmul.mubr.bf16.gmra.mrb[0].mxu0 %v239
    %v498 = vpop.f32.mrb[0].mxu0
    %v499 = vadd.f32 %v133, %v498
    %v500 = vpop.f32.mrb[0].mxu0
    %v501 = vpop.f32.mrb[0].mxu0
    %v502 = vadd.f32 %v133, %v501
    %v503 = vpop.f32.mrb[0].mxu0
    %504 = vmatprep.mubr.bf16.mxu0 0
    %505 = vmatmul.mubr.bf16.gmra.mrb[0].mxu0 %v242
    %v506 = vpop.f32.mrb[0].mxu0
    %v507 = vadd.f32 %v133, %v506
    %v508 = vpop.f32.mrb[0].mxu0
    %v509 = vpop.f32.mrb[0].mxu0
    %v510 = vadd.f32 %v133, %v509
    %v511 = vpop.f32.mrb[0].mxu0
    %512 = vmatprep.mubr.bf16.mxu0 0
    %513 = vmatmul.mubr.bf16.gmra.mrb[0].mxu0 %v245
    %v514 = vpop.f32.mrb[0].mxu0
    %v515 = vadd.f32 %v133, %v514
    %v516 = vpop.f32.mrb[0].mxu0
    %v517 = vpop.f32.mrb[0].mxu0
    %v518 = vadd.f32 %v133, %v517
    %v519 = vpop.f32.mrb[0].mxu0
    %520 = vmatprep.mubr.bf16.mxu0 0
    %521 = vmatmul.mubr.bf16.gmra.mrb[0].mxu0 %v248
    %v522 = vpop.f32.mrb[0].mxu0
    %v523 = vadd.f32 %v133, %v522
    %v524 = vpop.f32.mrb[0].mxu0
    %v525 = vpop.f32.mrb[0].mxu0
    %v526 = vadd.f32 %v133, %v525
    %v527 = vpop.f32.mrb[0].mxu0
    %528 = vmatprep.mubr.bf16.mxu0 0
    %529 = vmatmul.mubr.bf16.gmra.mrb[0].mxu0 %v251
    %v530 = vpop.f32.mrb[0].mxu0
    %v531 = vadd.f32 %v133, %v530
    %v532 = vpop.f32.mrb[0].mxu0
    %v533 = vpop.f32.mrb[0].mxu0
    %v534 = vadd.f32 %v133, %v533
    %v535 = vpop.f32.mrb[0].mxu0
    %536 = vmatprep.mubr.bf16.mxu0 0
    %537 = vmatmul.mubr.bf16.gmra.mrb[0].mxu0 %v254
    %v538 = vpop.f32.mrb[0].mxu0
    %v539 = vadd.f32 %v133, %v538
    %v540 = vpop.f32.mrb[0].mxu0
    %v541 = vpop.f32.mrb[0].mxu0
    %v542 = vadd.f32 %v133, %v541
    %v543 = vpop.f32.mrb[0].mxu0
    %544 = vdwg.mxu0
    %v545 = vmax.f32 %v291, 0.0
    %v546 = vmax.f32 %v294, 0.0
    %v547 = vmax.f32 %v299, 0.0
    %v548 = vmax.f32 %v302, 0.0
    %v549 = vmax.f32 %v307, 0.0
    %v550 = vmax.f32 %v310, 0.0
    %v551 = vmax.f32 %v315, 0.0
    %v552 = vmax.f32 %v318, 0.0
    %v553 = vmax.f32 %v323, 0.0
    %v554 = vmax.f32 %v326, 0.0
    %v555 = vmax.f32 %v331, 0.0
    %v556 = vmax.f32 %v334, 0.0
    %v557 = vmax.f32 %v339, 0.0
    %v558 = vmax.f32 %v342, 0.0
    %v559 = vmax.f32 %v347, 0.0
    %v560 = vmax.f32 %v350, 0.0
    %v561 = vmax.f32 %v355, 0.0
    %v562 = vmax.f32 %v358, 0.0
    %v563 = vmax.f32 %v363, 0.0
    %v564 = vmax.f32 %v366, 0.0
    %v565 = vmax.f32 %v371, 0.0
    %v566 = vmax.f32 %v374, 0.0
    %v567 = vmax.f32 %v379, 0.0
    %v568 = vmax.f32 %v382, 0.0
    %v569 = vmax.f32 %v387, 0.0
    %v570 = vmax.f32 %v390, 0.0
    %v571 = vmax.f32 %v395, 0.0
    %v572 = vmax.f32 %v398, 0.0
    %v573 = vmax.f32 %v403, 0.0
    %v574 = vmax.f32 %v406, 0.0
    %v575 = vmax.f32 %v411, 0.0
    %v576 = vmax.f32 %v414, 0.0
    %v577 = vmax.f32 %v419, 0.0
    %v578 = vmax.f32 %v422, 0.0
    %v579 = vmax.f32 %v427, 0.0
    %v580 = vmax.f32 %v430, 0.0
    %v581 = vmax.f32 %v435, 0.0
    %v582 = vmax.f32 %v438, 0.0
    %v583 = vmax.f32 %v443, 0.0
    %v584 = vmax.f32 %v446, 0.0
    %v585 = vmax.f32 %v451, 0.0
    %v586 = vmax.f32 %v454, 0.0
    %v587 = vmax.f32 %v459, 0.0
    %v588 = vmax.f32 %v462, 0.0
    %v589 = vmax.f32 %v467, 0.0
    %v590 = vmax.f32 %v470, 0.0
    %v591 = vmax.f32 %v475, 0.0
    %v592 = vmax.f32 %v478, 0.0
    %v593 = vmax.f32 %v483, 0.0
    %v594 = vmax.f32 %v486, 0.0
    %v595 = vmax.f32 %v491, 0.0
    %v596 = vmax.f32 %v494, 0.0
    %v597 = vmax.f32 %v499, 0.0
    %v598 = vmax.f32 %v502, 0.0
    %v599 = vmax.f32 %v507, 0.0
    %v600 = vmax.f32 %v510, 0.0
    %v601 = vmax.f32 %v515, 0.0
    %v602 = vmax.f32 %v518, 0.0
    %v603 = vmax.f32 %v523, 0.0
    %v604 = vmax.f32 %v526, 0.0
    %v605 = vmax.f32 %v531, 0.0
    %v606 = vmax.f32 %v534, 0.0
    %v607 = vmax.f32 %v539, 0.0
    %v608 = vmax.f32 %v542, 0.0
    %609 = vadd.xlane.f32.xlu0 %v545
    %v610 = vpop.xlane.xlu0 %609
    %611 = vadd.xlane.f32.xlu0 %v546
    %v612 = vpop.xlane.xlu0 %611
    %613 = vadd.xlane.f32.xlu0 %v547
    %v614 = vpop.xlane.xlu0 %613
    %615 = vadd.xlane.f32.xlu0 %v548
    %v616 = vpop.xlane.xlu0 %615
    %617 = vadd.xlane.f32.xlu0 %v549
    %v618 = vpop.xlane.xlu0 %617
    %619 = vadd.xlane.f32.xlu0 %v550
    %v620 = vpop.xlane.xlu0 %619
    %621 = vadd.xlane.f32.xlu0 %v551
    %v622 = vpop.xlane.xlu0 %621
    %623 = vadd.xlane.f32.xlu0 %v552
    %v624 = vpop.xlane.xlu0 %623
    %625 = vadd.xlane.f32.xlu0 %v553
    %v626 = vpop.xlane.xlu0 %625
    %627 = vadd.xlane.f32.xlu0 %v554
    %v628 = vpop.xlane.xlu0 %627
    %629 = vadd.xlane.f32.xlu0 %v555
    %v630 = vpop.xlane.xlu0 %629
    %631 = vadd.xlane.f32.xlu0 %v556
    %v632 = vpop.xlane.xlu0 %631
    %633 = vadd.xlane.f32.xlu0 %v557
    %v634 = vpop.xlane.xlu0 %633
    %635 = vadd.xlane.f32.xlu0 %v558
    %v636 = vpop.xlane.xlu0 %635
    %637 = vadd.xlane.f32.xlu0 %v559
    %v638 = vpop.xlane.xlu0 %637
    %639 = vadd.xlane.f32.xlu0 %v560
    %v640 = vpop.xlane.xlu0 %639
    %641 = vadd.xlane.f32.xlu0 %v561
    %v642 = vpop.xlane.xlu0 %641
    %643 = vadd.xlane.f32.xlu0 %v562
    %v644 = vpop.xlane.xlu0 %643
    %645 = vadd.xlane.f32.xlu0 %v563
    %v646 = vpop.xlane.xlu0 %645
    %647 = vadd.xlane.f32.xlu0 %v564
    %v648 = vpop.xlane.xlu0 %647
    %649 = vadd.xlane.f32.xlu0 %v565
    %v650 = vpop.xlane.xlu0 %649
    %651 = vadd.xlane.f32.xlu0 %v566
    %v652 = vpop.xlane.xlu0 %651
    %653 = vadd.xlane.f32.xlu0 %v567
    %v654 = vpop.xlane.xlu0 %653
    %655 = vadd.xlane.f32.xlu0 %v568
    %v656 = vpop.xlane.xlu0 %655
    %657 = vadd.xlane.f32.xlu0 %v569
    %v658 = vpop.xlane.xlu0 %657
    %659 = vadd.xlane.f32.xlu0 %v570
    %v660 = vpop.xlane.xlu0 %659
    %661 = vadd.xlane.f32.xlu0 %v571
    %v662 = vpop.xlane.xlu0 %661
    %663 = vadd.xlane.f32.xlu0 %v572
    %v664 = vpop.xlane.xlu0 %663
    %665 = vadd.xlane.f32.xlu0 %v573
    %v666 = vpop.xlane.xlu0 %665
    %667 = vadd.xlane.f32.xlu0 %v574
    %v668 = vpop.xlane.xlu0 %667
    %669 = vadd.xlane.f32.xlu0 %v575
    %v670 = vpop.xlane.xlu0 %669
    %671 = vadd.xlane.f32.xlu0 %v576
    %v672 = vpop.xlane.xlu0 %671
    %673 = vadd.xlane.f32.xlu0 %v577
    %v674 = vpop.xlane.xlu0 %673
    %675 = vadd.xlane.f32.xlu0 %v578
    %v676 = vpop.xlane.xlu0 %675
    %677 = vadd.xlane.f32.xlu0 %v579
    %v678 = vpop.xlane.xlu0 %677
    %679 = vadd.xlane.f32.xlu0 %v580
    %v680 = vpop.xlane.xlu0 %679
    %681 = vadd.xlane.f32.xlu0 %v581
    %v682 = vpop.xlane.xlu0 %681
    %683 = vadd.xlane.f32.xlu0 %v582
    %v684 = vpop.xlane.xlu0 %683
    %685 = vadd.xlane.f32.xlu0 %v583
    %v686 = vpop.xlane.xlu0 %685
    %687 = vadd.xlane.f32.xlu0 %v584
    %v688 = vpop.xlane.xlu0 %687
    %689 = vadd.xlane.f32.xlu0 %v585
    %v690 = vpop.xlane.xlu0 %689
    %691 = vadd.xlane.f32.xlu0 %v586
    %v692 = vpop.xlane.xlu0 %691
    %693 = vadd.xlane.f32.xlu0 %v587
    %v694 = vpop.xlane.xlu0 %693
    %695 = vadd.xlane.f32.xlu0 %v588
    %v696 = vpop.xlane.xlu0 %695
    %697 = vadd.xlane.f32.xlu0 %v589
    %v698 = vpop.xlane.xlu0 %697
    %699 = vadd.xlane.f32.xlu0 %v590
    %v700 = vpop.xlane.xlu0 %699
    %701 = vadd.xlane.f32.xlu0 %v591
    %v702 = vpop.xlane.xlu0 %701
    %703 = vadd.xlane.f32.xlu0 %v592
    %v704 = vpop.xlane.xlu0 %703
    %705 = vadd.xlane.f32.xlu0 %v593
    %v706 = vpop.xlane.xlu0 %705
    %707 = vadd.xlane.f32.xlu0 %v594
    %v708 = vpop.xlane.xlu0 %707
    %709 = vadd.xlane.f32.xlu0 %v595
    %v710 = vpop.xlane.xlu0 %709
    %711 = vadd.xlane.f32.xlu0 %v596
    %v712 = vpop.xlane.xlu0 %711
    %713 = vadd.xlane.f32.xlu0 %v597
    %v714 = vpop.xlane.xlu0 %713
    %715 = vadd.xlane.f32.xlu0 %v598
    %v716 = vpop.xlane.xlu0 %715
    %717 = vadd.xlane.f32.xlu0 %v599
    %v718 = vpop.xlane.xlu0 %717
    %719 = vadd.xlane.f32.xlu0 %v600
    %v720 = vpop.xlane.xlu0 %719
    %721 = vadd.xlane.f32.xlu0 %v601
    %v722 = vpop.xlane.xlu0 %721
    %723 = vadd.xlane.f32.xlu0 %v602
    %v724 = vpop.xlane.xlu0 %723
    %725 = vadd.xlane.f32.xlu0 %v603
    %v726 = vpop.xlane.xlu0 %725
    %727 = vadd.xlane.f32.xlu0 %v604
    %v728 = vpop.xlane.xlu0 %727
    %729 = vadd.xlane.f32.xlu0 %v605
    %v730 = vpop.xlane.xlu0 %729
    %731 = vadd.xlane.f32.xlu0 %v606
    %v732 = vpop.xlane.xlu0 %731
    %733 = vadd.xlane.f32.xlu0 %v607
    %v734 = vpop.xlane.xlu0 %733
    %735 = vadd.xlane.f32.xlu0 %v608
    %v736 = vpop.xlane.xlu0 %735
    %v737 = vmul.f32 %v610, 0.0078125
    %v738 = vmul.f32 %v612, 0.0078125
    %v739 = vmul.f32 %v614, 0.0078125
    %v740 = vmul.f32 %v616, 0.0078125
    %v741 = vmul.f32 %v618, 0.0078125
    %v742 = vmul.f32 %v620, 0.0078125
    %v743 = vmul.f32 %v622, 0.0078125
    %v744 = vmul.f32 %v624, 0.0078125
    %v745 = vmul.f32 %v626, 0.0078125
    %v746 = vmul.f32 %v628, 0.0078125
    %v747 = vmul.f32 %v630, 0.0078125
    %v748 = vmul.f32 %v632, 0.0078125
    %v749 = vmul.f32 %v634, 0.0078125
    %v750 = vmul.f32 %v636, 0.0078125
    %v751 = vmul.f32 %v638, 0.0078125
    %v752 = vmul.f32 %v640, 0.0078125
    %v753 = vmul.f32 %v642, 0.0078125
    %v754 = vmul.f32 %v644, 0.0078125
    %v755 = vmul.f32 %v646, 0.0078125
    %v756 = vmul.f32 %v648, 0.0078125
    %v757 = vmul.f32 %v650, 0.0078125
    %v758 = vmul.f32 %v652, 0.0078125
    %v759 = vmul.f32 %v654, 0.0078125
    %v760 = vmul.f32 %v656, 0.0078125
    %v761 = vmul.f32 %v658, 0.0078125
    %v762 = vmul.f32 %v660, 0.0078125
    %v763 = vmul.f32 %v662, 0.0078125
    %v764 = vmul.f32 %v664, 0.0078125
    %v765 = vmul.f32 %v666, 0.0078125
    %v766 = vmul.f32 %v668, 0.0078125
    %v767 = vmul.f32 %v670, 0.0078125
    %v768 = vmul.f32 %v672, 0.0078125
    %v769 = vmul.f32 %v674, 0.0078125
    %v770 = vmul.f32 %v676, 0.0078125
    %v771 = vmul.f32 %v678, 0.0078125
    %v772 = vmul.f32 %v680, 0.0078125
    %v773 = vmul.f32 %v682, 0.0078125
    %v774 = vmul.f32 %v684, 0.0078125
    %v775 = vmul.f32 %v686, 0.0078125
    %v776 = vmul.f32 %v688, 0.0078125
    %v777 = vmul.f32 %v690, 0.0078125
    %v778 = vmul.f32 %v692, 0.0078125
    %v779 = vmul.f32 %v694, 0.0078125
    %v780 = vmul.f32 %v696, 0.0078125
    %v781 = vmul.f32 %v698, 0.0078125
    %v782 = vmul.f32 %v700, 0.0078125
    %v783 = vmul.f32 %v702, 0.0078125
    %v784 = vmul.f32 %v704, 0.0078125
    %v785 = vmul.f32 %v706, 0.0078125
    %v786 = vmul.f32 %v708, 0.0078125
    %v787 = vmul.f32 %v710, 0.0078125
    %v788 = vmul.f32 %v712, 0.0078125
    %v789 = vmul.f32 %v714, 0.0078125
    %v790 = vmul.f32 %v716, 0.0078125
    %v791 = vmul.f32 %v718, 0.0078125
    %v792 = vmul.f32 %v720, 0.0078125
    %v793 = vmul.f32 %v722, 0.0078125
    %v794 = vmul.f32 %v724, 0.0078125
    %v795 = vmul.f32 %v726, 0.0078125
    %v796 = vmul.f32 %v728, 0.0078125
    %v797 = vmul.f32 %v730, 0.0078125
    %v798 = vmul.f32 %v732, 0.0078125
    %v799 = vmul.f32 %v734, 0.0078125
    %v800 = vmul.f32 %v736, 0.0078125
    %v801 = vsub.f32 %v545, %v737
    %v802 = vsub.f32 %v546, %v738
    %v803 = vsub.f32 %v547, %v739
    %v804 = vsub.f32 %v548, %v740
    %v805 = vsub.f32 %v549, %v741
    %v806 = vsub.f32 %v550, %v742
    %v807 = vsub.f32 %v551, %v743
    %v808 = vsub.f32 %v552, %v744
    %v809 = vsub.f32 %v553, %v745
    %v810 = vsub.f32 %v554, %v746
    %v811 = vsub.f32 %v555, %v747
    %v812 = vsub.f32 %v556, %v748
    %v813 = vsub.f32 %v557, %v749
    %v814 = vsub.f32 %v558, %v750
    %v815 = vsub.f32 %v559, %v751
    %v816 = vsub.f32 %v560, %v752
    %v817 = vsub.f32 %v561, %v753
    %v818 = vsub.f32 %v562, %v754
    %v819 = vsub.f32 %v563, %v755
    %v820 = vsub.f32 %v564, %v756
    %v821 = vsub.f32 %v565, %v757
    %v822 = vsub.f32 %v566, %v758
    %v823 = vsub.f32 %v567, %v759
    %v824 = vsub.f32 %v568, %v760
    %v825 = vsub.f32 %v569, %v761
    %v826 = vsub.f32 %v570, %v762
    %v827 = vsub.f32 %v571, %v763
    %v828 = vsub.f32 %v572, %v764
    %v829 = vsub.f32 %v573, %v765
    %v830 = vsub.f32 %v574, %v766
    %v831 = vsub.f32 %v575, %v767
    %v832 = vsub.f32 %v576, %v768
    %v833 = vsub.f32 %v577, %v769
    %v834 = vsub.f32 %v578, %v770
    %v835 = vsub.f32 %v579, %v771
    %v836 = vsub.f32 %v580, %v772
    %v837 = vsub.f32 %v581, %v773
    %v838 = vsub.f32 %v582, %v774
    %v839 = vsub.f32 %v583, %v775
    %v840 = vsub.f32 %v584, %v776
    %v841 = vsub.f32 %v585, %v777
    %v842 = vsub.f32 %v586, %v778
    %v843 = vsub.f32 %v587, %v779
    %v844 = vsub.f32 %v588, %v780
    %v845 = vsub.f32 %v589, %v781
    %v846 = vsub.f32 %v590, %v782
    %v847 = vsub.f32 %v591, %v783
    %v848 = vsub.f32 %v592, %v784
    %v849 = vsub.f32 %v593, %v785
    %v850 = vsub.f32 %v594, %v786
    %v851 = vsub.f32 %v595, %v787
    %v852 = vsub.f32 %v596, %v788
    %v853 = vsub.f32 %v597, %v789
    %v854 = vsub.f32 %v598, %v790
    %v855 = vsub.f32 %v599, %v791
    %v856 = vsub.f32 %v600, %v792
    %v857 = vsub.f32 %v601, %v793
    %v858 = vsub.f32 %v602, %v794
    %v859 = vsub.f32 %v603, %v795
    %v860 = vsub.f32 %v604, %v796
    %v861 = vsub.f32 %v605, %v797
    %v862 = vsub.f32 %v606, %v798
    %v863 = vsub.f32 %v607, %v799
    %v864 = vsub.f32 %v608, %v800
    %v865 = vmul.f32 %v801, %v801
    %v866 = vmul.f32 %v802, %v802
    %v867 = vmul.f32 %v803, %v803
    %v868 = vmul.f32 %v804, %v804
    %v869 = vmul.f32 %v805, %v805
    %v870 = vmul.f32 %v806, %v806
    %v871 = vmul.f32 %v807, %v807
    %v872 = vmul.f32 %v808, %v808
    %v873 = vmul.f32 %v809, %v809
    %v874 = vmul.f32 %v810, %v810
    %v875 = vmul.f32 %v811, %v811
    %v876 = vmul.f32 %v812, %v812
    %v877 = vmul.f32 %v813, %v813
    %v878 = vmul.f32 %v814, %v814
    %v879 = vmul.f32 %v815, %v815
    %v880 = vmul.f32 %v816, %v816
    %v881 = vmul.f32 %v817, %v817
    %v882 = vmul.f32 %v818, %v818
    %v883 = vmul.f32 %v819, %v819
    %v884 = vmul.f32 %v820, %v820
    %v885 = vmul.f32 %v821, %v821
    %v886 = vmul.f32 %v822, %v822
    %v887 = vmul.f32 %v823, %v823
    %v888 = vmul.f32 %v824, %v824
    %v889 = vmul.f32 %v825, %v825
    %v890 = vmul.f32 %v826, %v826
    %v891 = vmul.f32 %v827, %v827
    %v892 = vmul.f32 %v828, %v828
    %v893 = vmul.f32 %v829, %v829
    %v894 = vmul.f32 %v830, %v830
    %v895 = vmul.f32 %v831, %v831
    %v896 = vmul.f32 %v832, %v832
    %v897 = vmul.f32 %v833, %v833
    %v898 = vmul.f32 %v834, %v834
    %v899 = vmul.f32 %v835, %v835
    %v900 = vmul.f32 %v836, %v836
    %v901 = vmul.f32 %v837, %v837
    %v902 = vmul.f32 %v838, %v838
    %v903 = vmul.f32 %v839, %v839
    %v904 = vmul.f32 %v840, %v840
    %v905 = vmul.f32 %v841, %v841
    %v906 = vmul.f32 %v842, %v842
    %v907 = vmul.f32 %v843, %v843
    %v908 = vmul.f32 %v844, %v844
    %v909 = vmul.f32 %v845, %v845
    %v910 = vmul.f32 %v846, %v846
    %v911 = vmul.f32 %v847, %v847
    %v912 = vmul.f32 %v848, %v848
    %v913 = vmul.f32 %v849, %v849
    %v914 = vmul.f32 %v850, %v850
    %v915 = vmul.f32 %v851, %v851
    %v916 = vmul.f32 %v852, %v852
    %v917 = vmul.f32 %v853, %v853
    %v918 = vmul.f32 %v854, %v854
    %v919 = vmul.f32 %v855, %v855
    %v920 = vmul.f32 %v856, %v856
    %v921 = vmul.f32 %v857, %v857
    %v922 = vmul.f32 %v858, %v858
    %v923 = vmul.f32 %v859, %v859
    %v924 = vmul.f32 %v860, %v860
    %v925 = vmul.f32 %v861, %v861
    %v926 = vmul.f32 %v862, %v862
    %v927 = vmul.f32 %v863, %v863
    %v928 = vmul.f32 %v864, %v864
    %929 = vadd.xlane.f32.xlu0 %v865
    %v930 = vpop.xlane.xlu0 %929
    %931 = vadd.xlane.f32.xlu0 %v866
    %v932 = vpop.xlane.xlu0 %931
    %933 = vadd.xlane.f32.xlu0 %v867
    %v934 = vpop.xlane.xlu0 %933
    %935 = vadd.xlane.f32.xlu0 %v868
    %v936 = vpop.xlane.xlu0 %935
    %937 = vadd.xlane.f32.xlu0 %v869
    %v938 = vpop.xlane.xlu0 %937
    %939 = vadd.xlane.f32.xlu0 %v870
    %v940 = vpop.xlane.xlu0 %939
    %941 = vadd.xlane.f32.xlu0 %v871
    %v942 = vpop.xlane.xlu0 %941
    %943 = vadd.xlane.f32.xlu0 %v872
    %v944 = vpop.xlane.xlu0 %943
    %945 = vadd.xlane.f32.xlu0 %v873
    %v946 = vpop.xlane.xlu0 %945
    %947 = vadd.xlane.f32.xlu0 %v874
    %v948 = vpop.xlane.xlu0 %947
    %949 = vadd.xlane.f32.xlu0 %v875
    %v950 = vpop.xlane.xlu0 %949
    %951 = vadd.xlane.f32.xlu0 %v876
    %v952 = vpop.xlane.xlu0 %951
    %953 = vadd.xlane.f32.xlu0 %v877
    %v954 = vpop.xlane.xlu0 %953
    %955 = vadd.xlane.f32.xlu0 %v878
    %v956 = vpop.xlane.xlu0 %955
    %957 = vadd.xlane.f32.xlu0 %v879
    %v958 = vpop.xlane.xlu0 %957
    %959 = vadd.xlane.f32.xlu0 %v880
    %v960 = vpop.xlane.xlu0 %959
    %961 = vadd.xlane.f32.xlu0 %v881
    %v962 = vpop.xlane.xlu0 %961
    %963 = vadd.xlane.f32.xlu0 %v882
    %v964 = vpop.xlane.xlu0 %963
    %965 = vadd.xlane.f32.xlu0 %v883
    %v966 = vpop.xlane.xlu0 %965
    %967 = vadd.xlane.f32.xlu0 %v884
    %v968 = vpop.xlane.xlu0 %967
    %969 = vadd.xlane.f32.xlu0 %v885
    %v970 = vpop.xlane.xlu0 %969
    %971 = vadd.xlane.f32.xlu0 %v886
    %v972 = vpop.xlane.xlu0 %971
    %973 = vadd.xlane.f32.xlu0 %v887
    %v974 = vpop.xlane.xlu0 %973
    %975 = vadd.xlane.f32.xlu0 %v888
    %v976 = vpop.xlane.xlu0 %975
    %977 = vadd.xlane.f32.xlu0 %v889
    %v978 = vpop.xlane.xlu0 %977
    %979 = vadd.xlane.f32.xlu0 %v890
    %v980 = vpop.xlane.xlu0 %979
    %981 = vadd.xlane.f32.xlu0 %v891
    %v982 = vpop.xlane.xlu0 %981
    %983 = vadd.xlane.f32.xlu0 %v892
    %v984 = vpop.xlane.xlu0 %983
    %985 = vadd.xlane.f32.xlu0 %v893
    %v986 = vpop.xlane.xlu0 %985
    %987 = vadd.xlane.f32.xlu0 %v894
    %v988 = vpop.xlane.xlu0 %987
    %989 = vadd.xlane.f32.xlu0 %v895
    %v990 = vpop.xlane.xlu0 %989
    %991 = vadd.xlane.f32.xlu0 %v896
    %v992 = vpop.xlane.xlu0 %991
    %993 = vadd.xlane.f32.xlu0 %v897
    %v994 = vpop.xlane.xlu0 %993
    %995 = vadd.xlane.f32.xlu0 %v898
    %v996 = vpop.xlane.xlu0 %995
    %997 = vadd.xlane.f32.xlu0 %v899
    %v998 = vpop.xlane.xlu0 %997
    %999 = vadd.xlane.f32.xlu0 %v900
    %v1000 = vpop.xlane.xlu0 %999
    %1001 = vadd.xlane.f32.xlu0 %v901
    %v1002 = vpop.xlane.xlu0 %1001
    %1003 = vadd.xlane.f32.xlu0 %v902
    %v1004 = vpop.xlane.xlu0 %1003
    %1005 = vadd.xlane.f32.xlu0 %v903
    %v1006 = vpop.xlane.xlu0 %1005
    %1007 = vadd.xlane.f32.xlu0 %v904
    %v1008 = vpop.xlane.xlu0 %1007
    %1009 = vadd.xlane.f32.xlu0 %v905
    %v1010 = vpop.xlane.xlu0 %1009
    %1011 = vadd.xlane.f32.xlu0 %v906
    %v1012 = vpop.xlane.xlu0 %1011
    %1013 = vadd.xlane.f32.xlu0 %v907
    %v1014 = vpop.xlane.xlu0 %1013
    %1015 = vadd.xlane.f32.xlu0 %v908
    %v1016 = vpop.xlane.xlu0 %1015
    %1017 = vadd.xlane.f32.xlu0 %v909
    %v1018 = vpop.xlane.xlu0 %1017
    %1019 = vadd.xlane.f32.xlu0 %v910
    %v1020 = vpop.xlane.xlu0 %1019
    %1021 = vadd.xlane.f32.xlu0 %v911
    %v1022 = vpop.xlane.xlu0 %1021
    %1023 = vadd.xlane.f32.xlu0 %v912
    %v1024 = vpop.xlane.xlu0 %1023
    %1025 = vadd.xlane.f32.xlu0 %v913
    %v1026 = vpop.xlane.xlu0 %1025
    %1027 = vadd.xlane.f32.xlu0 %v914
    %v1028 = vpop.xlane.xlu0 %1027
    %1029 = vadd.xlane.f32.xlu0 %v915
    %v1030 = vpop.xlane.xlu0 %1029
    %1031 = vadd.xlane.f32.xlu0 %v916
    %v1032 = vpop.xlane.xlu0 %1031
    %1033 = vadd.xlane.f32.xlu0 %v917
    %v1034 = vpop.xlane.xlu0 %1033
    %1035 = vadd.xlane.f32.xlu0 %v918
    %v1036 = vpop.xlane.xlu0 %1035
    %1037 = vadd.xlane.f32.xlu0 %v919
    %v1038 = vpop.xlane.xlu0 %1037
    %1039 = vadd.xlane.f32.xlu0 %v920
    %v1040 = vpop.xlane.xlu0 %1039
    %1041 = vadd.xlane.f32.xlu0 %v921
    %v1042 = vpop.xlane.xlu0 %1041
    %1043 = vadd.xlane.f32.xlu0 %v922
    %v1044 = vpop.xlane.xlu0 %1043
    %1045 = vadd.xlane.f32.xlu0 %v923
    %v1046 = vpop.xlane.xlu0 %1045
    %1047 = vadd.xlane.f32.xlu0 %v924
    %v1048 = vpop.xlane.xlu0 %1047
    %1049 = vadd.xlane.f32.xlu0 %v925
    %v1050 = vpop.xlane.xlu0 %1049
    %1051 = vadd.xlane.f32.xlu0 %v926
    %v1052 = vpop.xlane.xlu0 %1051
    %1053 = vadd.xlane.f32.xlu0 %v927
    %v1054 = vpop.xlane.xlu0 %1053
    %1055 = vadd.xlane.f32.xlu0 %v928
    %v1056 = vpop.xlane.xlu0 %1055
    %v1057 = vmul.f32 %v930, 0.0078125
    %v1058 = vmul.f32 %v932, 0.0078125
    %v1059 = vmul.f32 %v934, 0.0078125
    %v1060 = vmul.f32 %v936, 0.0078125
    %v1061 = vmul.f32 %v938, 0.0078125
    %v1062 = vmul.f32 %v940, 0.0078125
    %v1063 = vmul.f32 %v942, 0.0078125
    %v1064 = vmul.f32 %v944, 0.0078125
    %v1065 = vmul.f32 %v946, 0.0078125
    %v1066 = vmul.f32 %v948, 0.0078125
    %v1067 = vmul.f32 %v950, 0.0078125
    %v1068 = vmul.f32 %v952, 0.0078125
    %v1069 = vmul.f32 %v954, 0.0078125
    %v1070 = vmul.f32 %v956, 0.0078125
    %v1071 = vmul.f32 %v958, 0.0078125
    %v1072 = vmul.f32 %v960, 0.0078125
    %v1073 = vmul.f32 %v962, 0.0078125
    %v1074 = vmul.f32 %v964, 0.0078125
    %v1075 = vmul.f32 %v966, 0.0078125
    %v1076 = vmul.f32 %v968, 0.0078125
    %v1077 = vmul.f32 %v970, 0.0078125
    %v1078 = vmul.f32 %v972, 0.0078125
    %v1079 = vmul.f32 %v974, 0.0078125
    %v1080 = vmul.f32 %v976, 0.0078125
    %v1081 = vmul.f32 %v978, 0.0078125
    %v1082 = vmul.f32 %v980, 0.0078125
    %v1083 = vmul.f32 %v982, 0.0078125
    %v1084 = vmul.f32 %v984, 0.0078125
    %v1085 = vmul.f32 %v986, 0.0078125
    %v1086 = vmul.f32 %v988, 0.0078125
    %v1087 = vmul.f32 %v990, 0.0078125
    %v1088 = vmul.f32 %v992, 0.0078125
    %v1089 = vmul.f32 %v994, 0.0078125
    %v1090 = vmul.f32 %v996, 0.0078125
    %v1091 = vmul.f32 %v998, 0.0078125
    %v1092 = vmul.f32 %v1000, 0.0078125
    %v1093 = vmul.f32 %v1002, 0.0078125
    %v1094 = vmul.f32 %v1004, 0.0078125
    %v1095 = vmul.f32 %v1006, 0.0078125
    %v1096 = vmul.f32 %v1008, 0.0078125
    %v1097 = vmul.f32 %v1010, 0.0078125
    %v1098 = vmul.f32 %v1012, 0.0078125
    %v1099 = vmul.f32 %v1014, 0.0078125
    %v1100 = vmul.f32 %v1016, 0.0078125
    %v1101 = vmul.f32 %v1018, 0.0078125
    %v1102 = vmul.f32 %v1020, 0.0078125
    %v1103 = vmul.f32 %v1022, 0.0078125
    %v1104 = vmul.f32 %v1024, 0.0078125
    %v1105 = vmul.f32 %v1026, 0.0078125
    %v1106 = vmul.f32 %v1028, 0.0078125
    %v1107 = vmul.f32 %v1030, 0.0078125
    %v1108 = vmul.f32 %v1032, 0.0078125
    %v1109 = vmul.f32 %v1034, 0.0078125
    %v1110 = vmul.f32 %v1036, 0.0078125
    %v1111 = vmul.f32 %v1038, 0.0078125
    %v1112 = vmul.f32 %v1040, 0.0078125
    %v1113 = vmul.f32 %v1042, 0.0078125
    %v1114 = vmul.f32 %v1044, 0.0078125
    %v1115 = vmul.f32 %v1046, 0.0078125
    %v1116 = vmul.f32 %v1048, 0.0078125
    %v1117 = vmul.f32 %v1050, 0.0078125
    %v1118 = vmul.f32 %v1052, 0.0078125
    %v1119 = vmul.f32 %v1054, 0.0078125
    %v1120 = vmul.f32 %v1056, 0.0078125
    %v1121 = vld [vmem:[%s3] sm:$0x1]
    %v1123 = vlaneseq
    %v1124 = vshrl.u32 %v1123, 7
    %v1125 = vsub.s32 0, %v1124
    %v1126 = vrot.slane %v1121, %v1125
    %v1128 = vmul.f32 %v801, %v1126
    %v1129 = vmul.f32 %v802, %v1126
    %v1130 = vmul.f32 %v803, %v1126
    %v1131 = vmul.f32 %v804, %v1126
    %v1132 = vmul.f32 %v805, %v1126
    %v1133 = vmul.f32 %v806, %v1126
    %v1134 = vmul.f32 %v807, %v1126
    %v1135 = vmul.f32 %v808, %v1126
    %v1136 = vmul.f32 %v809, %v1126
    %v1137 = vmul.f32 %v810, %v1126
    %v1138 = vmul.f32 %v811, %v1126
    %v1139 = vmul.f32 %v812, %v1126
    %v1140 = vmul.f32 %v813, %v1126
    %v1141 = vmul.f32 %v814, %v1126
    %v1142 = vmul.f32 %v815, %v1126
    %v1143 = vmul.f32 %v816, %v1126
    %v1144 = vmul.f32 %v817, %v1126
    %v1145 = vmul.f32 %v818, %v1126
    %v1146 = vmul.f32 %v819, %v1126
    %v1147 = vmul.f32 %v820, %v1126
    %v1148 = vmul.f32 %v821, %v1126
    %v1149 = vmul.f32 %v822, %v1126
    %v1150 = vmul.f32 %v823, %v1126
    %v1151 = vmul.f32 %v824, %v1126
    %v1152 = vmul.f32 %v825, %v1126
    %v1153 = vmul.f32 %v826, %v1126
    %v1154 = vmul.f32 %v827, %v1126
    %v1155 = vmul.f32 %v828, %v1126
    %v1156 = vmul.f32 %v829, %v1126
    %v1157 = vmul.f32 %v830, %v1126
    %v1158 = vmul.f32 %v831, %v1126
    %v1159 = vmul.f32 %v832, %v1126
    %v1160 = vmul.f32 %v833, %v1126
    %v1161 = vmul.f32 %v834, %v1126
    %v1162 = vmul.f32 %v835, %v1126
    %v1163 = vmul.f32 %v836, %v1126
    %v1164 = vmul.f32 %v837, %v1126
    %v1165 = vmul.f32 %v838, %v1126
    %v1166 = vmul.f32 %v839, %v1126
    %v1167 = vmul.f32 %v840, %v1126
    %v1168 = vmul.f32 %v841, %v1126
    %v1169 = vmul.f32 %v842, %v1126
    %v1170 = vmul.f32 %v843, %v1126
    %v1171 = vmul.f32 %v844, %v1126
    %v1172 = vmul.f32 %v845, %v1126
    %v1173 = vmul.f32 %v846, %v1126
    %v1174 = vmul.f32 %v847, %v1126
    %v1175 = vmul.f32 %v848, %v1126
    %v1176 = vmul.f32 %v849, %v1126
    %v1177 = vmul.f32 %v850, %v1126
    %v1178 = vmul.f32 %v851, %v1126
    %v1179 = vmul.f32 %v852, %v1126
    %v1180 = vmul.f32 %v853, %v1126
    %v1181 = vmul.f32 %v854, %v1126
    %v1182 = vmul.f32 %v855, %v1126
    %v1183 = vmul.f32 %v856, %v1126
    %v1184 = vmul.f32 %v857, %v1126
    %v1185 = vmul.f32 %v858, %v1126
    %v1186 = vmul.f32 %v859, %v1126
    %v1187 = vmul.f32 %v860, %v1126
    %v1188 = vmul.f32 %v861, %v1126
    %v1189 = vmul.f32 %v862, %v1126
    %v1190 = vmul.f32 %v863, %v1126
    %v1191 = vmul.f32 %v864, %v1126
    %1192 = vadd.xlane.f32.xlu0 %v1128
    %v1193 = vpop.xlane.xlu0 %1192
    %1194 = vadd.xlane.f32.xlu0 %v1129
    %v1195 = vpop.xlane.xlu0 %1194
    %1196 = vadd.xlane.f32.xlu0 %v1130
    %v1197 = vpop.xlane.xlu0 %1196
    %1198 = vadd.xlane.f32.xlu0 %v1131
    %v1199 = vpop.xlane.xlu0 %1198
    %1200 = vadd.xlane.f32.xlu0 %v1132
    %v1201 = vpop.xlane.xlu0 %1200
    %1202 = vadd.xlane.f32.xlu0 %v1133
    %v1203 = vpop.xlane.xlu0 %1202
    %1204 = vadd.xlane.f32.xlu0 %v1134
    %v1205 = vpop.xlane.xlu0 %1204
    %1206 = vadd.xlane.f32.xlu0 %v1135
    %v1207 = vpop.xlane.xlu0 %1206
    %1208 = vadd.xlane.f32.xlu0 %v1136
    %v1209 = vpop.xlane.xlu0 %1208
    %1210 = vadd.xlane.f32.xlu0 %v1137
    %v1211 = vpop.xlane.xlu0 %1210
    %1212 = vadd.xlane.f32.xlu0 %v1138
    %v1213 = vpop.xlane.xlu0 %1212
    %1214 = vadd.xlane.f32.xlu0 %v1139
    %v1215 = vpop.xlane.xlu0 %1214
    %1216 = vadd.xlane.f32.xlu0 %v1140
    %v1217 = vpop.xlane.xlu0 %1216
    %1218 = vadd.xlane.f32.xlu0 %v1141
    %v1219 = vpop.xlane.xlu0 %1218
    %1220 = vadd.xlane.f32.xlu0 %v1142
    %v1221 = vpop.xlane.xlu0 %1220
    %1222 = vadd.xlane.f32.xlu0 %v1143
    %v1223 = vpop.xlane.xlu0 %1222
    %1224 = vadd.xlane.f32.xlu0 %v1144
    %v1225 = vpop.xlane.xlu0 %1224
    %1226 = vadd.xlane.f32.xlu0 %v1145
    %v1227 = vpop.xlane.xlu0 %1226
    %1228 = vadd.xlane.f32.xlu0 %v1146
    %v1229 = vpop.xlane.xlu0 %1228
    %1230 = vadd.xlane.f32.xlu0 %v1147
    %v1231 = vpop.xlane.xlu0 %1230
    %1232 = vadd.xlane.f32.xlu0 %v1148
    %v1233 = vpop.xlane.xlu0 %1232
    %1234 = vadd.xlane.f32.xlu0 %v1149
    %v1235 = vpop.xlane.xlu0 %1234
    %1236 = vadd.xlane.f32.xlu0 %v1150
    %v1237 = vpop.xlane.xlu0 %1236
    %1238 = vadd.xlane.f32.xlu0 %v1151
    %v1239 = vpop.xlane.xlu0 %1238
    %1240 = vadd.xlane.f32.xlu0 %v1152
    %v1241 = vpop.xlane.xlu0 %1240
    %1242 = vadd.xlane.f32.xlu0 %v1153
    %v1243 = vpop.xlane.xlu0 %1242
    %1244 = vadd.xlane.f32.xlu0 %v1154
    %v1245 = vpop.xlane.xlu0 %1244
    %1246 = vadd.xlane.f32.xlu0 %v1155
    %v1247 = vpop.xlane.xlu0 %1246
    %1248 = vadd.xlane.f32.xlu0 %v1156
    %v1249 = vpop.xlane.xlu0 %1248
    %1250 = vadd.xlane.f32.xlu0 %v1157
    %v1251 = vpop.xlane.xlu0 %1250
    %1252 = vadd.xlane.f32.xlu0 %v1158
    %v1253 = vpop.xlane.xlu0 %1252
    %1254 = vadd.xlane.f32.xlu0 %v1159
    %v1255 = vpop.xlane.xlu0 %1254
    %1256 = vadd.xlane.f32.xlu0 %v1160
    %v1257 = vpop.xlane.xlu0 %1256
    %1258 = vadd.xlane.f32.xlu0 %v1161
    %v1259 = vpop.xlane.xlu0 %1258
    %1260 = vadd.xlane.f32.xlu0 %v1162
    %v1261 = vpop.xlane.xlu0 %1260
    %1262 = vadd.xlane.f32.xlu0 %v1163
    %v1263 = vpop.xlane.xlu0 %1262
    %1264 = vadd.xlane.f32.xlu0 %v1164
    %v1265 = vpop.xlane.xlu0 %1264
    %1266 = vadd.xlane.f32.xlu0 %v1165
    %v1267 = vpop.xlane.xlu0 %1266
    %1268 = vadd.xlane.f32.xlu0 %v1166
    %v1269 = vpop.xlane.xlu0 %1268
    %1270 = vadd.xlane.f32.xlu0 %v1167
    %v1271 = vpop.xlane.xlu0 %1270
    %1272 = vadd.xlane.f32.xlu0 %v1168
    %v1273 = vpop.xlane.xlu0 %1272
    %1274 = vadd.xlane.f32.xlu0 %v1169
    %v1275 = vpop.xlane.xlu0 %1274
    %1276 = vadd.xlane.f32.xlu0 %v1170
    %v1277 = vpop.xlane.xlu0 %1276
    %1278 = vadd.xlane.f32.xlu0 %v1171
    %v1279 = vpop.xlane.xlu0 %1278
    %1280 = vadd.xlane.f32.xlu0 %v1172
    %v1281 = vpop.xlane.xlu0 %1280
    %1282 = vadd.xlane.f32.xlu0 %v1173
    %v1283 = vpop.xlane.xlu0 %1282
    %1284 = vadd.xlane.f32.xlu0 %v1174
    %v1285 = vpop.xlane.xlu0 %1284
    %1286 = vadd.xlane.f32.xlu0 %v1175
    %v1287 = vpop.xlane.xlu0 %1286
    %1288 = vadd.xlane.f32.xlu0 %v1176
    %v1289 = vpop.xlane.xlu0 %1288
    %1290 = vadd.xlane.f32.xlu0 %v1177
    %v1291 = vpop.xlane.xlu0 %1290
    %1292 = vadd.xlane.f32.xlu0 %v1178
    %v1293 = vpop.xlane.xlu0 %1292
    %1294 = vadd.xlane.f32.xlu0 %v1179
    %v1295 = vpop.xlane.xlu0 %1294
    %1296 = vadd.xlane.f32.xlu0 %v1180
    %v1297 = vpop.xlane.xlu0 %1296
    %1298 = vadd.xlane.f32.xlu0 %v1181
    %v1299 = vpop.xlane.xlu0 %1298
    %1300 = vadd.xlane.f32.xlu0 %v1182
    %v1301 = vpop.xlane.xlu0 %1300
    %1302 = vadd.xlane.f32.xlu0 %v1183
    %v1303 = vpop.xlane.xlu0 %1302
    %1304 = vadd.xlane.f32.xlu0 %v1184
    %v1305 = vpop.xlane.xlu0 %1304
    %1306 = vadd.xlane.f32.xlu0 %v1185
    %v1307 = vpop.xlane.xlu0 %1306
    %1308 = vadd.xlane.f32.xlu0 %v1186
    %v1309 = vpop.xlane.xlu0 %1308
    %1310 = vadd.xlane.f32.xlu0 %v1187
    %v1311 = vpop.xlane.xlu0 %1310
    %1312 = vadd.xlane.f32.xlu0 %v1188
    %v1313 = vpop.xlane.xlu0 %1312
    %1314 = vadd.xlane.f32.xlu0 %v1189
    %v1315 = vpop.xlane.xlu0 %1314
    %1316 = vadd.xlane.f32.xlu0 %v1190
    %v1317 = vpop.xlane.xlu0 %1316
    %1318 = vadd.xlane.f32.xlu0 %v1191
    %v1319 = vpop.xlane.xlu0 %1318
    %v1320 = vadd.f32 %v1057, 1e-05
    %v1321 = vadd.f32 %v1058, 1e-05
    %v1322 = vadd.f32 %v1059, 1e-05
    %v1323 = vadd.f32 %v1060, 1e-05
    %v1324 = vadd.f32 %v1061, 1e-05
    %v1325 = vadd.f32 %v1062, 1e-05
    %v1326 = vadd.f32 %v1063, 1e-05
    %v1327 = vadd.f32 %v1064, 1e-05
    %v1328 = vadd.f32 %v1065, 1e-05
    %v1329 = vadd.f32 %v1066, 1e-05
    %v1330 = vadd.f32 %v1067, 1e-05
    %v1331 = vadd.f32 %v1068, 1e-05
    %v1332 = vadd.f32 %v1069, 1e-05
    %v1333 = vadd.f32 %v1070, 1e-05
    %v1334 = vadd.f32 %v1071, 1e-05
    %v1335 = vadd.f32 %v1072, 1e-05
    %v1336 = vadd.f32 %v1073, 1e-05
    %v1337 = vadd.f32 %v1074, 1e-05
    %v1338 = vadd.f32 %v1075, 1e-05
    %v1339 = vadd.f32 %v1076, 1e-05
    %v1340 = vadd.f32 %v1077, 1e-05
    %v1341 = vadd.f32 %v1078, 1e-05
    %v1342 = vadd.f32 %v1079, 1e-05
    %v1343 = vadd.f32 %v1080, 1e-05
    %v1344 = vadd.f32 %v1081, 1e-05
    %v1345 = vadd.f32 %v1082, 1e-05
    %v1346 = vadd.f32 %v1083, 1e-05
    %v1347 = vadd.f32 %v1084, 1e-05
    %v1348 = vadd.f32 %v1085, 1e-05
    %v1349 = vadd.f32 %v1086, 1e-05
    %v1350 = vadd.f32 %v1087, 1e-05
    %v1351 = vadd.f32 %v1088, 1e-05
    %v1352 = vadd.f32 %v1089, 1e-05
    %v1353 = vadd.f32 %v1090, 1e-05
    %v1354 = vadd.f32 %v1091, 1e-05
    %v1355 = vadd.f32 %v1092, 1e-05
    %v1356 = vadd.f32 %v1093, 1e-05
    %v1357 = vadd.f32 %v1094, 1e-05
    %v1358 = vadd.f32 %v1095, 1e-05
    %v1359 = vadd.f32 %v1096, 1e-05
    %v1360 = vadd.f32 %v1097, 1e-05
    %v1361 = vadd.f32 %v1098, 1e-05
    %v1362 = vadd.f32 %v1099, 1e-05
    %v1363 = vadd.f32 %v1100, 1e-05
    %v1364 = vadd.f32 %v1101, 1e-05
    %v1365 = vadd.f32 %v1102, 1e-05
    %v1366 = vadd.f32 %v1103, 1e-05
    %v1367 = vadd.f32 %v1104, 1e-05
    %v1368 = vadd.f32 %v1105, 1e-05
    %v1369 = vadd.f32 %v1106, 1e-05
    %v1370 = vadd.f32 %v1107, 1e-05
    %v1371 = vadd.f32 %v1108, 1e-05
    %v1372 = vadd.f32 %v1109, 1e-05
    %v1373 = vadd.f32 %v1110, 1e-05
    %v1374 = vadd.f32 %v1111, 1e-05
    %v1375 = vadd.f32 %v1112, 1e-05
    %v1376 = vadd.f32 %v1113, 1e-05
    %v1377 = vadd.f32 %v1114, 1e-05
    %v1378 = vadd.f32 %v1115, 1e-05
    %v1379 = vadd.f32 %v1116, 1e-05
    %v1380 = vadd.f32 %v1117, 1e-05
    %v1381 = vadd.f32 %v1118, 1e-05
    %v1382 = vadd.f32 %v1119, 1e-05
    %v1383 = vadd.f32 %v1120, 1e-05
    %v1384 = vrsqrt.pop %v1320
    %v1385 = vrsqrt.pop %v1321
    %v1386 = vrsqrt.pop %v1322
    %v1387 = vrsqrt.pop %v1323
    %v1388 = vrsqrt.pop %v1324
    %v1389 = vrsqrt.pop %v1325
    %v1390 = vrsqrt.pop %v1326
    %v1391 = vrsqrt.pop %v1327
    %v1392 = vrsqrt.pop %v1328
    %v1393 = vrsqrt.pop %v1329
    %v1394 = vrsqrt.pop %v1330
    %v1395 = vrsqrt.pop %v1331
    %v1396 = vrsqrt.pop %v1332
    %v1397 = vrsqrt.pop %v1333
    %v1398 = vrsqrt.pop %v1334
    %v1399 = vrsqrt.pop %v1335
    %v1400 = vrsqrt.pop %v1336
    %v1401 = vrsqrt.pop %v1337
    %v1402 = vrsqrt.pop %v1338
    %v1403 = vrsqrt.pop %v1339
    %v1404 = vrsqrt.pop %v1340
    %v1405 = vrsqrt.pop %v1341
    %v1406 = vrsqrt.pop %v1342
    %v1407 = vrsqrt.pop %v1343
    %v1408 = vrsqrt.pop %v1344
    %v1409 = vrsqrt.pop %v1345
    %v1410 = vrsqrt.pop %v1346
    %v1411 = vrsqrt.pop %v1347
    %v1412 = vrsqrt.pop %v1348
    %v1413 = vrsqrt.pop %v1349
    %v1414 = vrsqrt.pop %v1350
    %v1415 = vrsqrt.pop %v1351
    %v1416 = vrsqrt.pop %v1352
    %v1417 = vrsqrt.pop %v1353
    %v1418 = vrsqrt.pop %v1354
    %v1419 = vrsqrt.pop %v1355
    %v1420 = vrsqrt.pop %v1356
    %v1421 = vrsqrt.pop %v1357
    %v1422 = vrsqrt.pop %v1358
    %v1423 = vrsqrt.pop %v1359
    %v1424 = vrsqrt.pop %v1360
    %v1425 = vrsqrt.pop %v1361
    %v1426 = vrsqrt.pop %v1362
    %v1427 = vrsqrt.pop %v1363
    %v1428 = vrsqrt.pop %v1364
    %v1429 = vrsqrt.pop %v1365
    %v1430 = vrsqrt.pop %v1366
    %v1431 = vrsqrt.pop %v1367
    %v1432 = vrsqrt.pop %v1368
    %v1433 = vrsqrt.pop %v1369
    %v1434 = vrsqrt.pop %v1370
    %v1435 = vrsqrt.pop %v1371
    %v1436 = vrsqrt.pop %v1372
    %v1437 = vrsqrt.pop %v1373
    %v1438 = vrsqrt.pop %v1374
    %v1439 = vrsqrt.pop %v1375
    %v1440 = vrsqrt.pop %v1376
    %v1441 = vrsqrt.pop %v1377
    %v1442 = vrsqrt.pop %v1378
    %v1443 = vrsqrt.pop %v1379
    %v1444 = vrsqrt.pop %v1380
    %v1445 = vrsqrt.pop %v1381
    %v1446 = vrsqrt.pop %v1382
    %v1447 = vrsqrt.pop %v1383
    %v1448 = vmul.f32 %v1193, %v1384
    %v1449 = vmul.f32 %v1195, %v1385
    %v1450 = vmul.f32 %v1197, %v1386
    %v1451 = vmul.f32 %v1199, %v1387
    %v1452 = vmul.f32 %v1201, %v1388
    %v1453 = vmul.f32 %v1203, %v1389
    %v1454 = vmul.f32 %v1205, %v1390
    %v1455 = vmul.f32 %v1207, %v1391
    %v1456 = vmul.f32 %v1209, %v1392
    %v1457 = vmul.f32 %v1211, %v1393
    %v1458 = vmul.f32 %v1213, %v1394
    %v1459 = vmul.f32 %v1215, %v1395
    %v1460 = vmul.f32 %v1217, %v1396
    %v1461 = vmul.f32 %v1219, %v1397
    %v1462 = vmul.f32 %v1221, %v1398
    %v1463 = vmul.f32 %v1223, %v1399
    %v1464 = vmul.f32 %v1225, %v1400
    %v1465 = vmul.f32 %v1227, %v1401
    %v1466 = vmul.f32 %v1229, %v1402
    %v1467 = vmul.f32 %v1231, %v1403
    %v1468 = vmul.f32 %v1233, %v1404
    %v1469 = vmul.f32 %v1235, %v1405
    %v1470 = vmul.f32 %v1237, %v1406
    %v1471 = vmul.f32 %v1239, %v1407
    %v1472 = vmul.f32 %v1241, %v1408
    %v1473 = vmul.f32 %v1243, %v1409
    %v1474 = vmul.f32 %v1245, %v1410
    %v1475 = vmul.f32 %v1247, %v1411
    %v1476 = vmul.f32 %v1249, %v1412
    %v1477 = vmul.f32 %v1251, %v1413
    %v1478 = vmul.f32 %v1253, %v1414
    %v1479 = vmul.f32 %v1255, %v1415
    %v1480 = vmul.f32 %v1257, %v1416
    %v1481 = vmul.f32 %v1259, %v1417
    %v1482 = vmul.f32 %v1261, %v1418
    %v1483 = vmul.f32 %v1263, %v1419
    %v1484 = vmul.f32 %v1265, %v1420
    %v1485 = vmul.f32 %v1267, %v1421
    %v1486 = vmul.f32 %v1269, %v1422
    %v1487 = vmul.f32 %v1271, %v1423
    %v1488 = vmul.f32 %v1273, %v1424
    %v1489 = vmul.f32 %v1275, %v1425
    %v1490 = vmul.f32 %v1277, %v1426
    %v1491 = vmul.f32 %v1279, %v1427
    %v1492 = vmul.f32 %v1281, %v1428
    %v1493 = vmul.f32 %v1283, %v1429
    %v1494 = vmul.f32 %v1285, %v1430
    %v1495 = vmul.f32 %v1287, %v1431
    %v1496 = vmul.f32 %v1289, %v1432
    %v1497 = vmul.f32 %v1291, %v1433
    %v1498 = vmul.f32 %v1293, %v1434
    %v1499 = vmul.f32 %v1295, %v1435
    %v1500 = vmul.f32 %v1297, %v1436
    %v1501 = vmul.f32 %v1299, %v1437
    %v1502 = vmul.f32 %v1301, %v1438
    %v1503 = vmul.f32 %v1303, %v1439
    %v1504 = vmul.f32 %v1305, %v1440
    %v1505 = vmul.f32 %v1307, %v1441
    %v1506 = vmul.f32 %v1309, %v1442
    %v1507 = vmul.f32 %v1311, %v1443
    %v1508 = vmul.f32 %v1313, %v1444
    %v1509 = vmul.f32 %v1315, %v1445
    %v1510 = vmul.f32 %v1317, %v1446
    %v1511 = vmul.f32 %v1319, %v1447
    %v1512 = vld [vmem:[#allocation2] sm:$0x1]
    %s1513 = vtos %v1512
    %v1514 = vstv %s1513
    %v1515 = vadd.f32 %v1448, %v1514
    %v1516 = vadd.f32 %v1449, %v1514
    %v1517 = vadd.f32 %v1450, %v1514
    %v1518 = vadd.f32 %v1451, %v1514
    %v1519 = vadd.f32 %v1452, %v1514
    %v1520 = vadd.f32 %v1453, %v1514
    %v1521 = vadd.f32 %v1454, %v1514
    %v1522 = vadd.f32 %v1455, %v1514
    %v1523 = vadd.f32 %v1456, %v1514
    %v1524 = vadd.f32 %v1457, %v1514
    %v1525 = vadd.f32 %v1458, %v1514
    %v1526 = vadd.f32 %v1459, %v1514
    %v1527 = vadd.f32 %v1460, %v1514
    %v1528 = vadd.f32 %v1461, %v1514
    %v1529 = vadd.f32 %v1462, %v1514
    %v1530 = vadd.f32 %v1463, %v1514
    %v1531 = vadd.f32 %v1464, %v1514
    %v1532 = vadd.f32 %v1465, %v1514
    %v1533 = vadd.f32 %v1466, %v1514
    %v1534 = vadd.f32 %v1467, %v1514
    %v1535 = vadd.f32 %v1468, %v1514
    %v1536 = vadd.f32 %v1469, %v1514
    %v1537 = vadd.f32 %v1470, %v1514
    %v1538 = vadd.f32 %v1471, %v1514
    %v1539 = vadd.f32 %v1472, %v1514
    %v1540 = vadd.f32 %v1473, %v1514
    %v1541 = vadd.f32 %v1474, %v1514
    %v1542 = vadd.f32 %v1475, %v1514
    %v1543 = vadd.f32 %v1476, %v1514
    %v1544 = vadd.f32 %v1477, %v1514
    %v1545 = vadd.f32 %v1478, %v1514
    %v1546 = vadd.f32 %v1479, %v1514
    %v1547 = vadd.f32 %v1480, %v1514
    %v1548 = vadd.f32 %v1481, %v1514
    %v1549 = vadd.f32 %v1482, %v1514
    %v1550 = vadd.f32 %v1483, %v1514
    %v1551 = vadd.f32 %v1484, %v1514
    %v1552 = vadd.f32 %v1485, %v1514
    %v1553 = vadd.f32 %v1486, %v1514
    %v1554 = vadd.f32 %v1487, %v1514
    %v1555 = vadd.f32 %v1488, %v1514
    %v1556 = vadd.f32 %v1489, %v1514
    %v1557 = vadd.f32 %v1490, %v1514
    %v1558 = vadd.f32 %v1491, %v1514
    %v1559 = vadd.f32 %v1492, %v1514
    %v1560 = vadd.f32 %v1493, %v1514
    %v1561 = vadd.f32 %v1494, %v1514
    %v1562 = vadd.f32 %v1495, %v1514
    %v1563 = vadd.f32 %v1496, %v1514
    %v1564 = vadd.f32 %v1497, %v1514
    %v1565 = vadd.f32 %v1498, %v1514
    %v1566 = vadd.f32 %v1499, %v1514
    %v1567 = vadd.f32 %v1500, %v1514
    %v1568 = vadd.f32 %v1501, %v1514
    %v1569 = vadd.f32 %v1502, %v1514
    %v1570 = vadd.f32 %v1503, %v1514
    %v1571 = vadd.f32 %v1504, %v1514
    %v1572 = vadd.f32 %v1505, %v1514
    %v1573 = vadd.f32 %v1506, %v1514
    %v1574 = vadd.f32 %v1507, %v1514
    %v1575 = vadd.f32 %v1508, %v1514
    %v1576 = vadd.f32 %v1509, %v1514
    %v1577 = vadd.f32 %v1510, %v1514
    %v1578 = vadd.f32 %v1511, %v1514
    %v1643 = vlaneseq
    %v1644 = vshrl.u32 %v1643, 7
    %v1645 = vsub.s32 0, %v1644
    %v1646 = vrot.slane %v1515, %v1645
    %v1647 = vlaneseq
    %v1648 = vshrl.u32 %v1647, 7
    %v1649 = vsub.s32 1, %v1648
    %v1650 = vrot.slane %v1515, %v1649
    %v1651 = vlaneseq
    %v1652 = vshrl.u32 %v1651, 7
    %v1653 = vsub.s32 2, %v1652
    %v1654 = vrot.slane %v1515, %v1653
    %v1655 = vlaneseq
    %v1656 = vshrl.u32 %v1655, 7
    %v1657 = vsub.s32 3, %v1656
    %v1658 = vrot.slane %v1515, %v1657
    %v1659 = vlaneseq
    %v1660 = vshrl.u32 %v1659, 7
    %v1661 = vsub.s32 4, %v1660
    %v1662 = vrot.slane %v1515, %v1661
    %v1663 = vlaneseq
    %v1664 = vshrl.u32 %v1663, 7
    %v1665 = vsub.s32 5, %v1664
    %v1666 = vrot.slane %v1515, %v1665
    %v1667 = vlaneseq
    %v1668 = vshrl.u32 %v1667, 7
    %v1669 = vsub.s32 6, %v1668
    %v1670 = vrot.slane %v1515, %v1669
    %v1671 = vlaneseq
    %v1672 = vshrl.u32 %v1671, 7
    %v1673 = vsub.s32 7, %v1672
    %v1674 = vrot.slane %v1515, %v1673
    %v1675 = vlaneseq
    %v1676 = vshrl.u32 %v1675, 7
    %v1677 = vsub.s32 0, %v1676
    %v1678 = vrot.slane %v1516, %v1677
    %v1679 = vlaneseq
    %v1680 = vshrl.u32 %v1679, 7
    %v1681 = vsub.s32 1, %v1680
    %v1682 = vrot.slane %v1516, %v1681
    %v1683 = vlaneseq
    %v1684 = vshrl.u32 %v1683, 7
    %v1685 = vsub.s32 2, %v1684
    %v1686 = vrot.slane %v1516, %v1685
    %v1687 = vlaneseq
    %v1688 = vshrl.u32 %v1687, 7
    %v1689 = vsub.s32 3, %v1688
    %v1690 = vrot.slane %v1516, %v1689
    %v1691 = vlaneseq
    %v1692 = vshrl.u32 %v1691, 7
    %v1693 = vsub.s32 4, %v1692
    %v1694 = vrot.slane %v1516, %v1693
    %v1695 = vlaneseq
    %v1696 = vshrl.u32 %v1695, 7
    %v1697 = vsub.s32 5, %v1696
    %v1698 = vrot.slane %v1516, %v1697
    %v1699 = vlaneseq
    %v1700 = vshrl.u32 %v1699, 7
    %v1701 = vsub.s32 6, %v1700
    %v1702 = vrot.slane %v1516, %v1701
    %v1703 = vlaneseq
    %v1704 = vshrl.u32 %v1703, 7
    %v1705 = vsub.s32 7, %v1704
    %v1706 = vrot.slane %v1516, %v1705
    %v1707 = vlaneseq
    %v1708 = vshrl.u32 %v1707, 7
    %v1709 = vsub.s32 0, %v1708
    %v1710 = vrot.slane %v1517, %v1709
    %v1711 = vlaneseq
    %v1712 = vshrl.u32 %v1711, 7
    %v1713 = vsub.s32 1, %v1712
    %v1714 = vrot.slane %v1517, %v1713
    %v1715 = vlaneseq
    %v1716 = vshrl.u32 %v1715, 7
    %v1717 = vsub.s32 2, %v1716
    %v1718 = vrot.slane %v1517, %v1717
    %v1719 = vlaneseq
    %v1720 = vshrl.u32 %v1719, 7
    %v1721 = vsub.s32 3, %v1720
    %v1722 = vrot.slane %v1517, %v1721
    %v1723 = vlaneseq
    %v1724 = vshrl.u32 %v1723, 7
    %v1725 = vsub.s32 4, %v1724
    %v1726 = vrot.slane %v1517, %v1725
    %v1727 = vlaneseq
    %v1728 = vshrl.u32 %v1727, 7
    %v1729 = vsub.s32 5, %v1728
    %v1730 = vrot.slane %v1517, %v1729
    %v1731 = vlaneseq
    %v1732 = vshrl.u32 %v1731, 7
    %v1733 = vsub.s32 6, %v1732
    %v1734 = vrot.slane %v1517, %v1733
    %v1735 = vlaneseq
    %v1736 = vshrl.u32 %v1735, 7
    %v1737 = vsub.s32 7, %v1736
    %v1738 = vrot.slane %v1517, %v1737
    %v1739 = vlaneseq
    %v1740 = vshrl.u32 %v1739, 7
    %v1741 = vsub.s32 0, %v1740
    %v1742 = vrot.slane %v1518, %v1741
    %v1743 = vlaneseq
    %v1744 = vshrl.u32 %v1743, 7
    %v1745 = vsub.s32 1, %v1744
    %v1746 = vrot.slane %v1518, %v1745
    %v1747 = vlaneseq
    %v1748 = vshrl.u32 %v1747, 7
    %v1749 = vsub.s32 2, %v1748
    %v1750 = vrot.slane %v1518, %v1749
    %v1751 = vlaneseq
    %v1752 = vshrl.u32 %v1751, 7
    %v1753 = vsub.s32 3, %v1752
    %v1754 = vrot.slane %v1518, %v1753
    %v1755 = vlaneseq
    %v1756 = vshrl.u32 %v1755, 7
    %v1757 = vsub.s32 4, %v1756
    %v1758 = vrot.slane %v1518, %v1757
    %v1759 = vlaneseq
    %v1760 = vshrl.u32 %v1759, 7
    %v1761 = vsub.s32 5, %v1760
    %v1762 = vrot.slane %v1518, %v1761
    %v1763 = vlaneseq
    %v1764 = vshrl.u32 %v1763, 7
    %v1765 = vsub.s32 6, %v1764
    %v1766 = vrot.slane %v1518, %v1765
    %v1767 = vlaneseq
    %v1768 = vshrl.u32 %v1767, 7
    %v1769 = vsub.s32 7, %v1768
    %v1770 = vrot.slane %v1518, %v1769
    %v1771 = vlaneseq
    %v1772 = vshrl.u32 %v1771, 7
    %v1773 = vsub.s32 0, %v1772
    %v1774 = vrot.slane %v1519, %v1773
    %v1775 = vlaneseq
    %v1776 = vshrl.u32 %v1775, 7
    %v1777 = vsub.s32 1, %v1776
    %v1778 = vrot.slane %v1519, %v1777
    %v1779 = vlaneseq
    %v1780 = vshrl.u32 %v1779, 7
    %v1781 = vsub.s32 2, %v1780
    %v1782 = vrot.slane %v1519, %v1781
    %v1783 = vlaneseq
    %v1784 = vshrl.u32 %v1783, 7
    %v1785 = vsub.s32 3, %v1784
    %v1786 = vrot.slane %v1519, %v1785
    %v1787 = vlaneseq
    %v1788 = vshrl.u32 %v1787, 7
    %v1789 = vsub.s32 4, %v1788
    %v1790 = vrot.slane %v1519, %v1789
    %v1791 = vlaneseq
    %v1792 = vshrl.u32 %v1791, 7
    %v1793 = vsub.s32 5, %v1792
    %v1794 = vrot.slane %v1519, %v1793
    %v1795 = vlaneseq
    %v1796 = vshrl.u32 %v1795, 7
    %v1797 = vsub.s32 6, %v1796
    %v1798 = vrot.slane %v1519, %v1797
    %v1799 = vlaneseq
    %v1800 = vshrl.u32 %v1799, 7
    %v1801 = vsub.s32 7, %v1800
    %v1802 = vrot.slane %v1519, %v1801
    %v1803 = vlaneseq
    %v1804 = vshrl.u32 %v1803, 7
    %v1805 = vsub.s32 0, %v1804
    %v1806 = vrot.slane %v1520, %v1805
    %v1807 = vlaneseq
    %v1808 = vshrl.u32 %v1807, 7
    %v1809 = vsub.s32 1, %v1808
    %v1810 = vrot.slane %v1520, %v1809
    %v1811 = vlaneseq
    %v1812 = vshrl.u32 %v1811, 7
    %v1813 = vsub.s32 2, %v1812
    %v1814 = vrot.slane %v1520, %v1813
    %v1815 = vlaneseq
    %v1816 = vshrl.u32 %v1815, 7
    %v1817 = vsub.s32 3, %v1816
    %v1818 = vrot.slane %v1520, %v1817
    %v1819 = vlaneseq
    %v1820 = vshrl.u32 %v1819, 7
    %v1821 = vsub.s32 4, %v1820
    %v1822 = vrot.slane %v1520, %v1821
    %v1823 = vlaneseq
    %v1824 = vshrl.u32 %v1823, 7
    %v1825 = vsub.s32 5, %v1824
    %v1826 = vrot.slane %v1520, %v1825
    %v1827 = vlaneseq
    %v1828 = vshrl.u32 %v1827, 7
    %v1829 = vsub.s32 6, %v1828
    %v1830 = vrot.slane %v1520, %v1829
    %v1831 = vlaneseq
    %v1832 = vshrl.u32 %v1831, 7
    %v1833 = vsub.s32 7, %v1832
    %v1834 = vrot.slane %v1520, %v1833
    %v1835 = vlaneseq
    %v1836 = vshrl.u32 %v1835, 7
    %v1837 = vsub.s32 0, %v1836
    %v1838 = vrot.slane %v1521, %v1837
    %v1839 = vlaneseq
    %v1840 = vshrl.u32 %v1839, 7
    %v1841 = vsub.s32 1, %v1840
    %v1842 = vrot.slane %v1521, %v1841
    %v1843 = vlaneseq
    %v1844 = vshrl.u32 %v1843, 7
    %v1845 = vsub.s32 2, %v1844
    %v1846 = vrot.slane %v1521, %v1845
    %v1847 = vlaneseq
    %v1848 = vshrl.u32 %v1847, 7
    %v1849 = vsub.s32 3, %v1848
    %v1850 = vrot.slane %v1521, %v1849
    %v1851 = vlaneseq
    %v1852 = vshrl.u32 %v1851, 7
    %v1853 = vsub.s32 4, %v1852
    %v1854 = vrot.slane %v1521, %v1853
    %v1855 = vlaneseq
    %v1856 = vshrl.u32 %v1855, 7
    %v1857 = vsub.s32 5, %v1856
    %v1858 = vrot.slane %v1521, %v1857
    %v1859 = vlaneseq
    %v1860 = vshrl.u32 %v1859, 7
    %v1861 = vsub.s32 6, %v1860
    %v1862 = vrot.slane %v1521, %v1861
    %v1863 = vlaneseq
    %v1864 = vshrl.u32 %v1863, 7
    %v1865 = vsub.s32 7, %v1864
    %v1866 = vrot.slane %v1521, %v1865
    %v1867 = vlaneseq
    %v1868 = vshrl.u32 %v1867, 7
    %v1869 = vsub.s32 0, %v1868
    %v1870 = vrot.slane %v1522, %v1869
    %v1871 = vlaneseq
    %v1872 = vshrl.u32 %v1871, 7
    %v1873 = vsub.s32 1, %v1872
    %v1874 = vrot.slane %v1522, %v1873
    %v1875 = vlaneseq
    %v1876 = vshrl.u32 %v1875, 7
    %v1877 = vsub.s32 2, %v1876
    %v1878 = vrot.slane %v1522, %v1877
    %v1879 = vlaneseq
    %v1880 = vshrl.u32 %v1879, 7
    %v1881 = vsub.s32 3, %v1880
    %v1882 = vrot.slane %v1522, %v1881
    %v1883 = vlaneseq
    %v1884 = vshrl.u32 %v1883, 7
    %v1885 = vsub.s32 4, %v1884
    %v1886 = vrot.slane %v1522, %v1885
    %v1887 = vlaneseq
    %v1888 = vshrl.u32 %v1887, 7
    %v1889 = vsub.s32 5, %v1888
    %v1890 = vrot.slane %v1522, %v1889
    %v1891 = vlaneseq
    %v1892 = vshrl.u32 %v1891, 7
    %v1893 = vsub.s32 6, %v1892
    %v1894 = vrot.slane %v1522, %v1893
    %v1895 = vlaneseq
    %v1896 = vshrl.u32 %v1895, 7
    %v1897 = vsub.s32 7, %v1896
    %v1898 = vrot.slane %v1522, %v1897
    %v1899 = vlaneseq
    %v1900 = vshrl.u32 %v1899, 7
    %v1901 = vsub.s32 0, %v1900
    %v1902 = vrot.slane %v1523, %v1901
    %v1903 = vlaneseq
    %v1904 = vshrl.u32 %v1903, 7
    %v1905 = vsub.s32 1, %v1904
    %v1906 = vrot.slane %v1523, %v1905
    %v1907 = vlaneseq
    %v1908 = vshrl.u32 %v1907, 7
    %v1909 = vsub.s32 2, %v1908
    %v1910 = vrot.slane %v1523, %v1909
    %v1911 = vlaneseq
    %v1912 = vshrl.u32 %v1911, 7
    %v1913 = vsub.s32 3, %v1912
    %v1914 = vrot.slane %v1523, %v1913
    %v1915 = vlaneseq
    %v1916 = vshrl.u32 %v1915, 7
    %v1917 = vsub.s32 4, %v1916
    %v1918 = vrot.slane %v1523, %v1917
    %v1919 = vlaneseq
    %v1920 = vshrl.u32 %v1919, 7
    %v1921 = vsub.s32 5, %v1920
    %v1922 = vrot.slane %v1523, %v1921
    %v1923 = vlaneseq
    %v1924 = vshrl.u32 %v1923, 7
    %v1925 = vsub.s32 6, %v1924
    %v1926 = vrot.slane %v1523, %v1925
    %v1927 = vlaneseq
    %v1928 = vshrl.u32 %v1927, 7
    %v1929 = vsub.s32 7, %v1928
    %v1930 = vrot.slane %v1523, %v1929
    %v1931 = vlaneseq
    %v1932 = vshrl.u32 %v1931, 7
    %v1933 = vsub.s32 0, %v1932
    %v1934 = vrot.slane %v1524, %v1933
    %v1935 = vlaneseq
    %v1936 = vshrl.u32 %v1935, 7
    %v1937 = vsub.s32 1, %v1936
    %v1938 = vrot.slane %v1524, %v1937
    %v1939 = vlaneseq
    %v1940 = vshrl.u32 %v1939, 7
    %v1941 = vsub.s32 2, %v1940
    %v1942 = vrot.slane %v1524, %v1941
    %v1943 = vlaneseq
    %v1944 = vshrl.u32 %v1943, 7
    %v1945 = vsub.s32 3, %v1944
    %v1946 = vrot.slane %v1524, %v1945
    %v1947 = vlaneseq
    %v1948 = vshrl.u32 %v1947, 7
    %v1949 = vsub.s32 4, %v1948
    %v1950 = vrot.slane %v1524, %v1949
    %v1951 = vlaneseq
    %v1952 = vshrl.u32 %v1951, 7
    %v1953 = vsub.s32 5, %v1952
    %v1954 = vrot.slane %v1524, %v1953
    %v1955 = vlaneseq
    %v1956 = vshrl.u32 %v1955, 7
    %v1957 = vsub.s32 6, %v1956
    %v1958 = vrot.slane %v1524, %v1957
    %v1959 = vlaneseq
    %v1960 = vshrl.u32 %v1959, 7
    %v1961 = vsub.s32 7, %v1960
    %v1962 = vrot.slane %v1524, %v1961
    %v1963 = vlaneseq
    %v1964 = vshrl.u32 %v1963, 7
    %v1965 = vsub.s32 0, %v1964
    %v1966 = vrot.slane %v1525, %v1965
    %v1967 = vlaneseq
    %v1968 = vshrl.u32 %v1967, 7
    %v1969 = vsub.s32 1, %v1968
    %v1970 = vrot.slane %v1525, %v1969
    %v1971 = vlaneseq
    %v1972 = vshrl.u32 %v1971, 7
    %v1973 = vsub.s32 2, %v1972
    %v1974 = vrot.slane %v1525, %v1973
    %v1975 = vlaneseq
    %v1976 = vshrl.u32 %v1975, 7
    %v1977 = vsub.s32 3, %v1976
    %v1978 = vrot.slane %v1525, %v1977
    %v1979 = vlaneseq
    %v1980 = vshrl.u32 %v1979, 7
    %v1981 = vsub.s32 4, %v1980
    %v1982 = vrot.slane %v1525, %v1981
    %v1983 = vlaneseq
    %v1984 = vshrl.u32 %v1983, 7
    %v1985 = vsub.s32 5, %v1984
    %v1986 = vrot.slane %v1525, %v1985
    %v1987 = vlaneseq
    %v1988 = vshrl.u32 %v1987, 7
    %v1989 = vsub.s32 6, %v1988
    %v1990 = vrot.slane %v1525, %v1989
    %v1991 = vlaneseq
    %v1992 = vshrl.u32 %v1991, 7
    %v1993 = vsub.s32 7, %v1992
    %v1994 = vrot.slane %v1525, %v1993
    %v1995 = vlaneseq
    %v1996 = vshrl.u32 %v1995, 7
    %v1997 = vsub.s32 0, %v1996
    %v1998 = vrot.slane %v1526, %v1997
    %v1999 = vlaneseq
    %v2000 = vshrl.u32 %v1999, 7
    %v2001 = vsub.s32 1, %v2000
    %v2002 = vrot.slane %v1526, %v2001
    %v2003 = vlaneseq
    %v2004 = vshrl.u32 %v2003, 7
    %v2005 = vsub.s32 2, %v2004
    %v2006 = vrot.slane %v1526, %v2005
    %v2007 = vlaneseq
    %v2008 = vshrl.u32 %v2007, 7
    %v2009 = vsub.s32 3, %v2008
    %v2010 = vrot.slane %v1526, %v2009
    %v2011 = vlaneseq
    %v2012 = vshrl.u32 %v2011, 7
    %v2013 = vsub.s32 4, %v2012
    %v2014 = vrot.slane %v1526, %v2013
    %v2015 = vlaneseq
    %v2016 = vshrl.u32 %v2015, 7
    %v2017 = vsub.s32 5, %v2016
    %v2018 = vrot.slane %v1526, %v2017
    %v2019 = vlaneseq
    %v2020 = vshrl.u32 %v2019, 7
    %v2021 = vsub.s32 6, %v2020
    %v2022 = vrot.slane %v1526, %v2021
    %v2023 = vlaneseq
    %v2024 = vshrl.u32 %v2023, 7
    %v2025 = vsub.s32 7, %v2024
    %v2026 = vrot.slane %v1526, %v2025
    %v2027 = vlaneseq
    %v2028 = vshrl.u32 %v2027, 7
    %v2029 = vsub.s32 0, %v2028
    %v2030 = vrot.slane %v1527, %v2029
    %v2031 = vlaneseq
    %v2032 = vshrl.u32 %v2031, 7
    %v2033 = vsub.s32 1, %v2032
    %v2034 = vrot.slane %v1527, %v2033
    %v2035 = vlaneseq
    %v2036 = vshrl.u32 %v2035, 7
    %v2037 = vsub.s32 2, %v2036
    %v2038 = vrot.slane %v1527, %v2037
    %v2039 = vlaneseq
    %v2040 = vshrl.u32 %v2039, 7
    %v2041 = vsub.s32 3, %v2040
    %v2042 = vrot.slane %v1527, %v2041
    %v2043 = vlaneseq
    %v2044 = vshrl.u32 %v2043, 7
    %v2045 = vsub.s32 4, %v2044
    %v2046 = vrot.slane %v1527, %v2045
    %v2047 = vlaneseq
    %v2048 = vshrl.u32 %v2047, 7
    %v2049 = vsub.s32 5, %v2048
    %v2050 = vrot.slane %v1527, %v2049
    %v2051 = vlaneseq
    %v2052 = vshrl.u32 %v2051, 7
    %v2053 = vsub.s32 6, %v2052
    %v2054 = vrot.slane %v1527, %v2053
    %v2055 = vlaneseq
    %v2056 = vshrl.u32 %v2055, 7
    %v2057 = vsub.s32 7, %v2056
    %v2058 = vrot.slane %v1527, %v2057
    %v2059 = vlaneseq
    %v2060 = vshrl.u32 %v2059, 7
    %v2061 = vsub.s32 0, %v2060
    %v2062 = vrot.slane %v1528, %v2061
    %v2063 = vlaneseq
    %v2064 = vshrl.u32 %v2063, 7
    %v2065 = vsub.s32 1, %v2064
    %v2066 = vrot.slane %v1528, %v2065
    %v2067 = vlaneseq
    %v2068 = vshrl.u32 %v2067, 7
    %v2069 = vsub.s32 2, %v2068
    %v2070 = vrot.slane %v1528, %v2069
    %v2071 = vlaneseq
    %v2072 = vshrl.u32 %v2071, 7
    %v2073 = vsub.s32 3, %v2072
    %v2074 = vrot.slane %v1528, %v2073
    %v2075 = vlaneseq
    %v2076 = vshrl.u32 %v2075, 7
    %v2077 = vsub.s32 4, %v2076
    %v2078 = vrot.slane %v1528, %v2077
    %v2079 = vlaneseq
    %v2080 = vshrl.u32 %v2079, 7
    %v2081 = vsub.s32 5, %v2080
    %v2082 = vrot.slane %v1528, %v2081
    %v2083 = vlaneseq
    %v2084 = vshrl.u32 %v2083, 7
    %v2085 = vsub.s32 6, %v2084
    %v2086 = vrot.slane %v1528, %v2085
    %v2087 = vlaneseq
    %v2088 = vshrl.u32 %v2087, 7
    %v2089 = vsub.s32 7, %v2088
    %v2090 = vrot.slane %v1528, %v2089
    %v2091 = vlaneseq
    %v2092 = vshrl.u32 %v2091, 7
    %v2093 = vsub.s32 0, %v2092
    %v2094 = vrot.slane %v1529, %v2093
    %v2095 = vlaneseq
    %v2096 = vshrl.u32 %v2095, 7
    %v2097 = vsub.s32 1, %v2096
    %v2098 = vrot.slane %v1529, %v2097
    %v2099 = vlaneseq
    %v2100 = vshrl.u32 %v2099, 7
    %v2101 = vsub.s32 2, %v2100
    %v2102 = vrot.slane %v1529, %v2101
    %v2103 = vlaneseq
    %v2104 = vshrl.u32 %v2103, 7
    %v2105 = vsub.s32 3, %v2104
    %v2106 = vrot.slane %v1529, %v2105
    %v2107 = vlaneseq
    %v2108 = vshrl.u32 %v2107, 7
    %v2109 = vsub.s32 4, %v2108
    %v2110 = vrot.slane %v1529, %v2109
    %v2111 = vlaneseq
    %v2112 = vshrl.u32 %v2111, 7
    %v2113 = vsub.s32 5, %v2112
    %v2114 = vrot.slane %v1529, %v2113
    %v2115 = vlaneseq
    %v2116 = vshrl.u32 %v2115, 7
    %v2117 = vsub.s32 6, %v2116
    %v2118 = vrot.slane %v1529, %v2117
    %v2119 = vlaneseq
    %v2120 = vshrl.u32 %v2119, 7
    %v2121 = vsub.s32 7, %v2120
    %v2122 = vrot.slane %v1529, %v2121
    %v2123 = vlaneseq
    %v2124 = vshrl.u32 %v2123, 7
    %v2125 = vsub.s32 0, %v2124
    %v2126 = vrot.slane %v1530, %v2125
    %v2127 = vlaneseq
    %v2128 = vshrl.u32 %v2127, 7
    %v2129 = vsub.s32 1, %v2128
    %v2130 = vrot.slane %v1530, %v2129
    %v2131 = vlaneseq
    %v2132 = vshrl.u32 %v2131, 7
    %v2133 = vsub.s32 2, %v2132
    %v2134 = vrot.slane %v1530, %v2133
    %v2135 = vlaneseq
    %v2136 = vshrl.u32 %v2135, 7
    %v2137 = vsub.s32 3, %v2136
    %v2138 = vrot.slane %v1530, %v2137
    %v2139 = vlaneseq
    %v2140 = vshrl.u32 %v2139, 7
    %v2141 = vsub.s32 4, %v2140
    %v2142 = vrot.slane %v1530, %v2141
    %v2143 = vlaneseq
    %v2144 = vshrl.u32 %v2143, 7
    %v2145 = vsub.s32 5, %v2144
    %v2146 = vrot.slane %v1530, %v2145
    %v2147 = vlaneseq
    %v2148 = vshrl.u32 %v2147, 7
    %v2149 = vsub.s32 6, %v2148
    %v2150 = vrot.slane %v1530, %v2149
    %v2151 = vlaneseq
    %v2152 = vshrl.u32 %v2151, 7
    %v2153 = vsub.s32 7, %v2152
    %v2154 = vrot.slane %v1530, %v2153
    %v2155 = vlaneseq
    %v2156 = vshrl.u32 %v2155, 7
    %v2157 = vsub.s32 0, %v2156
    %v2158 = vrot.slane %v1531, %v2157
    %v2159 = vlaneseq
    %v2160 = vshrl.u32 %v2159, 7
    %v2161 = vsub.s32 1, %v2160
    %v2162 = vrot.slane %v1531, %v2161
    %v2163 = vlaneseq
    %v2164 = vshrl.u32 %v2163, 7
    %v2165 = vsub.s32 2, %v2164
    %v2166 = vrot.slane %v1531, %v2165
    %v2167 = vlaneseq
    %v2168 = vshrl.u32 %v2167, 7
    %v2169 = vsub.s32 3, %v2168
    %v2170 = vrot.slane %v1531, %v2169
    %v2171 = vlaneseq
    %v2172 = vshrl.u32 %v2171, 7
    %v2173 = vsub.s32 4, %v2172
    %v2174 = vrot.slane %v1531, %v2173
    %v2175 = vlaneseq
    %v2176 = vshrl.u32 %v2175, 7
    %v2177 = vsub.s32 5, %v2176
    %v2178 = vrot.slane %v1531, %v2177
    %v2179 = vlaneseq
    %v2180 = vshrl.u32 %v2179, 7
    %v2181 = vsub.s32 6, %v2180
    %v2182 = vrot.slane %v1531, %v2181
    %v2183 = vlaneseq
    %v2184 = vshrl.u32 %v2183, 7
    %v2185 = vsub.s32 7, %v2184
    %v2186 = vrot.slane %v1531, %v2185
    %v2187 = vlaneseq
    %v2188 = vshrl.u32 %v2187, 7
    %v2189 = vsub.s32 0, %v2188
    %v2190 = vrot.slane %v1532, %v2189
    %v2191 = vlaneseq
    %v2192 = vshrl.u32 %v2191, 7
    %v2193 = vsub.s32 1, %v2192
    %v2194 = vrot.slane %v1532, %v2193
    %v2195 = vlaneseq
    %v2196 = vshrl.u32 %v2195, 7
    %v2197 = vsub.s32 2, %v2196
    %v2198 = vrot.slane %v1532, %v2197
    %v2199 = vlaneseq
    %v2200 = vshrl.u32 %v2199, 7
    %v2201 = vsub.s32 3, %v2200
    %v2202 = vrot.slane %v1532, %v2201
    %v2203 = vlaneseq
    %v2204 = vshrl.u32 %v2203, 7
    %v2205 = vsub.s32 4, %v2204
    %v2206 = vrot.slane %v1532, %v2205
    %v2207 = vlaneseq
    %v2208 = vshrl.u32 %v2207, 7
    %v2209 = vsub.s32 5, %v2208
    %v2210 = vrot.slane %v1532, %v2209
    %v2211 = vlaneseq
    %v2212 = vshrl.u32 %v2211, 7
    %v2213 = vsub.s32 6, %v2212
    %v2214 = vrot.slane %v1532, %v2213
    %v2215 = vlaneseq
    %v2216 = vshrl.u32 %v2215, 7
    %v2217 = vsub.s32 7, %v2216
    %v2218 = vrot.slane %v1532, %v2217
    %v2219 = vlaneseq
    %v2220 = vshrl.u32 %v2219, 7
    %v2221 = vsub.s32 0, %v2220
    %v2222 = vrot.slane %v1533, %v2221
    %v2223 = vlaneseq
    %v2224 = vshrl.u32 %v2223, 7
    %v2225 = vsub.s32 1, %v2224
    %v2226 = vrot.slane %v1533, %v2225
    %v2227 = vlaneseq
    %v2228 = vshrl.u32 %v2227, 7
    %v2229 = vsub.s32 2, %v2228
    %v2230 = vrot.slane %v1533, %v2229
    %v2231 = vlaneseq
    %v2232 = vshrl.u32 %v2231, 7
    %v2233 = vsub.s32 3, %v2232
    %v2234 = vrot.slane %v1533, %v2233
    %v2235 = vlaneseq
    %v2236 = vshrl.u32 %v2235, 7
    %v2237 = vsub.s32 4, %v2236
    %v2238 = vrot.slane %v1533, %v2237
    %v2239 = vlaneseq
    %v2240 = vshrl.u32 %v2239, 7
    %v2241 = vsub.s32 5, %v2240
    %v2242 = vrot.slane %v1533, %v2241
    %v2243 = vlaneseq
    %v2244 = vshrl.u32 %v2243, 7
    %v2245 = vsub.s32 6, %v2244
    %v2246 = vrot.slane %v1533, %v2245
    %v2247 = vlaneseq
    %v2248 = vshrl.u32 %v2247, 7
    %v2249 = vsub.s32 7, %v2248
    %v2250 = vrot.slane %v1533, %v2249
    %v2251 = vlaneseq
    %v2252 = vshrl.u32 %v2251, 7
    %v2253 = vsub.s32 0, %v2252
    %v2254 = vrot.slane %v1534, %v2253
    %v2255 = vlaneseq
    %v2256 = vshrl.u32 %v2255, 7
    %v2257 = vsub.s32 1, %v2256
    %v2258 = vrot.slane %v1534, %v2257
    %v2259 = vlaneseq
    %v2260 = vshrl.u32 %v2259, 7
    %v2261 = vsub.s32 2, %v2260
    %v2262 = vrot.slane %v1534, %v2261
    %v2263 = vlaneseq
    %v2264 = vshrl.u32 %v2263, 7
    %v2265 = vsub.s32 3, %v2264
    %v2266 = vrot.slane %v1534, %v2265
    %v2267 = vlaneseq
    %v2268 = vshrl.u32 %v2267, 7
    %v2269 = vsub.s32 4, %v2268
    %v2270 = vrot.slane %v1534, %v2269
    %v2271 = vlaneseq
    %v2272 = vshrl.u32 %v2271, 7
    %v2273 = vsub.s32 5, %v2272
    %v2274 = vrot.slane %v1534, %v2273
    %v2275 = vlaneseq
    %v2276 = vshrl.u32 %v2275, 7
    %v2277 = vsub.s32 6, %v2276
    %v2278 = vrot.slane %v1534, %v2277
    %v2279 = vlaneseq
    %v2280 = vshrl.u32 %v2279, 7
    %v2281 = vsub.s32 7, %v2280
    %v2282 = vrot.slane %v1534, %v2281
    %v2283 = vlaneseq
    %v2284 = vshrl.u32 %v2283, 7
    %v2285 = vsub.s32 0, %v2284
    %v2286 = vrot.slane %v1535, %v2285
    %v2287 = vlaneseq
    %v2288 = vshrl.u32 %v2287, 7
    %v2289 = vsub.s32 1, %v2288
    %v2290 = vrot.slane %v1535, %v2289
    %v2291 = vlaneseq
    %v2292 = vshrl.u32 %v2291, 7
    %v2293 = vsub.s32 2, %v2292
    %v2294 = vrot.slane %v1535, %v2293
    %v2295 = vlaneseq
    %v2296 = vshrl.u32 %v2295, 7
    %v2297 = vsub.s32 3, %v2296
    %v2298 = vrot.slane %v1535, %v2297
    %v2299 = vlaneseq
    %v2300 = vshrl.u32 %v2299, 7
    %v2301 = vsub.s32 4, %v2300
    %v2302 = vrot.slane %v1535, %v2301
    %v2303 = vlaneseq
    %v2304 = vshrl.u32 %v2303, 7
    %v2305 = vsub.s32 5, %v2304
    %v2306 = vrot.slane %v1535, %v2305
    %v2307 = vlaneseq
    %v2308 = vshrl.u32 %v2307, 7
    %v2309 = vsub.s32 6, %v2308
    %v2310 = vrot.slane %v1535, %v2309
    %v2311 = vlaneseq
    %v2312 = vshrl.u32 %v2311, 7
    %v2313 = vsub.s32 7, %v2312
    %v2314 = vrot.slane %v1535, %v2313
    %v2315 = vlaneseq
    %v2316 = vshrl.u32 %v2315, 7
    %v2317 = vsub.s32 0, %v2316
    %v2318 = vrot.slane %v1536, %v2317
    %v2319 = vlaneseq
    %v2320 = vshrl.u32 %v2319, 7
    %v2321 = vsub.s32 1, %v2320
    %v2322 = vrot.slane %v1536, %v2321
    %v2323 = vlaneseq
    %v2324 = vshrl.u32 %v2323, 7
    %v2325 = vsub.s32 2, %v2324
    %v2326 = vrot.slane %v1536, %v2325
    %v2327 = vlaneseq
    %v2328 = vshrl.u32 %v2327, 7
    %v2329 = vsub.s32 3, %v2328
    %v2330 = vrot.slane %v1536, %v2329
    %v2331 = vlaneseq
    %v2332 = vshrl.u32 %v2331, 7
    %v2333 = vsub.s32 4, %v2332
    %v2334 = vrot.slane %v1536, %v2333
    %v2335 = vlaneseq
    %v2336 = vshrl.u32 %v2335, 7
    %v2337 = vsub.s32 5, %v2336
    %v2338 = vrot.slane %v1536, %v2337
    %v2339 = vlaneseq
    %v2340 = vshrl.u32 %v2339, 7
    %v2341 = vsub.s32 6, %v2340
    %v2342 = vrot.slane %v1536, %v2341
    %v2343 = vlaneseq
    %v2344 = vshrl.u32 %v2343, 7
    %v2345 = vsub.s32 7, %v2344
    %v2346 = vrot.slane %v1536, %v2345
    %v2347 = vlaneseq
    %v2348 = vshrl.u32 %v2347, 7
    %v2349 = vsub.s32 0, %v2348
    %v2350 = vrot.slane %v1537, %v2349
    %v2351 = vlaneseq
    %v2352 = vshrl.u32 %v2351, 7
    %v2353 = vsub.s32 1, %v2352
    %v2354 = vrot.slane %v1537, %v2353
    %v2355 = vlaneseq
    %v2356 = vshrl.u32 %v2355, 7
    %v2357 = vsub.s32 2, %v2356
    %v2358 = vrot.slane %v1537, %v2357
    %v2359 = vlaneseq
    %v2360 = vshrl.u32 %v2359, 7
    %v2361 = vsub.s32 3, %v2360
    %v2362 = vrot.slane %v1537, %v2361
    %v2363 = vlaneseq
    %v2364 = vshrl.u32 %v2363, 7
    %v2365 = vsub.s32 4, %v2364
    %v2366 = vrot.slane %v1537, %v2365
    %v2367 = vlaneseq
    %v2368 = vshrl.u32 %v2367, 7
    %v2369 = vsub.s32 5, %v2368
    %v2370 = vrot.slane %v1537, %v2369
    %v2371 = vlaneseq
    %v2372 = vshrl.u32 %v2371, 7
    %v2373 = vsub.s32 6, %v2372
    %v2374 = vrot.slane %v1537, %v2373
    %v2375 = vlaneseq
    %v2376 = vshrl.u32 %v2375, 7
    %v2377 = vsub.s32 7, %v2376
    %v2378 = vrot.slane %v1537, %v2377
    %v2379 = vlaneseq
    %v2380 = vshrl.u32 %v2379, 7
    %v2381 = vsub.s32 0, %v2380
    %v2382 = vrot.slane %v1538, %v2381
    %v2383 = vlaneseq
    %v2384 = vshrl.u32 %v2383, 7
    %v2385 = vsub.s32 1, %v2384
    %v2386 = vrot.slane %v1538, %v2385
    %v2387 = vlaneseq
    %v2388 = vshrl.u32 %v2387, 7
    %v2389 = vsub.s32 2, %v2388
    %v2390 = vrot.slane %v1538, %v2389
    %v2391 = vlaneseq
    %v2392 = vshrl.u32 %v2391, 7
    %v2393 = vsub.s32 3, %v2392
    %v2394 = vrot.slane %v1538, %v2393
    %v2395 = vlaneseq
    %v2396 = vshrl.u32 %v2395, 7
    %v2397 = vsub.s32 4, %v2396
    %v2398 = vrot.slane %v1538, %v2397
    %v2399 = vlaneseq
    %v2400 = vshrl.u32 %v2399, 7
    %v2401 = vsub.s32 5, %v2400
    %v2402 = vrot.slane %v1538, %v2401
    %v2403 = vlaneseq
    %v2404 = vshrl.u32 %v2403, 7
    %v2405 = vsub.s32 6, %v2404
    %v2406 = vrot.slane %v1538, %v2405
    %v2407 = vlaneseq
    %v2408 = vshrl.u32 %v2407, 7
    %v2409 = vsub.s32 7, %v2408
    %v2410 = vrot.slane %v1538, %v2409
    %v2411 = vlaneseq
    %v2412 = vshrl.u32 %v2411, 7
    %v2413 = vsub.s32 0, %v2412
    %v2414 = vrot.slane %v1539, %v2413
    %v2415 = vlaneseq
    %v2416 = vshrl.u32 %v2415, 7
    %v2417 = vsub.s32 1, %v2416
    %v2418 = vrot.slane %v1539, %v2417
    %v2419 = vlaneseq
    %v2420 = vshrl.u32 %v2419, 7
    %v2421 = vsub.s32 2, %v2420
    %v2422 = vrot.slane %v1539, %v2421
    %v2423 = vlaneseq
    %v2424 = vshrl.u32 %v2423, 7
    %v2425 = vsub.s32 3, %v2424
    %v2426 = vrot.slane %v1539, %v2425
    %v2427 = vlaneseq
    %v2428 = vshrl.u32 %v2427, 7
    %v2429 = vsub.s32 4, %v2428
    %v2430 = vrot.slane %v1539, %v2429
    %v2431 = vlaneseq
    %v2432 = vshrl.u32 %v2431, 7
    %v2433 = vsub.s32 5, %v2432
    %v2434 = vrot.slane %v1539, %v2433
    %v2435 = vlaneseq
    %v2436 = vshrl.u32 %v2435, 7
    %v2437 = vsub.s32 6, %v2436
    %v2438 = vrot.slane %v1539, %v2437
    %v2439 = vlaneseq
    %v2440 = vshrl.u32 %v2439, 7
    %v2441 = vsub.s32 7, %v2440
    %v2442 = vrot.slane %v1539, %v2441
    %v2443 = vlaneseq
    %v2444 = vshrl.u32 %v2443, 7
    %v2445 = vsub.s32 0, %v2444
    %v2446 = vrot.slane %v1540, %v2445
    %v2447 = vlaneseq
    %v2448 = vshrl.u32 %v2447, 7
    %v2449 = vsub.s32 1, %v2448
    %v2450 = vrot.slane %v1540, %v2449
    %v2451 = vlaneseq
    %v2452 = vshrl.u32 %v2451, 7
    %v2453 = vsub.s32 2, %v2452
    %v2454 = vrot.slane %v1540, %v2453
    %v2455 = vlaneseq
    %v2456 = vshrl.u32 %v2455, 7
    %v2457 = vsub.s32 3, %v2456
    %v2458 = vrot.slane %v1540, %v2457
    %v2459 = vlaneseq
    %v2460 = vshrl.u32 %v2459, 7
    %v2461 = vsub.s32 4, %v2460
    %v2462 = vrot.slane %v1540, %v2461
    %v2463 = vlaneseq
    %v2464 = vshrl.u32 %v2463, 7
    %v2465 = vsub.s32 5, %v2464
    %v2466 = vrot.slane %v1540, %v2465
    %v2467 = vlaneseq
    %v2468 = vshrl.u32 %v2467, 7
    %v2469 = vsub.s32 6, %v2468
    %v2470 = vrot.slane %v1540, %v2469
    %v2471 = vlaneseq
    %v2472 = vshrl.u32 %v2471, 7
    %v2473 = vsub.s32 7, %v2472
    %v2474 = vrot.slane %v1540, %v2473
    %v2475 = vlaneseq
    %v2476 = vshrl.u32 %v2475, 7
    %v2477 = vsub.s32 0, %v2476
    %v2478 = vrot.slane %v1541, %v2477
    %v2479 = vlaneseq
    %v2480 = vshrl.u32 %v2479, 7
    %v2481 = vsub.s32 1, %v2480
    %v2482 = vrot.slane %v1541, %v2481
    %v2483 = vlaneseq
    %v2484 = vshrl.u32 %v2483, 7
    %v2485 = vsub.s32 2, %v2484
    %v2486 = vrot.slane %v1541, %v2485
    %v2487 = vlaneseq
    %v2488 = vshrl.u32 %v2487, 7
    %v2489 = vsub.s32 3, %v2488
    %v2490 = vrot.slane %v1541, %v2489
    %v2491 = vlaneseq
    %v2492 = vshrl.u32 %v2491, 7
    %v2493 = vsub.s32 4, %v2492
    %v2494 = vrot.slane %v1541, %v2493
    %v2495 = vlaneseq
    %v2496 = vshrl.u32 %v2495, 7
    %v2497 = vsub.s32 5, %v2496
    %v2498 = vrot.slane %v1541, %v2497
    %v2499 = vlaneseq
    %v2500 = vshrl.u32 %v2499, 7
    %v2501 = vsub.s32 6, %v2500
    %v2502 = vrot.slane %v1541, %v2501
    %v2503 = vlaneseq
    %v2504 = vshrl.u32 %v2503, 7
    %v2505 = vsub.s32 7, %v2504
    %v2506 = vrot.slane %v1541, %v2505
    %v2507 = vlaneseq
    %v2508 = vshrl.u32 %v2507, 7
    %v2509 = vsub.s32 0, %v2508
    %v2510 = vrot.slane %v1542, %v2509
    %v2511 = vlaneseq
    %v2512 = vshrl.u32 %v2511, 7
    %v2513 = vsub.s32 1, %v2512
    %v2514 = vrot.slane %v1542, %v2513
    %v2515 = vlaneseq
    %v2516 = vshrl.u32 %v2515, 7
    %v2517 = vsub.s32 2, %v2516
    %v2518 = vrot.slane %v1542, %v2517
    %v2519 = vlaneseq
    %v2520 = vshrl.u32 %v2519, 7
    %v2521 = vsub.s32 3, %v2520
    %v2522 = vrot.slane %v1542, %v2521
    %v2523 = vlaneseq
    %v2524 = vshrl.u32 %v2523, 7
    %v2525 = vsub.s32 4, %v2524
    %v2526 = vrot.slane %v1542, %v2525
    %v2527 = vlaneseq
    %v2528 = vshrl.u32 %v2527, 7
    %v2529 = vsub.s32 5, %v2528
    %v2530 = vrot.slane %v1542, %v2529
    %v2531 = vlaneseq
    %v2532 = vshrl.u32 %v2531, 7
    %v2533 = vsub.s32 6, %v2532
    %v2534 = vrot.slane %v1542, %v2533
    %v2535 = vlaneseq
    %v2536 = vshrl.u32 %v2535, 7
    %v2537 = vsub.s32 7, %v2536
    %v2538 = vrot.slane %v1542, %v2537
    %v2539 = vlaneseq
    %v2540 = vshrl.u32 %v2539, 7
    %v2541 = vsub.s32 0, %v2540
    %v2542 = vrot.slane %v1543, %v2541
    %v2543 = vlaneseq
    %v2544 = vshrl.u32 %v2543, 7
    %v2545 = vsub.s32 1, %v2544
    %v2546 = vrot.slane %v1543, %v2545
    %v2547 = vlaneseq
    %v2548 = vshrl.u32 %v2547, 7
    %v2549 = vsub.s32 2, %v2548
    %v2550 = vrot.slane %v1543, %v2549
    %v2551 = vlaneseq
    %v2552 = vshrl.u32 %v2551, 7
    %v2553 = vsub.s32 3, %v2552
    %v2554 = vrot.slane %v1543, %v2553
    %v2555 = vlaneseq
    %v2556 = vshrl.u32 %v2555, 7
    %v2557 = vsub.s32 4, %v2556
    %v2558 = vrot.slane %v1543, %v2557
    %v2559 = vlaneseq
    %v2560 = vshrl.u32 %v2559, 7
    %v2561 = vsub.s32 5, %v2560
    %v2562 = vrot.slane %v1543, %v2561
    %v2563 = vlaneseq
    %v2564 = vshrl.u32 %v2563, 7
    %v2565 = vsub.s32 6, %v2564
    %v2566 = vrot.slane %v1543, %v2565
    %v2567 = vlaneseq
    %v2568 = vshrl.u32 %v2567, 7
    %v2569 = vsub.s32 7, %v2568
    %v2570 = vrot.slane %v1543, %v2569
    %v2571 = vlaneseq
    %v2572 = vshrl.u32 %v2571, 7
    %v2573 = vsub.s32 0, %v2572
    %v2574 = vrot.slane %v1544, %v2573
    %v2575 = vlaneseq
    %v2576 = vshrl.u32 %v2575, 7
    %v2577 = vsub.s32 1, %v2576
    %v2578 = vrot.slane %v1544, %v2577
    %v2579 = vlaneseq
    %v2580 = vshrl.u32 %v2579, 7
    %v2581 = vsub.s32 2, %v2580
    %v2582 = vrot.slane %v1544, %v2581
    %v2583 = vlaneseq
    %v2584 = vshrl.u32 %v2583, 7
    %v2585 = vsub.s32 3, %v2584
    %v2586 = vrot.slane %v1544, %v2585
    %v2587 = vlaneseq
    %v2588 = vshrl.u32 %v2587, 7
    %v2589 = vsub.s32 4, %v2588
    %v2590 = vrot.slane %v1544, %v2589
    %v2591 = vlaneseq
    %v2592 = vshrl.u32 %v2591, 7
    %v2593 = vsub.s32 5, %v2592
    %v2594 = vrot.slane %v1544, %v2593
    %v2595 = vlaneseq
    %v2596 = vshrl.u32 %v2595, 7
    %v2597 = vsub.s32 6, %v2596
    %v2598 = vrot.slane %v1544, %v2597
    %v2599 = vlaneseq
    %v2600 = vshrl.u32 %v2599, 7
    %v2601 = vsub.s32 7, %v2600
    %v2602 = vrot.slane %v1544, %v2601
    %v2603 = vlaneseq
    %v2604 = vshrl.u32 %v2603, 7
    %v2605 = vsub.s32 0, %v2604
    %v2606 = vrot.slane %v1545, %v2605
    %v2607 = vlaneseq
    %v2608 = vshrl.u32 %v2607, 7
    %v2609 = vsub.s32 1, %v2608
    %v2610 = vrot.slane %v1545, %v2609
    %v2611 = vlaneseq
    %v2612 = vshrl.u32 %v2611, 7
    %v2613 = vsub.s32 2, %v2612
    %v2614 = vrot.slane %v1545, %v2613
    %v2615 = vlaneseq
    %v2616 = vshrl.u32 %v2615, 7
    %v2617 = vsub.s32 3, %v2616
    %v2618 = vrot.slane %v1545, %v2617
    %v2619 = vlaneseq
    %v2620 = vshrl.u32 %v2619, 7
    %v2621 = vsub.s32 4, %v2620
    %v2622 = vrot.slane %v1545, %v2621
    %v2623 = vlaneseq
    %v2624 = vshrl.u32 %v2623, 7
    %v2625 = vsub.s32 5, %v2624
    %v2626 = vrot.slane %v1545, %v2625
    %v2627 = vlaneseq
    %v2628 = vshrl.u32 %v2627, 7
    %v2629 = vsub.s32 6, %v2628
    %v2630 = vrot.slane %v1545, %v2629
    %v2631 = vlaneseq
    %v2632 = vshrl.u32 %v2631, 7
    %v2633 = vsub.s32 7, %v2632
    %v2634 = vrot.slane %v1545, %v2633
    %v2635 = vlaneseq
    %v2636 = vshrl.u32 %v2635, 7
    %v2637 = vsub.s32 0, %v2636
    %v2638 = vrot.slane %v1546, %v2637
    %v2639 = vlaneseq
    %v2640 = vshrl.u32 %v2639, 7
    %v2641 = vsub.s32 1, %v2640
    %v2642 = vrot.slane %v1546, %v2641
    %v2643 = vlaneseq
    %v2644 = vshrl.u32 %v2643, 7
    %v2645 = vsub.s32 2, %v2644
    %v2646 = vrot.slane %v1546, %v2645
    %v2647 = vlaneseq
    %v2648 = vshrl.u32 %v2647, 7
    %v2649 = vsub.s32 3, %v2648
    %v2650 = vrot.slane %v1546, %v2649
    %v2651 = vlaneseq
    %v2652 = vshrl.u32 %v2651, 7
    %v2653 = vsub.s32 4, %v2652
    %v2654 = vrot.slane %v1546, %v2653
    %v2655 = vlaneseq
    %v2656 = vshrl.u32 %v2655, 7
    %v2657 = vsub.s32 5, %v2656
    %v2658 = vrot.slane %v1546, %v2657
    %v2659 = vlaneseq
    %v2660 = vshrl.u32 %v2659, 7
    %v2661 = vsub.s32 6, %v2660
    %v2662 = vrot.slane %v1546, %v2661
    %v2663 = vlaneseq
    %v2664 = vshrl.u32 %v2663, 7
    %v2665 = vsub.s32 7, %v2664
    %v2666 = vrot.slane %v1546, %v2665
    %v2667 = vlaneseq
    %v2668 = vshrl.u32 %v2667, 7
    %v2669 = vsub.s32 0, %v2668
    %v2670 = vrot.slane %v1547, %v2669
    %v2671 = vlaneseq
    %v2672 = vshrl.u32 %v2671, 7
    %v2673 = vsub.s32 1, %v2672
    %v2674 = vrot.slane %v1547, %v2673
    %v2675 = vlaneseq
    %v2676 = vshrl.u32 %v2675, 7
    %v2677 = vsub.s32 2, %v2676
    %v2678 = vrot.slane %v1547, %v2677
    %v2679 = vlaneseq
    %v2680 = vshrl.u32 %v2679, 7
    %v2681 = vsub.s32 3, %v2680
    %v2682 = vrot.slane %v1547, %v2681
    %v2683 = vlaneseq
    %v2684 = vshrl.u32 %v2683, 7
    %v2685 = vsub.s32 4, %v2684
    %v2686 = vrot.slane %v1547, %v2685
    %v2687 = vlaneseq
    %v2688 = vshrl.u32 %v2687, 7
    %v2689 = vsub.s32 5, %v2688
    %v2690 = vrot.slane %v1547, %v2689
    %v2691 = vlaneseq
    %v2692 = vshrl.u32 %v2691, 7
    %v2693 = vsub.s32 6, %v2692
    %v2694 = vrot.slane %v1547, %v2693
    %v2695 = vlaneseq
    %v2696 = vshrl.u32 %v2695, 7
    %v2697 = vsub.s32 7, %v2696
    %v2698 = vrot.slane %v1547, %v2697
    %v2699 = vlaneseq
    %v2700 = vshrl.u32 %v2699, 7
    %v2701 = vsub.s32 0, %v2700
    %v2702 = vrot.slane %v1548, %v2701
    %v2703 = vlaneseq
    %v2704 = vshrl.u32 %v2703, 7
    %v2705 = vsub.s32 1, %v2704
    %v2706 = vrot.slane %v1548, %v2705
    %v2707 = vlaneseq
    %v2708 = vshrl.u32 %v2707, 7
    %v2709 = vsub.s32 2, %v2708
    %v2710 = vrot.slane %v1548, %v2709
    %v2711 = vlaneseq
    %v2712 = vshrl.u32 %v2711, 7
    %v2713 = vsub.s32 3, %v2712
    %v2714 = vrot.slane %v1548, %v2713
    %v2715 = vlaneseq
    %v2716 = vshrl.u32 %v2715, 7
    %v2717 = vsub.s32 4, %v2716
    %v2718 = vrot.slane %v1548, %v2717
    %v2719 = vlaneseq
    %v2720 = vshrl.u32 %v2719, 7
    %v2721 = vsub.s32 5, %v2720
    %v2722 = vrot.slane %v1548, %v2721
    %v2723 = vlaneseq
    %v2724 = vshrl.u32 %v2723, 7
    %v2725 = vsub.s32 6, %v2724
    %v2726 = vrot.slane %v1548, %v2725
    %v2727 = vlaneseq
    %v2728 = vshrl.u32 %v2727, 7
    %v2729 = vsub.s32 7, %v2728
    %v2730 = vrot.slane %v1548, %v2729
    %v2731 = vlaneseq
    %v2732 = vshrl.u32 %v2731, 7
    %v2733 = vsub.s32 0, %v2732
    %v2734 = vrot.slane %v1549, %v2733
    %v2735 = vlaneseq
    %v2736 = vshrl.u32 %v2735, 7
    %v2737 = vsub.s32 1, %v2736
    %v2738 = vrot.slane %v1549, %v2737
    %v2739 = vlaneseq
    %v2740 = vshrl.u32 %v2739, 7
    %v2741 = vsub.s32 2, %v2740
    %v2742 = vrot.slane %v1549, %v2741
    %v2743 = vlaneseq
    %v2744 = vshrl.u32 %v2743, 7
    %v2745 = vsub.s32 3, %v2744
    %v2746 = vrot.slane %v1549, %v2745
    %v2747 = vlaneseq
    %v2748 = vshrl.u32 %v2747, 7
    %v2749 = vsub.s32 4, %v2748
    %v2750 = vrot.slane %v1549, %v2749
    %v2751 = vlaneseq
    %v2752 = vshrl.u32 %v2751, 7
    %v2753 = vsub.s32 5, %v2752
    %v2754 = vrot.slane %v1549, %v2753
    %v2755 = vlaneseq
    %v2756 = vshrl.u32 %v2755, 7
    %v2757 = vsub.s32 6, %v2756
    %v2758 = vrot.slane %v1549, %v2757
    %v2759 = vlaneseq
    %v2760 = vshrl.u32 %v2759, 7
    %v2761 = vsub.s32 7, %v2760
    %v2762 = vrot.slane %v1549, %v2761
    %v2763 = vlaneseq
    %v2764 = vshrl.u32 %v2763, 7
    %v2765 = vsub.s32 0, %v2764
    %v2766 = vrot.slane %v1550, %v2765
    %v2767 = vlaneseq
    %v2768 = vshrl.u32 %v2767, 7
    %v2769 = vsub.s32 1, %v2768
    %v2770 = vrot.slane %v1550, %v2769
    %v2771 = vlaneseq
    %v2772 = vshrl.u32 %v2771, 7
    %v2773 = vsub.s32 2, %v2772
    %v2774 = vrot.slane %v1550, %v2773
    %v2775 = vlaneseq
    %v2776 = vshrl.u32 %v2775, 7
    %v2777 = vsub.s32 3, %v2776
    %v2778 = vrot.slane %v1550, %v2777
    %v2779 = vlaneseq
    %v2780 = vshrl.u32 %v2779, 7
    %v2781 = vsub.s32 4, %v2780
    %v2782 = vrot.slane %v1550, %v2781
    %v2783 = vlaneseq
    %v2784 = vshrl.u32 %v2783, 7
    %v2785 = vsub.s32 5, %v2784
    %v2786 = vrot.slane %v1550, %v2785
    %v2787 = vlaneseq
    %v2788 = vshrl.u32 %v2787, 7
    %v2789 = vsub.s32 6, %v2788
    %v2790 = vrot.slane %v1550, %v2789
    %v2791 = vlaneseq
    %v2792 = vshrl.u32 %v2791, 7
    %v2793 = vsub.s32 7, %v2792
    %v2794 = vrot.slane %v1550, %v2793
    %v2795 = vlaneseq
    %v2796 = vshrl.u32 %v2795, 7
    %v2797 = vsub.s32 0, %v2796
    %v2798 = vrot.slane %v1551, %v2797
    %v2799 = vlaneseq
    %v2800 = vshrl.u32 %v2799, 7
    %v2801 = vsub.s32 1, %v2800
    %v2802 = vrot.slane %v1551, %v2801
    %v2803 = vlaneseq
    %v2804 = vshrl.u32 %v2803, 7
    %v2805 = vsub.s32 2, %v2804
    %v2806 = vrot.slane %v1551, %v2805
    %v2807 = vlaneseq
    %v2808 = vshrl.u32 %v2807, 7
    %v2809 = vsub.s32 3, %v2808
    %v2810 = vrot.slane %v1551, %v2809
    %v2811 = vlaneseq
    %v2812 = vshrl.u32 %v2811, 7
    %v2813 = vsub.s32 4, %v2812
    %v2814 = vrot.slane %v1551, %v2813
    %v2815 = vlaneseq
    %v2816 = vshrl.u32 %v2815, 7
    %v2817 = vsub.s32 5, %v2816
    %v2818 = vrot.slane %v1551, %v2817
    %v2819 = vlaneseq
    %v2820 = vshrl.u32 %v2819, 7
    %v2821 = vsub.s32 6, %v2820
    %v2822 = vrot.slane %v1551, %v2821
    %v2823 = vlaneseq
    %v2824 = vshrl.u32 %v2823, 7
    %v2825 = vsub.s32 7, %v2824
    %v2826 = vrot.slane %v1551, %v2825
    %v2827 = vlaneseq
    %v2828 = vshrl.u32 %v2827, 7
    %v2829 = vsub.s32 0, %v2828
    %v2830 = vrot.slane %v1552, %v2829
    %v2831 = vlaneseq
    %v2832 = vshrl.u32 %v2831, 7
    %v2833 = vsub.s32 1, %v2832
    %v2834 = vrot.slane %v1552, %v2833
    %v2835 = vlaneseq
    %v2836 = vshrl.u32 %v2835, 7
    %v2837 = vsub.s32 2, %v2836
    %v2838 = vrot.slane %v1552, %v2837
    %v2839 = vlaneseq
    %v2840 = vshrl.u32 %v2839, 7
    %v2841 = vsub.s32 3, %v2840
    %v2842 = vrot.slane %v1552, %v2841
    %v2843 = vlaneseq
    %v2844 = vshrl.u32 %v2843, 7
    %v2845 = vsub.s32 4, %v2844
    %v2846 = vrot.slane %v1552, %v2845
    %v2847 = vlaneseq
    %v2848 = vshrl.u32 %v2847, 7
    %v2849 = vsub.s32 5, %v2848
    %v2850 = vrot.slane %v1552, %v2849
    %v2851 = vlaneseq
    %v2852 = vshrl.u32 %v2851, 7
    %v2853 = vsub.s32 6, %v2852
    %v2854 = vrot.slane %v1552, %v2853
    %v2855 = vlaneseq
    %v2856 = vshrl.u32 %v2855, 7
    %v2857 = vsub.s32 7, %v2856
    %v2858 = vrot.slane %v1552, %v2857
    %v2859 = vlaneseq
    %v2860 = vshrl.u32 %v2859, 7
    %v2861 = vsub.s32 0, %v2860
    %v2862 = vrot.slane %v1553, %v2861
    %v2863 = vlaneseq
    %v2864 = vshrl.u32 %v2863, 7
    %v2865 = vsub.s32 1, %v2864
    %v2866 = vrot.slane %v1553, %v2865
    %v2867 = vlaneseq
    %v2868 = vshrl.u32 %v2867, 7
    %v2869 = vsub.s32 2, %v2868
    %v2870 = vrot.slane %v1553, %v2869
    %v2871 = vlaneseq
    %v2872 = vshrl.u32 %v2871, 7
    %v2873 = vsub.s32 3, %v2872
    %v2874 = vrot.slane %v1553, %v2873
    %v2875 = vlaneseq
    %v2876 = vshrl.u32 %v2875, 7
    %v2877 = vsub.s32 4, %v2876
    %v2878 = vrot.slane %v1553, %v2877
    %v2879 = vlaneseq
    %v2880 = vshrl.u32 %v2879, 7
    %v2881 = vsub.s32 5, %v2880
    %v2882 = vrot.slane %v1553, %v2881
    %v2883 = vlaneseq
    %v2884 = vshrl.u32 %v2883, 7
    %v2885 = vsub.s32 6, %v2884
    %v2886 = vrot.slane %v1553, %v2885
    %v2887 = vlaneseq
    %v2888 = vshrl.u32 %v2887, 7
    %v2889 = vsub.s32 7, %v2888
    %v2890 = vrot.slane %v1553, %v2889
    %v2891 = vlaneseq
    %v2892 = vshrl.u32 %v2891, 7
    %v2893 = vsub.s32 0, %v2892
    %v2894 = vrot.slane %v1554, %v2893
    %v2895 = vlaneseq
    %v2896 = vshrl.u32 %v2895, 7
    %v2897 = vsub.s32 1, %v2896
    %v2898 = vrot.slane %v1554, %v2897
    %v2899 = vlaneseq
    %v2900 = vshrl.u32 %v2899, 7
    %v2901 = vsub.s32 2, %v2900
    %v2902 = vrot.slane %v1554, %v2901
    %v2903 = vlaneseq
    %v2904 = vshrl.u32 %v2903, 7
    %v2905 = vsub.s32 3, %v2904
    %v2906 = vrot.slane %v1554, %v2905
    %v2907 = vlaneseq
    %v2908 = vshrl.u32 %v2907, 7
    %v2909 = vsub.s32 4, %v2908
    %v2910 = vrot.slane %v1554, %v2909
    %v2911 = vlaneseq
    %v2912 = vshrl.u32 %v2911, 7
    %v2913 = vsub.s32 5, %v2912
    %v2914 = vrot.slane %v1554, %v2913
    %v2915 = vlaneseq
    %v2916 = vshrl.u32 %v2915, 7
    %v2917 = vsub.s32 6, %v2916
    %v2918 = vrot.slane %v1554, %v2917
    %v2919 = vlaneseq
    %v2920 = vshrl.u32 %v2919, 7
    %v2921 = vsub.s32 7, %v2920
    %v2922 = vrot.slane %v1554, %v2921
    %v2923 = vlaneseq
    %v2924 = vshrl.u32 %v2923, 7
    %v2925 = vsub.s32 0, %v2924
    %v2926 = vrot.slane %v1555, %v2925
    %v2927 = vlaneseq
    %v2928 = vshrl.u32 %v2927, 7
    %v2929 = vsub.s32 1, %v2928
    %v2930 = vrot.slane %v1555, %v2929
    %v2931 = vlaneseq
    %v2932 = vshrl.u32 %v2931, 7
    %v2933 = vsub.s32 2, %v2932
    %v2934 = vrot.slane %v1555, %v2933
    %v2935 = vlaneseq
    %v2936 = vshrl.u32 %v2935, 7
    %v2937 = vsub.s32 3, %v2936
    %v2938 = vrot.slane %v1555, %v2937
    %v2939 = vlaneseq
    %v2940 = vshrl.u32 %v2939, 7
    %v2941 = vsub.s32 4, %v2940
    %v2942 = vrot.slane %v1555, %v2941
    %v2943 = vlaneseq
    %v2944 = vshrl.u32 %v2943, 7
    %v2945 = vsub.s32 5, %v2944
    %v2946 = vrot.slane %v1555, %v2945
    %v2947 = vlaneseq
    %v2948 = vshrl.u32 %v2947, 7
    %v2949 = vsub.s32 6, %v2948
    %v2950 = vrot.slane %v1555, %v2949
    %v2951 = vlaneseq
    %v2952 = vshrl.u32 %v2951, 7
    %v2953 = vsub.s32 7, %v2952
    %v2954 = vrot.slane %v1555, %v2953
    %v2955 = vlaneseq
    %v2956 = vshrl.u32 %v2955, 7
    %v2957 = vsub.s32 0, %v2956
    %v2958 = vrot.slane %v1556, %v2957
    %v2959 = vlaneseq
    %v2960 = vshrl.u32 %v2959, 7
    %v2961 = vsub.s32 1, %v2960
    %v2962 = vrot.slane %v1556, %v2961
    %v2963 = vlaneseq
    %v2964 = vshrl.u32 %v2963, 7
    %v2965 = vsub.s32 2, %v2964
    %v2966 = vrot.slane %v1556, %v2965
    %v2967 = vlaneseq
    %v2968 = vshrl.u32 %v2967, 7
    %v2969 = vsub.s32 3, %v2968
    %v2970 = vrot.slane %v1556, %v2969
    %v2971 = vlaneseq
    %v2972 = vshrl.u32 %v2971, 7
    %v2973 = vsub.s32 4, %v2972
    %v2974 = vrot.slane %v1556, %v2973
    %v2975 = vlaneseq
    %v2976 = vshrl.u32 %v2975, 7
    %v2977 = vsub.s32 5, %v2976
    %v2978 = vrot.slane %v1556, %v2977
    %v2979 = vlaneseq
    %v2980 = vshrl.u32 %v2979, 7
    %v2981 = vsub.s32 6, %v2980
    %v2982 = vrot.slane %v1556, %v2981
    %v2983 = vlaneseq
    %v2984 = vshrl.u32 %v2983, 7
    %v2985 = vsub.s32 7, %v2984
    %v2986 = vrot.slane %v1556, %v2985
    %v2987 = vlaneseq
    %v2988 = vshrl.u32 %v2987, 7
    %v2989 = vsub.s32 0, %v2988
    %v2990 = vrot.slane %v1557, %v2989
    %v2991 = vlaneseq
    %v2992 = vshrl.u32 %v2991, 7
    %v2993 = vsub.s32 1, %v2992
    %v2994 = vrot.slane %v1557, %v2993
    %v2995 = vlaneseq
    %v2996 = vshrl.u32 %v2995, 7
    %v2997 = vsub.s32 2, %v2996
    %v2998 = vrot.slane %v1557, %v2997
    %v2999 = vlaneseq
    %v3000 = vshrl.u32 %v2999, 7
    %v3001 = vsub.s32 3, %v3000
    %v3002 = vrot.slane %v1557, %v3001
    %v3003 = vlaneseq
    %v3004 = vshrl.u32 %v3003, 7
    %v3005 = vsub.s32 4, %v3004
    %v3006 = vrot.slane %v1557, %v3005
    %v3007 = vlaneseq
    %v3008 = vshrl.u32 %v3007, 7
    %v3009 = vsub.s32 5, %v3008
    %v3010 = vrot.slane %v1557, %v3009
    %v3011 = vlaneseq
    %v3012 = vshrl.u32 %v3011, 7
    %v3013 = vsub.s32 6, %v3012
    %v3014 = vrot.slane %v1557, %v3013
    %v3015 = vlaneseq
    %v3016 = vshrl.u32 %v3015, 7
    %v3017 = vsub.s32 7, %v3016
    %v3018 = vrot.slane %v1557, %v3017
    %v3019 = vlaneseq
    %v3020 = vshrl.u32 %v3019, 7
    %v3021 = vsub.s32 0, %v3020
    %v3022 = vrot.slane %v1558, %v3021
    %v3023 = vlaneseq
    %v3024 = vshrl.u32 %v3023, 7
    %v3025 = vsub.s32 1, %v3024
    %v3026 = vrot.slane %v1558, %v3025
    %v3027 = vlaneseq
    %v3028 = vshrl.u32 %v3027, 7
    %v3029 = vsub.s32 2, %v3028
    %v3030 = vrot.slane %v1558, %v3029
    %v3031 = vlaneseq
    %v3032 = vshrl.u32 %v3031, 7
    %v3033 = vsub.s32 3, %v3032
    %v3034 = vrot.slane %v1558, %v3033
    %v3035 = vlaneseq
    %v3036 = vshrl.u32 %v3035, 7
    %v3037 = vsub.s32 4, %v3036
    %v3038 = vrot.slane %v1558, %v3037
    %v3039 = vlaneseq
    %v3040 = vshrl.u32 %v3039, 7
    %v3041 = vsub.s32 5, %v3040
    %v3042 = vrot.slane %v1558, %v3041
    %v3043 = vlaneseq
    %v3044 = vshrl.u32 %v3043, 7
    %v3045 = vsub.s32 6, %v3044
    %v3046 = vrot.slane %v1558, %v3045
    %v3047 = vlaneseq
    %v3048 = vshrl.u32 %v3047, 7
    %v3049 = vsub.s32 7, %v3048
    %v3050 = vrot.slane %v1558, %v3049
    %v3051 = vlaneseq
    %v3052 = vshrl.u32 %v3051, 7
    %v3053 = vsub.s32 0, %v3052
    %v3054 = vrot.slane %v1559, %v3053
    %v3055 = vlaneseq
    %v3056 = vshrl.u32 %v3055, 7
    %v3057 = vsub.s32 1, %v3056
    %v3058 = vrot.slane %v1559, %v3057
    %v3059 = vlaneseq
    %v3060 = vshrl.u32 %v3059, 7
    %v3061 = vsub.s32 2, %v3060
    %v3062 = vrot.slane %v1559, %v3061
    %v3063 = vlaneseq
    %v3064 = vshrl.u32 %v3063, 7
    %v3065 = vsub.s32 3, %v3064
    %v3066 = vrot.slane %v1559, %v3065
    %v3067 = vlaneseq
    %v3068 = vshrl.u32 %v3067, 7
    %v3069 = vsub.s32 4, %v3068
    %v3070 = vrot.slane %v1559, %v3069
    %v3071 = vlaneseq
    %v3072 = vshrl.u32 %v3071, 7
    %v3073 = vsub.s32 5, %v3072
    %v3074 = vrot.slane %v1559, %v3073
    %v3075 = vlaneseq
    %v3076 = vshrl.u32 %v3075, 7
    %v3077 = vsub.s32 6, %v3076
    %v3078 = vrot.slane %v1559, %v3077
    %v3079 = vlaneseq
    %v3080 = vshrl.u32 %v3079, 7
    %v3081 = vsub.s32 7, %v3080
    %v3082 = vrot.slane %v1559, %v3081
    %v3083 = vlaneseq
    %v3084 = vshrl.u32 %v3083, 7
    %v3085 = vsub.s32 0, %v3084
    %v3086 = vrot.slane %v1560, %v3085
    %v3087 = vlaneseq
    %v3088 = vshrl.u32 %v3087, 7
    %v3089 = vsub.s32 1, %v3088
    %v3090 = vrot.slane %v1560, %v3089
    %v3091 = vlaneseq
    %v3092 = vshrl.u32 %v3091, 7
    %v3093 = vsub.s32 2, %v3092
    %v3094 = vrot.slane %v1560, %v3093
    %v3095 = vlaneseq
    %v3096 = vshrl.u32 %v3095, 7
    %v3097 = vsub.s32 3, %v3096
    %v3098 = vrot.slane %v1560, %v3097
    %v3099 = vlaneseq
    %v3100 = vshrl.u32 %v3099, 7
    %v3101 = vsub.s32 4, %v3100
    %v3102 = vrot.slane %v1560, %v3101
    %v3103 = vlaneseq
    %v3104 = vshrl.u32 %v3103, 7
    %v3105 = vsub.s32 5, %v3104
    %v3106 = vrot.slane %v1560, %v3105
    %v3107 = vlaneseq
    %v3108 = vshrl.u32 %v3107, 7
    %v3109 = vsub.s32 6, %v3108
    %v3110 = vrot.slane %v1560, %v3109
    %v3111 = vlaneseq
    %v3112 = vshrl.u32 %v3111, 7
    %v3113 = vsub.s32 7, %v3112
    %v3114 = vrot.slane %v1560, %v3113
    %v3115 = vlaneseq
    %v3116 = vshrl.u32 %v3115, 7
    %v3117 = vsub.s32 0, %v3116
    %v3118 = vrot.slane %v1561, %v3117
    %v3119 = vlaneseq
    %v3120 = vshrl.u32 %v3119, 7
    %v3121 = vsub.s32 1, %v3120
    %v3122 = vrot.slane %v1561, %v3121
    %v3123 = vlaneseq
    %v3124 = vshrl.u32 %v3123, 7
    %v3125 = vsub.s32 2, %v3124
    %v3126 = vrot.slane %v1561, %v3125
    %v3127 = vlaneseq
    %v3128 = vshrl.u32 %v3127, 7
    %v3129 = vsub.s32 3, %v3128
    %v3130 = vrot.slane %v1561, %v3129
    %v3131 = vlaneseq
    %v3132 = vshrl.u32 %v3131, 7
    %v3133 = vsub.s32 4, %v3132
    %v3134 = vrot.slane %v1561, %v3133
    %v3135 = vlaneseq
    %v3136 = vshrl.u32 %v3135, 7
    %v3137 = vsub.s32 5, %v3136
    %v3138 = vrot.slane %v1561, %v3137
    %v3139 = vlaneseq
    %v3140 = vshrl.u32 %v3139, 7
    %v3141 = vsub.s32 6, %v3140
    %v3142 = vrot.slane %v1561, %v3141
    %v3143 = vlaneseq
    %v3144 = vshrl.u32 %v3143, 7
    %v3145 = vsub.s32 7, %v3144
    %v3146 = vrot.slane %v1561, %v3145
    %v3147 = vlaneseq
    %v3148 = vshrl.u32 %v3147, 7
    %v3149 = vsub.s32 0, %v3148
    %v3150 = vrot.slane %v1562, %v3149
    %v3151 = vlaneseq
    %v3152 = vshrl.u32 %v3151, 7
    %v3153 = vsub.s32 1, %v3152
    %v3154 = vrot.slane %v1562, %v3153
    %v3155 = vlaneseq
    %v3156 = vshrl.u32 %v3155, 7
    %v3157 = vsub.s32 2, %v3156
    %v3158 = vrot.slane %v1562, %v3157
    %v3159 = vlaneseq
    %v3160 = vshrl.u32 %v3159, 7
    %v3161 = vsub.s32 3, %v3160
    %v3162 = vrot.slane %v1562, %v3161
    %v3163 = vlaneseq
    %v3164 = vshrl.u32 %v3163, 7
    %v3165 = vsub.s32 4, %v3164
    %v3166 = vrot.slane %v1562, %v3165
    %v3167 = vlaneseq
    %v3168 = vshrl.u32 %v3167, 7
    %v3169 = vsub.s32 5, %v3168
    %v3170 = vrot.slane %v1562, %v3169
    %v3171 = vlaneseq
    %v3172 = vshrl.u32 %v3171, 7
    %v3173 = vsub.s32 6, %v3172
    %v3174 = vrot.slane %v1562, %v3173
    %v3175 = vlaneseq
    %v3176 = vshrl.u32 %v3175, 7
    %v3177 = vsub.s32 7, %v3176
    %v3178 = vrot.slane %v1562, %v3177
    %v3179 = vlaneseq
    %v3180 = vshrl.u32 %v3179, 7
    %v3181 = vsub.s32 0, %v3180
    %v3182 = vrot.slane %v1563, %v3181
    %v3183 = vlaneseq
    %v3184 = vshrl.u32 %v3183, 7
    %v3185 = vsub.s32 1, %v3184
    %v3186 = vrot.slane %v1563, %v3185
    %v3187 = vlaneseq
    %v3188 = vshrl.u32 %v3187, 7
    %v3189 = vsub.s32 2, %v3188
    %v3190 = vrot.slane %v1563, %v3189
    %v3191 = vlaneseq
    %v3192 = vshrl.u32 %v3191, 7
    %v3193 = vsub.s32 3, %v3192
    %v3194 = vrot.slane %v1563, %v3193
    %v3195 = vlaneseq
    %v3196 = vshrl.u32 %v3195, 7
    %v3197 = vsub.s32 4, %v3196
    %v3198 = vrot.slane %v1563, %v3197
    %v3199 = vlaneseq
    %v3200 = vshrl.u32 %v3199, 7
    %v3201 = vsub.s32 5, %v3200
    %v3202 = vrot.slane %v1563, %v3201
    %v3203 = vlaneseq
    %v3204 = vshrl.u32 %v3203, 7
    %v3205 = vsub.s32 6, %v3204
    %v3206 = vrot.slane %v1563, %v3205
    %v3207 = vlaneseq
    %v3208 = vshrl.u32 %v3207, 7
    %v3209 = vsub.s32 7, %v3208
    %v3210 = vrot.slane %v1563, %v3209
    %v3211 = vlaneseq
    %v3212 = vshrl.u32 %v3211, 7
    %v3213 = vsub.s32 0, %v3212
    %v3214 = vrot.slane %v1564, %v3213
    %v3215 = vlaneseq
    %v3216 = vshrl.u32 %v3215, 7
    %v3217 = vsub.s32 1, %v3216
    %v3218 = vrot.slane %v1564, %v3217
    %v3219 = vlaneseq
    %v3220 = vshrl.u32 %v3219, 7
    %v3221 = vsub.s32 2, %v3220
    %v3222 = vrot.slane %v1564, %v3221
    %v3223 = vlaneseq
    %v3224 = vshrl.u32 %v3223, 7
    %v3225 = vsub.s32 3, %v3224
    %v3226 = vrot.slane %v1564, %v3225
    %v3227 = vlaneseq
    %v3228 = vshrl.u32 %v3227, 7
    %v3229 = vsub.s32 4, %v3228
    %v3230 = vrot.slane %v1564, %v3229
    %v3231 = vlaneseq
    %v3232 = vshrl.u32 %v3231, 7
    %v3233 = vsub.s32 5, %v3232
    %v3234 = vrot.slane %v1564, %v3233
    %v3235 = vlaneseq
    %v3236 = vshrl.u32 %v3235, 7
    %v3237 = vsub.s32 6, %v3236
    %v3238 = vrot.slane %v1564, %v3237
    %v3239 = vlaneseq
    %v3240 = vshrl.u32 %v3239, 7
    %v3241 = vsub.s32 7, %v3240
    %v3242 = vrot.slane %v1564, %v3241
    %v3243 = vlaneseq
    %v3244 = vshrl.u32 %v3243, 7
    %v3245 = vsub.s32 0, %v3244
    %v3246 = vrot.slane %v1565, %v3245
    %v3247 = vlaneseq
    %v3248 = vshrl.u32 %v3247, 7
    %v3249 = vsub.s32 1, %v3248
    %v3250 = vrot.slane %v1565, %v3249
    %v3251 = vlaneseq
    %v3252 = vshrl.u32 %v3251, 7
    %v3253 = vsub.s32 2, %v3252
    %v3254 = vrot.slane %v1565, %v3253
    %v3255 = vlaneseq
    %v3256 = vshrl.u32 %v3255, 7
    %v3257 = vsub.s32 3, %v3256
    %v3258 = vrot.slane %v1565, %v3257
    %v3259 = vlaneseq
    %v3260 = vshrl.u32 %v3259, 7
    %v3261 = vsub.s32 4, %v3260
    %v3262 = vrot.slane %v1565, %v3261
    %v3263 = vlaneseq
    %v3264 = vshrl.u32 %v3263, 7
    %v3265 = vsub.s32 5, %v3264
    %v3266 = vrot.slane %v1565, %v3265
    %v3267 = vlaneseq
    %v3268 = vshrl.u32 %v3267, 7
    %v3269 = vsub.s32 6, %v3268
    %v3270 = vrot.slane %v1565, %v3269
    %v3271 = vlaneseq
    %v3272 = vshrl.u32 %v3271, 7
    %v3273 = vsub.s32 7, %v3272
    %v3274 = vrot.slane %v1565, %v3273
    %v3275 = vlaneseq
    %v3276 = vshrl.u32 %v3275, 7
    %v3277 = vsub.s32 0, %v3276
    %v3278 = vrot.slane %v1566, %v3277
    %v3279 = vlaneseq
    %v3280 = vshrl.u32 %v3279, 7
    %v3281 = vsub.s32 1, %v3280
    %v3282 = vrot.slane %v1566, %v3281
    %v3283 = vlaneseq
    %v3284 = vshrl.u32 %v3283, 7
    %v3285 = vsub.s32 2, %v3284
    %v3286 = vrot.slane %v1566, %v3285
    %v3287 = vlaneseq
    %v3288 = vshrl.u32 %v3287, 7
    %v3289 = vsub.s32 3, %v3288
    %v3290 = vrot.slane %v1566, %v3289
    %v3291 = vlaneseq
    %v3292 = vshrl.u32 %v3291, 7
    %v3293 = vsub.s32 4, %v3292
    %v3294 = vrot.slane %v1566, %v3293
    %v3295 = vlaneseq
    %v3296 = vshrl.u32 %v3295, 7
    %v3297 = vsub.s32 5, %v3296
    %v3298 = vrot.slane %v1566, %v3297
    %v3299 = vlaneseq
    %v3300 = vshrl.u32 %v3299, 7
    %v3301 = vsub.s32 6, %v3300
    %v3302 = vrot.slane %v1566, %v3301
    %v3303 = vlaneseq
    %v3304 = vshrl.u32 %v3303, 7
    %v3305 = vsub.s32 7, %v3304
    %v3306 = vrot.slane %v1566, %v3305
    %v3307 = vlaneseq
    %v3308 = vshrl.u32 %v3307, 7
    %v3309 = vsub.s32 0, %v3308
    %v3310 = vrot.slane %v1567, %v3309
    %v3311 = vlaneseq
    %v3312 = vshrl.u32 %v3311, 7
    %v3313 = vsub.s32 1, %v3312
    %v3314 = vrot.slane %v1567, %v3313
    %v3315 = vlaneseq
    %v3316 = vshrl.u32 %v3315, 7
    %v3317 = vsub.s32 2, %v3316
    %v3318 = vrot.slane %v1567, %v3317
    %v3319 = vlaneseq
    %v3320 = vshrl.u32 %v3319, 7
    %v3321 = vsub.s32 3, %v3320
    %v3322 = vrot.slane %v1567, %v3321
    %v3323 = vlaneseq
    %v3324 = vshrl.u32 %v3323, 7
    %v3325 = vsub.s32 4, %v3324
    %v3326 = vrot.slane %v1567, %v3325
    %v3327 = vlaneseq
    %v3328 = vshrl.u32 %v3327, 7
    %v3329 = vsub.s32 5, %v3328
    %v3330 = vrot.slane %v1567, %v3329
    %v3331 = vlaneseq
    %v3332 = vshrl.u32 %v3331, 7
    %v3333 = vsub.s32 6, %v3332
    %v3334 = vrot.slane %v1567, %v3333
    %v3335 = vlaneseq
    %v3336 = vshrl.u32 %v3335, 7
    %v3337 = vsub.s32 7, %v3336
    %v3338 = vrot.slane %v1567, %v3337
    %v3339 = vlaneseq
    %v3340 = vshrl.u32 %v3339, 7
    %v3341 = vsub.s32 0, %v3340
    %v3342 = vrot.slane %v1568, %v3341
    %v3343 = vlaneseq
    %v3344 = vshrl.u32 %v3343, 7
    %v3345 = vsub.s32 1, %v3344
    %v3346 = vrot.slane %v1568, %v3345
    %v3347 = vlaneseq
    %v3348 = vshrl.u32 %v3347, 7
    %v3349 = vsub.s32 2, %v3348
    %v3350 = vrot.slane %v1568, %v3349
    %v3351 = vlaneseq
    %v3352 = vshrl.u32 %v3351, 7
    %v3353 = vsub.s32 3, %v3352
    %v3354 = vrot.slane %v1568, %v3353
    %v3355 = vlaneseq
    %v3356 = vshrl.u32 %v3355, 7
    %v3357 = vsub.s32 4, %v3356
    %v3358 = vrot.slane %v1568, %v3357
    %v3359 = vlaneseq
    %v3360 = vshrl.u32 %v3359, 7
    %v3361 = vsub.s32 5, %v3360
    %v3362 = vrot.slane %v1568, %v3361
    %v3363 = vlaneseq
    %v3364 = vshrl.u32 %v3363, 7
    %v3365 = vsub.s32 6, %v3364
    %v3366 = vrot.slane %v1568, %v3365
    %v3367 = vlaneseq
    %v3368 = vshrl.u32 %v3367, 7
    %v3369 = vsub.s32 7, %v3368
    %v3370 = vrot.slane %v1568, %v3369
    %v3371 = vlaneseq
    %v3372 = vshrl.u32 %v3371, 7
    %v3373 = vsub.s32 0, %v3372
    %v3374 = vrot.slane %v1569, %v3373
    %v3375 = vlaneseq
    %v3376 = vshrl.u32 %v3375, 7
    %v3377 = vsub.s32 1, %v3376
    %v3378 = vrot.slane %v1569, %v3377
    %v3379 = vlaneseq
    %v3380 = vshrl.u32 %v3379, 7
    %v3381 = vsub.s32 2, %v3380
    %v3382 = vrot.slane %v1569, %v3381
    %v3383 = vlaneseq
    %v3384 = vshrl.u32 %v3383, 7
    %v3385 = vsub.s32 3, %v3384
    %v3386 = vrot.slane %v1569, %v3385
    %v3387 = vlaneseq
    %v3388 = vshrl.u32 %v3387, 7
    %v3389 = vsub.s32 4, %v3388
    %v3390 = vrot.slane %v1569, %v3389
    %v3391 = vlaneseq
    %v3392 = vshrl.u32 %v3391, 7
    %v3393 = vsub.s32 5, %v3392
    %v3394 = vrot.slane %v1569, %v3393
    %v3395 = vlaneseq
    %v3396 = vshrl.u32 %v3395, 7
    %v3397 = vsub.s32 6, %v3396
    %v3398 = vrot.slane %v1569, %v3397
    %v3399 = vlaneseq
    %v3400 = vshrl.u32 %v3399, 7
    %v3401 = vsub.s32 7, %v3400
    %v3402 = vrot.slane %v1569, %v3401
    %v3403 = vlaneseq
    %v3404 = vshrl.u32 %v3403, 7
    %v3405 = vsub.s32 0, %v3404
    %v3406 = vrot.slane %v1570, %v3405
    %v3407 = vlaneseq
    %v3408 = vshrl.u32 %v3407, 7
    %v3409 = vsub.s32 1, %v3408
    %v3410 = vrot.slane %v1570, %v3409
    %v3411 = vlaneseq
    %v3412 = vshrl.u32 %v3411, 7
    %v3413 = vsub.s32 2, %v3412
    %v3414 = vrot.slane %v1570, %v3413
    %v3415 = vlaneseq
    %v3416 = vshrl.u32 %v3415, 7
    %v3417 = vsub.s32 3, %v3416
    %v3418 = vrot.slane %v1570, %v3417
    %v3419 = vlaneseq
    %v3420 = vshrl.u32 %v3419, 7
    %v3421 = vsub.s32 4, %v3420
    %v3422 = vrot.slane %v1570, %v3421
    %v3423 = vlaneseq
    %v3424 = vshrl.u32 %v3423, 7
    %v3425 = vsub.s32 5, %v3424
    %v3426 = vrot.slane %v1570, %v3425
    %v3427 = vlaneseq
    %v3428 = vshrl.u32 %v3427, 7
    %v3429 = vsub.s32 6, %v3428
    %v3430 = vrot.slane %v1570, %v3429
    %v3431 = vlaneseq
    %v3432 = vshrl.u32 %v3431, 7
    %v3433 = vsub.s32 7, %v3432
    %v3434 = vrot.slane %v1570, %v3433
    %v3435 = vlaneseq
    %v3436 = vshrl.u32 %v3435, 7
    %v3437 = vsub.s32 0, %v3436
    %v3438 = vrot.slane %v1571, %v3437
    %v3439 = vlaneseq
    %v3440 = vshrl.u32 %v3439, 7
    %v3441 = vsub.s32 1, %v3440
    %v3442 = vrot.slane %v1571, %v3441
    %v3443 = vlaneseq
    %v3444 = vshrl.u32 %v3443, 7
    %v3445 = vsub.s32 2, %v3444
    %v3446 = vrot.slane %v1571, %v3445
    %v3447 = vlaneseq
    %v3448 = vshrl.u32 %v3447, 7
    %v3449 = vsub.s32 3, %v3448
    %v3450 = vrot.slane %v1571, %v3449
    %v3451 = vlaneseq
    %v3452 = vshrl.u32 %v3451, 7
    %v3453 = vsub.s32 4, %v3452
    %v3454 = vrot.slane %v1571, %v3453
    %v3455 = vlaneseq
    %v3456 = vshrl.u32 %v3455, 7
    %v3457 = vsub.s32 5, %v3456
    %v3458 = vrot.slane %v1571, %v3457
    %v3459 = vlaneseq
    %v3460 = vshrl.u32 %v3459, 7
    %v3461 = vsub.s32 6, %v3460
    %v3462 = vrot.slane %v1571, %v3461
    %v3463 = vlaneseq
    %v3464 = vshrl.u32 %v3463, 7
    %v3465 = vsub.s32 7, %v3464
    %v3466 = vrot.slane %v1571, %v3465
    %v3467 = vlaneseq
    %v3468 = vshrl.u32 %v3467, 7
    %v3469 = vsub.s32 0, %v3468
    %v3470 = vrot.slane %v1572, %v3469
    %v3471 = vlaneseq
    %v3472 = vshrl.u32 %v3471, 7
    %v3473 = vsub.s32 1, %v3472
    %v3474 = vrot.slane %v1572, %v3473
    %v3475 = vlaneseq
    %v3476 = vshrl.u32 %v3475, 7
    %v3477 = vsub.s32 2, %v3476
    %v3478 = vrot.slane %v1572, %v3477
    %v3479 = vlaneseq
    %v3480 = vshrl.u32 %v3479, 7
    %v3481 = vsub.s32 3, %v3480
    %v3482 = vrot.slane %v1572, %v3481
    %v3483 = vlaneseq
    %v3484 = vshrl.u32 %v3483, 7
    %v3485 = vsub.s32 4, %v3484
    %v3486 = vrot.slane %v1572, %v3485
    %v3487 = vlaneseq
    %v3488 = vshrl.u32 %v3487, 7
    %v3489 = vsub.s32 5, %v3488
    %v3490 = vrot.slane %v1572, %v3489
    %v3491 = vlaneseq
    %v3492 = vshrl.u32 %v3491, 7
    %v3493 = vsub.s32 6, %v3492
    %v3494 = vrot.slane %v1572, %v3493
    %v3495 = vlaneseq
    %v3496 = vshrl.u32 %v3495, 7
    %v3497 = vsub.s32 7, %v3496
    %v3498 = vrot.slane %v1572, %v3497
    %v3499 = vlaneseq
    %v3500 = vshrl.u32 %v3499, 7
    %v3501 = vsub.s32 0, %v3500
    %v3502 = vrot.slane %v1573, %v3501
    %v3503 = vlaneseq
    %v3504 = vshrl.u32 %v3503, 7
    %v3505 = vsub.s32 1, %v3504
    %v3506 = vrot.slane %v1573, %v3505
    %v3507 = vlaneseq
    %v3508 = vshrl.u32 %v3507, 7
    %v3509 = vsub.s32 2, %v3508
    %v3510 = vrot.slane %v1573, %v3509
    %v3511 = vlaneseq
    %v3512 = vshrl.u32 %v3511, 7
    %v3513 = vsub.s32 3, %v3512
    %v3514 = vrot.slane %v1573, %v3513
    %v3515 = vlaneseq
    %v3516 = vshrl.u32 %v3515, 7
    %v3517 = vsub.s32 4, %v3516
    %v3518 = vrot.slane %v1573, %v3517
    %v3519 = vlaneseq
    %v3520 = vshrl.u32 %v3519, 7
    %v3521 = vsub.s32 5, %v3520
    %v3522 = vrot.slane %v1573, %v3521
    %v3523 = vlaneseq
    %v3524 = vshrl.u32 %v3523, 7
    %v3525 = vsub.s32 6, %v3524
    %v3526 = vrot.slane %v1573, %v3525
    %v3527 = vlaneseq
    %v3528 = vshrl.u32 %v3527, 7
    %v3529 = vsub.s32 7, %v3528
    %v3530 = vrot.slane %v1573, %v3529
    %v3531 = vlaneseq
    %v3532 = vshrl.u32 %v3531, 7
    %v3533 = vsub.s32 0, %v3532
    %v3534 = vrot.slane %v1574, %v3533
    %v3535 = vlaneseq
    %v3536 = vshrl.u32 %v3535, 7
    %v3537 = vsub.s32 1, %v3536
    %v3538 = vrot.slane %v1574, %v3537
    %v3539 = vlaneseq
    %v3540 = vshrl.u32 %v3539, 7
    %v3541 = vsub.s32 2, %v3540
    %v3542 = vrot.slane %v1574, %v3541
    %v3543 = vlaneseq
    %v3544 = vshrl.u32 %v3543, 7
    %v3545 = vsub.s32 3, %v3544
    %v3546 = vrot.slane %v1574, %v3545
    %v3547 = vlaneseq
    %v3548 = vshrl.u32 %v3547, 7
    %v3549 = vsub.s32 4, %v3548
    %v3550 = vrot.slane %v1574, %v3549
    %v3551 = vlaneseq
    %v3552 = vshrl.u32 %v3551, 7
    %v3553 = vsub.s32 5, %v3552
    %v3554 = vrot.slane %v1574, %v3553
    %v3555 = vlaneseq
    %v3556 = vshrl.u32 %v3555, 7
    %v3557 = vsub.s32 6, %v3556
    %v3558 = vrot.slane %v1574, %v3557
    %v3559 = vlaneseq
    %v3560 = vshrl.u32 %v3559, 7
    %v3561 = vsub.s32 7, %v3560
    %v3562 = vrot.slane %v1574, %v3561
    %v3563 = vlaneseq
    %v3564 = vshrl.u32 %v3563, 7
    %v3565 = vsub.s32 0, %v3564
    %v3566 = vrot.slane %v1575, %v3565
    %v3567 = vlaneseq
    %v3568 = vshrl.u32 %v3567, 7
    %v3569 = vsub.s32 1, %v3568
    %v3570 = vrot.slane %v1575, %v3569
    %v3571 = vlaneseq
    %v3572 = vshrl.u32 %v3571, 7
    %v3573 = vsub.s32 2, %v3572
    %v3574 = vrot.slane %v1575, %v3573
    %v3575 = vlaneseq
    %v3576 = vshrl.u32 %v3575, 7
    %v3577 = vsub.s32 3, %v3576
    %v3578 = vrot.slane %v1575, %v3577
    %v3579 = vlaneseq
    %v3580 = vshrl.u32 %v3579, 7
    %v3581 = vsub.s32 4, %v3580
    %v3582 = vrot.slane %v1575, %v3581
    %v3583 = vlaneseq
    %v3584 = vshrl.u32 %v3583, 7
    %v3585 = vsub.s32 5, %v3584
    %v3586 = vrot.slane %v1575, %v3585
    %v3587 = vlaneseq
    %v3588 = vshrl.u32 %v3587, 7
    %v3589 = vsub.s32 6, %v3588
    %v3590 = vrot.slane %v1575, %v3589
    %v3591 = vlaneseq
    %v3592 = vshrl.u32 %v3591, 7
    %v3593 = vsub.s32 7, %v3592
    %v3594 = vrot.slane %v1575, %v3593
    %v3595 = vlaneseq
    %v3596 = vshrl.u32 %v3595, 7
    %v3597 = vsub.s32 0, %v3596
    %v3598 = vrot.slane %v1576, %v3597
    %v3599 = vlaneseq
    %v3600 = vshrl.u32 %v3599, 7
    %v3601 = vsub.s32 1, %v3600
    %v3602 = vrot.slane %v1576, %v3601
    %v3603 = vlaneseq
    %v3604 = vshrl.u32 %v3603, 7
    %v3605 = vsub.s32 2, %v3604
    %v3606 = vrot.slane %v1576, %v3605
    %v3607 = vlaneseq
    %v3608 = vshrl.u32 %v3607, 7
    %v3609 = vsub.s32 3, %v3608
    %v3610 = vrot.slane %v1576, %v3609
    %v3611 = vlaneseq
    %v3612 = vshrl.u32 %v3611, 7
    %v3613 = vsub.s32 4, %v3612
    %v3614 = vrot.slane %v1576, %v3613
    %v3615 = vlaneseq
    %v3616 = vshrl.u32 %v3615, 7
    %v3617 = vsub.s32 5, %v3616
    %v3618 = vrot.slane %v1576, %v3617
    %v3619 = vlaneseq
    %v3620 = vshrl.u32 %v3619, 7
    %v3621 = vsub.s32 6, %v3620
    %v3622 = vrot.slane %v1576, %v3621
    %v3623 = vlaneseq
    %v3624 = vshrl.u32 %v3623, 7
    %v3625 = vsub.s32 7, %v3624
    %v3626 = vrot.slane %v1576, %v3625
    %v3627 = vlaneseq
    %v3628 = vshrl.u32 %v3627, 7
    %v3629 = vsub.s32 0, %v3628
    %v3630 = vrot.slane %v1577, %v3629
    %v3631 = vlaneseq
    %v3632 = vshrl.u32 %v3631, 7
    %v3633 = vsub.s32 1, %v3632
    %v3634 = vrot.slane %v1577, %v3633
    %v3635 = vlaneseq
    %v3636 = vshrl.u32 %v3635, 7
    %v3637 = vsub.s32 2, %v3636
    %v3638 = vrot.slane %v1577, %v3637
    %v3639 = vlaneseq
    %v3640 = vshrl.u32 %v3639, 7
    %v3641 = vsub.s32 3, %v3640
    %v3642 = vrot.slane %v1577, %v3641
    %v3643 = vlaneseq
    %v3644 = vshrl.u32 %v3643, 7
    %v3645 = vsub.s32 4, %v3644
    %v3646 = vrot.slane %v1577, %v3645
    %v3647 = vlaneseq
    %v3648 = vshrl.u32 %v3647, 7
    %v3649 = vsub.s32 5, %v3648
    %v3650 = vrot.slane %v1577, %v3649
    %v3651 = vlaneseq
    %v3652 = vshrl.u32 %v3651, 7
    %v3653 = vsub.s32 6, %v3652
    %v3654 = vrot.slane %v1577, %v3653
    %v3655 = vlaneseq
    %v3656 = vshrl.u32 %v3655, 7
    %v3657 = vsub.s32 7, %v3656
    %v3658 = vrot.slane %v1577, %v3657
    %v3659 = vlaneseq
    %v3660 = vshrl.u32 %v3659, 7
    %v3661 = vsub.s32 0, %v3660
    %v3662 = vrot.slane %v1578, %v3661
    %v3663 = vlaneseq
    %v3664 = vshrl.u32 %v3663, 7
    %v3665 = vsub.s32 1, %v3664
    %v3666 = vrot.slane %v1578, %v3665
    %v3667 = vlaneseq
    %v3668 = vshrl.u32 %v3667, 7
    %v3669 = vsub.s32 2, %v3668
    %v3670 = vrot.slane %v1578, %v3669
    %v3671 = vlaneseq
    %v3672 = vshrl.u32 %v3671, 7
    %v3673 = vsub.s32 3, %v3672
    %v3674 = vrot.slane %v1578, %v3673
    %v3675 = vlaneseq
    %v3676 = vshrl.u32 %v3675, 7
    %v3677 = vsub.s32 4, %v3676
    %v3678 = vrot.slane %v1578, %v3677
    %v3679 = vlaneseq
    %v3680 = vshrl.u32 %v3679, 7
    %v3681 = vsub.s32 5, %v3680
    %v3682 = vrot.slane %v1578, %v3681
    %v3683 = vlaneseq
    %v3684 = vshrl.u32 %v3683, 7
    %v3685 = vsub.s32 6, %v3684
    %v3686 = vrot.slane %v1578, %v3685
    %v3687 = vlaneseq
    %v3688 = vshrl.u32 %v3687, 7
    %v3689 = vsub.s32 7, %v3688
    %v3690 = vrot.slane %v1578, %v3689
    %v3691 = vcombine.low %v1646, %v1650
    %v3692 = vcombine.low %v1654, %v1658
    %v3693 = vcombine.low %v1662, %v1666
    %v3694 = vcombine.low %v1670, %v1674
    %v3696 = vunpack.c.l.s4 1966171168
    %v3697 = vunpack.c.0.s8 %v3696
    %v3698 = vlaneseq
    %v3699 = vshrl.u32 %v3698, 7
    %v3700 = vsub.s32 %v3697, %v3699
    %v3701 = vrot.slane %v3691, %v3700
    %v3703 = vunpack.c.l.s4 1966171168
    %v3704 = vunpack.c.0.s8 %v3703
    %v3705 = vlaneseq
    %v3706 = vshrl.u32 %v3705, 7
    %v3707 = vsub.s32 %v3704, %v3706
    %v3708 = vrot.slane %v3692, %v3707
    %v3710 = vunpack.c.l.s4 1966171168
    %v3711 = vunpack.c.0.s8 %v3710
    %v3712 = vlaneseq
    %v3713 = vshrl.u32 %v3712, 7
    %v3714 = vsub.s32 %v3711, %v3713
    %v3715 = vrot.slane %v3693, %v3714
    %v3717 = vunpack.c.l.s4 1966171168
    %v3718 = vunpack.c.0.s8 %v3717
    %v3719 = vlaneseq
    %v3720 = vshrl.u32 %v3719, 7
    %v3721 = vsub.s32 %v3718, %v3720
    %v3722 = vrot.slane %v3694, %v3721
    %v3723 = vcombine.low %v3701, %v3708
    %v3724 = vcombine.low %v3715, %v3722
    %v3726 = vunpack.c.l.s4 1966171168
    %v3727 = vunpack.c.0.s8 %v3726
    %v3728 = vlaneseq
    %v3729 = vshrl.u32 %v3728, 7
    %v3730 = vsub.s32 %v3727, %v3729
    %v3731 = vrot.slane %v3723, %v3730
    %v3733 = vunpack.c.l.s4 1966171168
    %v3734 = vunpack.c.0.s8 %v3733
    %v3735 = vlaneseq
    %v3736 = vshrl.u32 %v3735, 7
    %v3737 = vsub.s32 %v3734, %v3736
    %v3738 = vrot.slane %v3724, %v3737
    %v3739 = vcombine.low %v3731, %v3738
    %v3740 = vcombine.low %v1678, %v1682
    %v3741 = vcombine.low %v1686, %v1690
    %v3742 = vcombine.low %v1694, %v1698
    %v3743 = vcombine.low %v1702, %v1706
    %v3745 = vunpack.c.l.s4 1966171168
    %v3746 = vunpack.c.0.s8 %v3745
    %v3747 = vlaneseq
    %v3748 = vshrl.u32 %v3747, 7
    %v3749 = vsub.s32 %v3746, %v3748
    %v3750 = vrot.slane %v3740, %v3749
    %v3752 = vunpack.c.l.s4 1966171168
    %v3753 = vunpack.c.0.s8 %v3752
    %v3754 = vlaneseq
    %v3755 = vshrl.u32 %v3754, 7
    %v3756 = vsub.s32 %v3753, %v3755
    %v3757 = vrot.slane %v3741, %v3756
    %v3759 = vunpack.c.l.s4 1966171168
    %v3760 = vunpack.c.0.s8 %v3759
    %v3761 = vlaneseq
    %v3762 = vshrl.u32 %v3761, 7
    %v3763 = vsub.s32 %v3760, %v3762
    %v3764 = vrot.slane %v3742, %v3763
    %v3766 = vunpack.c.l.s4 1966171168
    %v3767 = vunpack.c.0.s8 %v3766
    %v3768 = vlaneseq
    %v3769 = vshrl.u32 %v3768, 7
    %v3770 = vsub.s32 %v3767, %v3769
    %v3771 = vrot.slane %v3743, %v3770
    %v3772 = vcombine.low %v3750, %v3757
    %v3773 = vcombine.low %v3764, %v3771
    %v3775 = vunpack.c.l.s4 1966171168
    %v3776 = vunpack.c.0.s8 %v3775
    %v3777 = vlaneseq
    %v3778 = vshrl.u32 %v3777, 7
    %v3779 = vsub.s32 %v3776, %v3778
    %v3780 = vrot.slane %v3772, %v3779
    %v3782 = vunpack.c.l.s4 1966171168
    %v3783 = vunpack.c.0.s8 %v3782
    %v3784 = vlaneseq
    %v3785 = vshrl.u32 %v3784, 7
    %v3786 = vsub.s32 %v3783, %v3785
    %v3787 = vrot.slane %v3773, %v3786
    %v3788 = vcombine.low %v3780, %v3787
    %v3789 = vcombine.low %v1710, %v1714
    %v3790 = vcombine.low %v1718, %v1722
    %v3791 = vcombine.low %v1726, %v1730
    %v3792 = vcombine.low %v1734, %v1738
    %v3794 = vunpack.c.l.s4 1966171168
    %v3795 = vunpack.c.0.s8 %v3794
    %v3796 = vlaneseq
    %v3797 = vshrl.u32 %v3796, 7
    %v3798 = vsub.s32 %v3795, %v3797
    %v3799 = vrot.slane %v3789, %v3798
    %v3801 = vunpack.c.l.s4 1966171168
    %v3802 = vunpack.c.0.s8 %v3801
    %v3803 = vlaneseq
    %v3804 = vshrl.u32 %v3803, 7
    %v3805 = vsub.s32 %v3802, %v3804
    %v3806 = vrot.slane %v3790, %v3805
    %v3808 = vunpack.c.l.s4 1966171168
    %v3809 = vunpack.c.0.s8 %v3808
    %v3810 = vlaneseq
    %v3811 = vshrl.u32 %v3810, 7
    %v3812 = vsub.s32 %v3809, %v3811
    %v3813 = vrot.slane %v3791, %v3812
    %v3815 = vunpack.c.l.s4 1966171168
    %v3816 = vunpack.c.0.s8 %v3815
    %v3817 = vlaneseq
    %v3818 = vshrl.u32 %v3817, 7
    %v3819 = vsub.s32 %v3816, %v3818
    %v3820 = vrot.slane %v3792, %v3819
    %v3821 = vcombine.low %v3799, %v3806
    %v3822 = vcombine.low %v3813, %v3820
    %v3824 = vunpack.c.l.s4 1966171168
    %v3825 = vunpack.c.0.s8 %v3824
    %v3826 = vlaneseq
    %v3827 = vshrl.u32 %v3826, 7
    %v3828 = vsub.s32 %v3825, %v3827
    %v3829 = vrot.slane %v3821, %v3828
    %v3831 = vunpack.c.l.s4 1966171168
    %v3832 = vunpack.c.0.s8 %v3831
    %v3833 = vlaneseq
    %v3834 = vshrl.u32 %v3833, 7
    %v3835 = vsub.s32 %v3832, %v3834
    %v3836 = vrot.slane %v3822, %v3835
    %v3837 = vcombine.low %v3829, %v3836
    %v3838 = vcombine.low %v1742, %v1746
    %v3839 = vcombine.low %v1750, %v1754
    %v3840 = vcombine.low %v1758, %v1762
    %v3841 = vcombine.low %v1766, %v1770
    %v3843 = vunpack.c.l.s4 1966171168
    %v3844 = vunpack.c.0.s8 %v3843
    %v3845 = vlaneseq
    %v3846 = vshrl.u32 %v3845, 7
    %v3847 = vsub.s32 %v3844, %v3846
    %v3848 = vrot.slane %v3838, %v3847
    %v3850 = vunpack.c.l.s4 1966171168
    %v3851 = vunpack.c.0.s8 %v3850
    %v3852 = vlaneseq
    %v3853 = vshrl.u32 %v3852, 7
    %v3854 = vsub.s32 %v3851, %v3853
    %v3855 = vrot.slane %v3839, %v3854
    %v3857 = vunpack.c.l.s4 1966171168
    %v3858 = vunpack.c.0.s8 %v3857
    %v3859 = vlaneseq
    %v3860 = vshrl.u32 %v3859, 7
    %v3861 = vsub.s32 %v3858, %v3860
    %v3862 = vrot.slane %v3840, %v3861
    %v3864 = vunpack.c.l.s4 1966171168
    %v3865 = vunpack.c.0.s8 %v3864
    %v3866 = vlaneseq
    %v3867 = vshrl.u32 %v3866, 7
    %v3868 = vsub.s32 %v3865, %v3867
    %v3869 = vrot.slane %v3841, %v3868
    %v3870 = vcombine.low %v3848, %v3855
    %v3871 = vcombine.low %v3862, %v3869
    %v3873 = vunpack.c.l.s4 1966171168
    %v3874 = vunpack.c.0.s8 %v3873
    %v3875 = vlaneseq
    %v3876 = vshrl.u32 %v3875, 7
    %v3877 = vsub.s32 %v3874, %v3876
    %v3878 = vrot.slane %v3870, %v3877
    %v3880 = vunpack.c.l.s4 1966171168
    %v3881 = vunpack.c.0.s8 %v3880
    %v3882 = vlaneseq
    %v3883 = vshrl.u32 %v3882, 7
    %v3884 = vsub.s32 %v3881, %v3883
    %v3885 = vrot.slane %v3871, %v3884
    %v3886 = vcombine.low %v3878, %v3885
    %v3887 = vcombine.low %v1774, %v1778
    %v3888 = vcombine.low %v1782, %v1786
    %v3889 = vcombine.low %v1790, %v1794
    %v3890 = vcombine.low %v1798, %v1802
    %v3892 = vunpack.c.l.s4 1966171168
    %v3893 = vunpack.c.0.s8 %v3892
    %v3894 = vlaneseq
    %v3895 = vshrl.u32 %v3894, 7
    %v3896 = vsub.s32 %v3893, %v3895
    %v3897 = vrot.slane %v3887, %v3896
    %v3899 = vunpack.c.l.s4 1966171168
    %v3900 = vunpack.c.0.s8 %v3899
    %v3901 = vlaneseq
    %v3902 = vshrl.u32 %v3901, 7
    %v3903 = vsub.s32 %v3900, %v3902
    %v3904 = vrot.slane %v3888, %v3903
    %v3906 = vunpack.c.l.s4 1966171168
    %v3907 = vunpack.c.0.s8 %v3906
    %v3908 = vlaneseq
    %v3909 = vshrl.u32 %v3908, 7
    %v3910 = vsub.s32 %v3907, %v3909
    %v3911 = vrot.slane %v3889, %v3910
    %v3913 = vunpack.c.l.s4 1966171168
    %v3914 = vunpack.c.0.s8 %v3913
    %v3915 = vlaneseq
    %v3916 = vshrl.u32 %v3915, 7
    %v3917 = vsub.s32 %v3914, %v3916
    %v3918 = vrot.slane %v3890, %v3917
    %v3919 = vcombine.low %v3897, %v3904
    %v3920 = vcombine.low %v3911, %v3918
    %v3922 = vunpack.c.l.s4 1966171168
    %v3923 = vunpack.c.0.s8 %v3922
    %v3924 = vlaneseq
    %v3925 = vshrl.u32 %v3924, 7
    %v3926 = vsub.s32 %v3923, %v3925
    %v3927 = vrot.slane %v3919, %v3926
    %v3929 = vunpack.c.l.s4 1966171168
    %v3930 = vunpack.c.0.s8 %v3929
    %v3931 = vlaneseq
    %v3932 = vshrl.u32 %v3931, 7
    %v3933 = vsub.s32 %v3930, %v3932
    %v3934 = vrot.slane %v3920, %v3933
    %v3935 = vcombine.low %v3927, %v3934
    %v3936 = vcombine.low %v1806, %v1810
    %v3937 = vcombine.low %v1814, %v1818
    %v3938 = vcombine.low %v1822, %v1826
    %v3939 = vcombine.low %v1830, %v1834
    %v3941 = vunpack.c.l.s4 1966171168
    %v3942 = vunpack.c.0.s8 %v3941
    %v3943 = vlaneseq
    %v3944 = vshrl.u32 %v3943, 7
    %v3945 = vsub.s32 %v3942, %v3944
    %v3946 = vrot.slane %v3936, %v3945
    %v3948 = vunpack.c.l.s4 1966171168
    %v3949 = vunpack.c.0.s8 %v3948
    %v3950 = vlaneseq
    %v3951 = vshrl.u32 %v3950, 7
    %v3952 = vsub.s32 %v3949, %v3951
    %v3953 = vrot.slane %v3937, %v3952
    %v3955 = vunpack.c.l.s4 1966171168
    %v3956 = vunpack.c.0.s8 %v3955
    %v3957 = vlaneseq
    %v3958 = vshrl.u32 %v3957, 7
    %v3959 = vsub.s32 %v3956, %v3958
    %v3960 = vrot.slane %v3938, %v3959
    %v3962 = vunpack.c.l.s4 1966171168
    %v3963 = vunpack.c.0.s8 %v3962
    %v3964 = vlaneseq
    %v3965 = vshrl.u32 %v3964, 7
    %v3966 = vsub.s32 %v3963, %v3965
    %v3967 = vrot.slane %v3939, %v3966
    %v3968 = vcombine.low %v3946, %v3953
    %v3969 = vcombine.low %v3960, %v3967
    %v3971 = vunpack.c.l.s4 1966171168
    %v3972 = vunpack.c.0.s8 %v3971
    %v3973 = vlaneseq
    %v3974 = vshrl.u32 %v3973, 7
    %v3975 = vsub.s32 %v3972, %v3974
    %v3976 = vrot.slane %v3968, %v3975
    %v3978 = vunpack.c.l.s4 1966171168
    %v3979 = vunpack.c.0.s8 %v3978
    %v3980 = vlaneseq
    %v3981 = vshrl.u32 %v3980, 7
    %v3982 = vsub.s32 %v3979, %v3981
    %v3983 = vrot.slane %v3969, %v3982
    %v3984 = vcombine.low %v3976, %v3983
    %v3985 = vcombine.low %v1838, %v1842
    %v3986 = vcombine.low %v1846, %v1850
    %v3987 = vcombine.low %v1854, %v1858
    %v3988 = vcombine.low %v1862, %v1866
    %v3990 = vunpack.c.l.s4 1966171168
    %v3991 = vunpack.c.0.s8 %v3990
    %v3992 = vlaneseq
    %v3993 = vshrl.u32 %v3992, 7
    %v3994 = vsub.s32 %v3991, %v3993
    %v3995 = vrot.slane %v3985, %v3994
    %v3997 = vunpack.c.l.s4 1966171168
    %v3998 = vunpack.c.0.s8 %v3997
    %v3999 = vlaneseq
    %v4000 = vshrl.u32 %v3999, 7
    %v4001 = vsub.s32 %v3998, %v4000
    %v4002 = vrot.slane %v3986, %v4001
    %v4004 = vunpack.c.l.s4 1966171168
    %v4005 = vunpack.c.0.s8 %v4004
    %v4006 = vlaneseq
    %v4007 = vshrl.u32 %v4006, 7
    %v4008 = vsub.s32 %v4005, %v4007
    %v4009 = vrot.slane %v3987, %v4008
    %v4011 = vunpack.c.l.s4 1966171168
    %v4012 = vunpack.c.0.s8 %v4011
    %v4013 = vlaneseq
    %v4014 = vshrl.u32 %v4013, 7
    %v4015 = vsub.s32 %v4012, %v4014
    %v4016 = vrot.slane %v3988, %v4015
    %v4017 = vcombine.low %v3995, %v4002
    %v4018 = vcombine.low %v4009, %v4016
    %v4020 = vunpack.c.l.s4 1966171168
    %v4021 = vunpack.c.0.s8 %v4020
    %v4022 = vlaneseq
    %v4023 = vshrl.u32 %v4022, 7
    %v4024 = vsub.s32 %v4021, %v4023
    %v4025 = vrot.slane %v4017, %v4024
    %v4027 = vunpack.c.l.s4 1966171168
    %v4028 = vunpack.c.0.s8 %v4027
    %v4029 = vlaneseq
    %v4030 = vshrl.u32 %v4029, 7
    %v4031 = vsub.s32 %v4028, %v4030
    %v4032 = vrot.slane %v4018, %v4031
    %v4033 = vcombine.low %v4025, %v4032
    %v4034 = vcombine.low %v1870, %v1874
    %v4035 = vcombine.low %v1878, %v1882
    %v4036 = vcombine.low %v1886, %v1890
    %v4037 = vcombine.low %v1894, %v1898
    %v4039 = vunpack.c.l.s4 1966171168
    %v4040 = vunpack.c.0.s8 %v4039
    %v4041 = vlaneseq
    %v4042 = vshrl.u32 %v4041, 7
    %v4043 = vsub.s32 %v4040, %v4042
    %v4044 = vrot.slane %v4034, %v4043
    %v4046 = vunpack.c.l.s4 1966171168
    %v4047 = vunpack.c.0.s8 %v4046
    %v4048 = vlaneseq
    %v4049 = vshrl.u32 %v4048, 7
    %v4050 = vsub.s32 %v4047, %v4049
    %v4051 = vrot.slane %v4035, %v4050
    %v4053 = vunpack.c.l.s4 1966171168
    %v4054 = vunpack.c.0.s8 %v4053
    %v4055 = vlaneseq
    %v4056 = vshrl.u32 %v4055, 7
    %v4057 = vsub.s32 %v4054, %v4056
    %v4058 = vrot.slane %v4036, %v4057
    %v4060 = vunpack.c.l.s4 1966171168
    %v4061 = vunpack.c.0.s8 %v4060
    %v4062 = vlaneseq
    %v4063 = vshrl.u32 %v4062, 7
    %v4064 = vsub.s32 %v4061, %v4063
    %v4065 = vrot.slane %v4037, %v4064
    %v4066 = vcombine.low %v4044, %v4051
    %v4067 = vcombine.low %v4058, %v4065
    %v4069 = vunpack.c.l.s4 1966171168
    %v4070 = vunpack.c.0.s8 %v4069
    %v4071 = vlaneseq
    %v4072 = vshrl.u32 %v4071, 7
    %v4073 = vsub.s32 %v4070, %v4072
    %v4074 = vrot.slane %v4066, %v4073
    %v4076 = vunpack.c.l.s4 1966171168
    %v4077 = vunpack.c.0.s8 %v4076
    %v4078 = vlaneseq
    %v4079 = vshrl.u32 %v4078, 7
    %v4080 = vsub.s32 %v4077, %v4079
    %v4081 = vrot.slane %v4067, %v4080
    %v4082 = vcombine.low %v4074, %v4081
    %v4083 = vcombine.low %v1902, %v1906
    %v4084 = vcombine.low %v1910, %v1914
    %v4085 = vcombine.low %v1918, %v1922
    %v4086 = vcombine.low %v1926, %v1930
    %v4088 = vunpack.c.l.s4 1966171168
    %v4089 = vunpack.c.0.s8 %v4088
    %v4090 = vlaneseq
    %v4091 = vshrl.u32 %v4090, 7
    %v4092 = vsub.s32 %v4089, %v4091
    %v4093 = vrot.slane %v4083, %v4092
    %v4095 = vunpack.c.l.s4 1966171168
    %v4096 = vunpack.c.0.s8 %v4095
    %v4097 = vlaneseq
    %v4098 = vshrl.u32 %v4097, 7
    %v4099 = vsub.s32 %v4096, %v4098
    %v4100 = vrot.slane %v4084, %v4099
    %v4102 = vunpack.c.l.s4 1966171168
    %v4103 = vunpack.c.0.s8 %v4102
    %v4104 = vlaneseq
    %v4105 = vshrl.u32 %v4104, 7
    %v4106 = vsub.s32 %v4103, %v4105
    %v4107 = vrot.slane %v4085, %v4106
    %v4109 = vunpack.c.l.s4 1966171168
    %v4110 = vunpack.c.0.s8 %v4109
    %v4111 = vlaneseq
    %v4112 = vshrl.u32 %v4111, 7
    %v4113 = vsub.s32 %v4110, %v4112
    %v4114 = vrot.slane %v4086, %v4113
    %v4115 = vcombine.low %v4093, %v4100
    %v4116 = vcombine.low %v4107, %v4114
    %v4118 = vunpack.c.l.s4 1966171168
    %v4119 = vunpack.c.0.s8 %v4118
    %v4120 = vlaneseq
    %v4121 = vshrl.u32 %v4120, 7
    %v4122 = vsub.s32 %v4119, %v4121
    %v4123 = vrot.slane %v4115, %v4122
    %v4125 = vunpack.c.l.s4 1966171168
    %v4126 = vunpack.c.0.s8 %v4125
    %v4127 = vlaneseq
    %v4128 = vshrl.u32 %v4127, 7
    %v4129 = vsub.s32 %v4126, %v4128
    %v4130 = vrot.slane %v4116, %v4129
    %v4131 = vcombine.low %v4123, %v4130
    %v4132 = vcombine.low %v1934, %v1938
    %v4133 = vcombine.low %v1942, %v1946
    %v4134 = vcombine.low %v1950, %v1954
    %v4135 = vcombine.low %v1958, %v1962
    %v4137 = vunpack.c.l.s4 1966171168
    %v4138 = vunpack.c.0.s8 %v4137
    %v4139 = vlaneseq
    %v4140 = vshrl.u32 %v4139, 7
    %v4141 = vsub.s32 %v4138, %v4140
    %v4142 = vrot.slane %v4132, %v4141
    %v4144 = vunpack.c.l.s4 1966171168
    %v4145 = vunpack.c.0.s8 %v4144
    %v4146 = vlaneseq
    %v4147 = vshrl.u32 %v4146, 7
    %v4148 = vsub.s32 %v4145, %v4147
    %v4149 = vrot.slane %v4133, %v4148
    %v4151 = vunpack.c.l.s4 1966171168
    %v4152 = vunpack.c.0.s8 %v4151
    %v4153 = vlaneseq
    %v4154 = vshrl.u32 %v4153, 7
    %v4155 = vsub.s32 %v4152, %v4154
    %v4156 = vrot.slane %v4134, %v4155
    %v4158 = vunpack.c.l.s4 1966171168
    %v4159 = vunpack.c.0.s8 %v4158
    %v4160 = vlaneseq
    %v4161 = vshrl.u32 %v4160, 7
    %v4162 = vsub.s32 %v4159, %v4161
    %v4163 = vrot.slane %v4135, %v4162
    %v4164 = vcombine.low %v4142, %v4149
    %v4165 = vcombine.low %v4156, %v4163
    %v4167 = vunpack.c.l.s4 1966171168
    %v4168 = vunpack.c.0.s8 %v4167
    %v4169 = vlaneseq
    %v4170 = vshrl.u32 %v4169, 7
    %v4171 = vsub.s32 %v4168, %v4170
    %v4172 = vrot.slane %v4164, %v4171
    %v4174 = vunpack.c.l.s4 1966171168
    %v4175 = vunpack.c.0.s8 %v4174
    %v4176 = vlaneseq
    %v4177 = vshrl.u32 %v4176, 7
    %v4178 = vsub.s32 %v4175, %v4177
    %v4179 = vrot.slane %v4165, %v4178
    %v4180 = vcombine.low %v4172, %v4179
    %v4181 = vcombine.low %v1966, %v1970
    %v4182 = vcombine.low %v1974, %v1978
    %v4183 = vcombine.low %v1982, %v1986
    %v4184 = vcombine.low %v1990, %v1994
    %v4186 = vunpack.c.l.s4 1966171168
    %v4187 = vunpack.c.0.s8 %v4186
    %v4188 = vlaneseq
    %v4189 = vshrl.u32 %v4188, 7
    %v4190 = vsub.s32 %v4187, %v4189
    %v4191 = vrot.slane %v4181, %v4190
    %v4193 = vunpack.c.l.s4 1966171168
    %v4194 = vunpack.c.0.s8 %v4193
    %v4195 = vlaneseq
    %v4196 = vshrl.u32 %v4195, 7
    %v4197 = vsub.s32 %v4194, %v4196
    %v4198 = vrot.slane %v4182, %v4197
    %v4200 = vunpack.c.l.s4 1966171168
    %v4201 = vunpack.c.0.s8 %v4200
    %v4202 = vlaneseq
    %v4203 = vshrl.u32 %v4202, 7
    %v4204 = vsub.s32 %v4201, %v4203
    %v4205 = vrot.slane %v4183, %v4204
    %v4207 = vunpack.c.l.s4 1966171168
    %v4208 = vunpack.c.0.s8 %v4207
    %v4209 = vlaneseq
    %v4210 = vshrl.u32 %v4209, 7
    %v4211 = vsub.s32 %v4208, %v4210
    %v4212 = vrot.slane %v4184, %v4211
    %v4213 = vcombine.low %v4191, %v4198
    %v4214 = vcombine.low %v4205, %v4212
    %v4216 = vunpack.c.l.s4 1966171168
    %v4217 = vunpack.c.0.s8 %v4216
    %v4218 = vlaneseq
    %v4219 = vshrl.u32 %v4218, 7
    %v4220 = vsub.s32 %v4217, %v4219
    %v4221 = vrot.slane %v4213, %v4220
    %v4223 = vunpack.c.l.s4 1966171168
    %v4224 = vunpack.c.0.s8 %v4223
    %v4225 = vlaneseq
    %v4226 = vshrl.u32 %v4225, 7
    %v4227 = vsub.s32 %v4224, %v4226
    %v4228 = vrot.slane %v4214, %v4227
    %v4229 = vcombine.low %v4221, %v4228
    %v4230 = vcombine.low %v1998, %v2002
    %v4231 = vcombine.low %v2006, %v2010
    %v4232 = vcombine.low %v2014, %v2018
    %v4233 = vcombine.low %v2022, %v2026
    %v4235 = vunpack.c.l.s4 1966171168
    %v4236 = vunpack.c.0.s8 %v4235
    %v4237 = vlaneseq
    %v4238 = vshrl.u32 %v4237, 7
    %v4239 = vsub.s32 %v4236, %v4238
    %v4240 = vrot.slane %v4230, %v4239
    %v4242 = vunpack.c.l.s4 1966171168
    %v4243 = vunpack.c.0.s8 %v4242
    %v4244 = vlaneseq
    %v4245 = vshrl.u32 %v4244, 7
    %v4246 = vsub.s32 %v4243, %v4245
    %v4247 = vrot.slane %v4231, %v4246
    %v4249 = vunpack.c.l.s4 1966171168
    %v4250 = vunpack.c.0.s8 %v4249
    %v4251 = vlaneseq
    %v4252 = vshrl.u32 %v4251, 7
    %v4253 = vsub.s32 %v4250, %v4252
    %v4254 = vrot.slane %v4232, %v4253
    %v4256 = vunpack.c.l.s4 1966171168
    %v4257 = vunpack.c.0.s8 %v4256
    %v4258 = vlaneseq
    %v4259 = vshrl.u32 %v4258, 7
    %v4260 = vsub.s32 %v4257, %v4259
    %v4261 = vrot.slane %v4233, %v4260
    %v4262 = vcombine.low %v4240, %v4247
    %v4263 = vcombine.low %v4254, %v4261
    %v4265 = vunpack.c.l.s4 1966171168
    %v4266 = vunpack.c.0.s8 %v4265
    %v4267 = vlaneseq
    %v4268 = vshrl.u32 %v4267, 7
    %v4269 = vsub.s32 %v4266, %v4268
    %v4270 = vrot.slane %v4262, %v4269
    %v4272 = vunpack.c.l.s4 1966171168
    %v4273 = vunpack.c.0.s8 %v4272
    %v4274 = vlaneseq
    %v4275 = vshrl.u32 %v4274, 7
    %v4276 = vsub.s32 %v4273, %v4275
    %v4277 = vrot.slane %v4263, %v4276
    %v4278 = vcombine.low %v4270, %v4277
    %v4279 = vcombine.low %v2030, %v2034
    %v4280 = vcombine.low %v2038, %v2042
    %v4281 = vcombine.low %v2046, %v2050
    %v4282 = vcombine.low %v2054, %v2058
    %v4284 = vunpack.c.l.s4 1966171168
    %v4285 = vunpack.c.0.s8 %v4284
    %v4286 = vlaneseq
    %v4287 = vshrl.u32 %v4286, 7
    %v4288 = vsub.s32 %v4285, %v4287
    %v4289 = vrot.slane %v4279, %v4288
    %v4291 = vunpack.c.l.s4 1966171168
    %v4292 = vunpack.c.0.s8 %v4291
    %v4293 = vlaneseq
    %v4294 = vshrl.u32 %v4293, 7
    %v4295 = vsub.s32 %v4292, %v4294
    %v4296 = vrot.slane %v4280, %v4295
    %v4298 = vunpack.c.l.s4 1966171168
    %v4299 = vunpack.c.0.s8 %v4298
    %v4300 = vlaneseq
    %v4301 = vshrl.u32 %v4300, 7
    %v4302 = vsub.s32 %v4299, %v4301
    %v4303 = vrot.slane %v4281, %v4302
    %v4305 = vunpack.c.l.s4 1966171168
    %v4306 = vunpack.c.0.s8 %v4305
    %v4307 = vlaneseq
    %v4308 = vshrl.u32 %v4307, 7
    %v4309 = vsub.s32 %v4306, %v4308
    %v4310 = vrot.slane %v4282, %v4309
    %v4311 = vcombine.low %v4289, %v4296
    %v4312 = vcombine.low %v4303, %v4310
    %v4314 = vunpack.c.l.s4 1966171168
    %v4315 = vunpack.c.0.s8 %v4314
    %v4316 = vlaneseq
    %v4317 = vshrl.u32 %v4316, 7
    %v4318 = vsub.s32 %v4315, %v4317
    %v4319 = vrot.slane %v4311, %v4318
    %v4321 = vunpack.c.l.s4 1966171168
    %v4322 = vunpack.c.0.s8 %v4321
    %v4323 = vlaneseq
    %v4324 = vshrl.u32 %v4323, 7
    %v4325 = vsub.s32 %v4322, %v4324
    %v4326 = vrot.slane %v4312, %v4325
    %v4327 = vcombine.low %v4319, %v4326
    %v4328 = vcombine.low %v2062, %v2066
    %v4329 = vcombine.low %v2070, %v2074
    %v4330 = vcombine.low %v2078, %v2082
    %v4331 = vcombine.low %v2086, %v2090
    %v4333 = vunpack.c.l.s4 1966171168
    %v4334 = vunpack.c.0.s8 %v4333
    %v4335 = vlaneseq
    %v4336 = vshrl.u32 %v4335, 7
    %v4337 = vsub.s32 %v4334, %v4336
    %v4338 = vrot.slane %v4328, %v4337
    %v4340 = vunpack.c.l.s4 1966171168
    %v4341 = vunpack.c.0.s8 %v4340
    %v4342 = vlaneseq
    %v4343 = vshrl.u32 %v4342, 7
    %v4344 = vsub.s32 %v4341, %v4343
    %v4345 = vrot.slane %v4329, %v4344
    %v4347 = vunpack.c.l.s4 1966171168
    %v4348 = vunpack.c.0.s8 %v4347
    %v4349 = vlaneseq
    %v4350 = vshrl.u32 %v4349, 7
    %v4351 = vsub.s32 %v4348, %v4350
    %v4352 = vrot.slane %v4330, %v4351
    %v4354 = vunpack.c.l.s4 1966171168
    %v4355 = vunpack.c.0.s8 %v4354
    %v4356 = vlaneseq
    %v4357 = vshrl.u32 %v4356, 7
    %v4358 = vsub.s32 %v4355, %v4357
    %v4359 = vrot.slane %v4331, %v4358
    %v4360 = vcombine.low %v4338, %v4345
    %v4361 = vcombine.low %v4352, %v4359
    %v4363 = vunpack.c.l.s4 1966171168
    %v4364 = vunpack.c.0.s8 %v4363
    %v4365 = vlaneseq
    %v4366 = vshrl.u32 %v4365, 7
    %v4367 = vsub.s32 %v4364, %v4366
    %v4368 = vrot.slane %v4360, %v4367
    %v4370 = vunpack.c.l.s4 1966171168
    %v4371 = vunpack.c.0.s8 %v4370
    %v4372 = vlaneseq
    %v4373 = vshrl.u32 %v4372, 7
    %v4374 = vsub.s32 %v4371, %v4373
    %v4375 = vrot.slane %v4361, %v4374
    %v4376 = vcombine.low %v4368, %v4375
    %v4377 = vcombine.low %v2094, %v2098
    %v4378 = vcombine.low %v2102, %v2106
    %v4379 = vcombine.low %v2110, %v2114
    %v4380 = vcombine.low %v2118, %v2122
    %v4382 = vunpack.c.l.s4 1966171168
    %v4383 = vunpack.c.0.s8 %v4382
    %v4384 = vlaneseq
    %v4385 = vshrl.u32 %v4384, 7
    %v4386 = vsub.s32 %v4383, %v4385
    %v4387 = vrot.slane %v4377, %v4386
    %v4389 = vunpack.c.l.s4 1966171168
    %v4390 = vunpack.c.0.s8 %v4389
    %v4391 = vlaneseq
    %v4392 = vshrl.u32 %v4391, 7
    %v4393 = vsub.s32 %v4390, %v4392
    %v4394 = vrot.slane %v4378, %v4393
    %v4396 = vunpack.c.l.s4 1966171168
    %v4397 = vunpack.c.0.s8 %v4396
    %v4398 = vlaneseq
    %v4399 = vshrl.u32 %v4398, 7
    %v4400 = vsub.s32 %v4397, %v4399
    %v4401 = vrot.slane %v4379, %v4400
    %v4403 = vunpack.c.l.s4 1966171168
    %v4404 = vunpack.c.0.s8 %v4403
    %v4405 = vlaneseq
    %v4406 = vshrl.u32 %v4405, 7
    %v4407 = vsub.s32 %v4404, %v4406
    %v4408 = vrot.slane %v4380, %v4407
    %v4409 = vcombine.low %v4387, %v4394
    %v4410 = vcombine.low %v4401, %v4408
    %v4412 = vunpack.c.l.s4 1966171168
    %v4413 = vunpack.c.0.s8 %v4412
    %v4414 = vlaneseq
    %v4415 = vshrl.u32 %v4414, 7
    %v4416 = vsub.s32 %v4413, %v4415
    %v4417 = vrot.slane %v4409, %v4416
    %v4419 = vunpack.c.l.s4 1966171168
    %v4420 = vunpack.c.0.s8 %v4419
    %v4421 = vlaneseq
    %v4422 = vshrl.u32 %v4421, 7
    %v4423 = vsub.s32 %v4420, %v4422
    %v4424 = vrot.slane %v4410, %v4423
    %v4425 = vcombine.low %v4417, %v4424
    %v4426 = vcombine.low %v2126, %v2130
    %v4427 = vcombine.low %v2134, %v2138
    %v4428 = vcombine.low %v2142, %v2146
    %v4429 = vcombine.low %v2150, %v2154
    %v4431 = vunpack.c.l.s4 1966171168
    %v4432 = vunpack.c.0.s8 %v4431
    %v4433 = vlaneseq
    %v4434 = vshrl.u32 %v4433, 7
    %v4435 = vsub.s32 %v4432, %v4434
    %v4436 = vrot.slane %v4426, %v4435
    %v4438 = vunpack.c.l.s4 1966171168
    %v4439 = vunpack.c.0.s8 %v4438
    %v4440 = vlaneseq
    %v4441 = vshrl.u32 %v4440, 7
    %v4442 = vsub.s32 %v4439, %v4441
    %v4443 = vrot.slane %v4427, %v4442
    %v4445 = vunpack.c.l.s4 1966171168
    %v4446 = vunpack.c.0.s8 %v4445
    %v4447 = vlaneseq
    %v4448 = vshrl.u32 %v4447, 7
    %v4449 = vsub.s32 %v4446, %v4448
    %v4450 = vrot.slane %v4428, %v4449
    %v4452 = vunpack.c.l.s4 1966171168
    %v4453 = vunpack.c.0.s8 %v4452
    %v4454 = vlaneseq
    %v4455 = vshrl.u32 %v4454, 7
    %v4456 = vsub.s32 %v4453, %v4455
    %v4457 = vrot.slane %v4429, %v4456
    %v4458 = vcombine.low %v4436, %v4443
    %v4459 = vcombine.low %v4450, %v4457
    %v4461 = vunpack.c.l.s4 1966171168
    %v4462 = vunpack.c.0.s8 %v4461
    %v4463 = vlaneseq
    %v4464 = vshrl.u32 %v4463, 7
    %v4465 = vsub.s32 %v4462, %v4464
    %v4466 = vrot.slane %v4458, %v4465
    %v4468 = vunpack.c.l.s4 1966171168
    %v4469 = vunpack.c.0.s8 %v4468
    %v4470 = vlaneseq
    %v4471 = vshrl.u32 %v4470, 7
    %v4472 = vsub.s32 %v4469, %v4471
    %v4473 = vrot.slane %v4459, %v4472
    %v4474 = vcombine.low %v4466, %v4473
    %v4475 = vcombine.low %v2158, %v2162
    %v4476 = vcombine.low %v2166, %v2170
    %v4477 = vcombine.low %v2174, %v2178
    %v4478 = vcombine.low %v2182, %v2186
    %v4480 = vunpack.c.l.s4 1966171168
    %v4481 = vunpack.c.0.s8 %v4480
    %v4482 = vlaneseq
    %v4483 = vshrl.u32 %v4482, 7
    %v4484 = vsub.s32 %v4481, %v4483
    %v4485 = vrot.slane %v4475, %v4484
    %v4487 = vunpack.c.l.s4 1966171168
    %v4488 = vunpack.c.0.s8 %v4487
    %v4489 = vlaneseq
    %v4490 = vshrl.u32 %v4489, 7
    %v4491 = vsub.s32 %v4488, %v4490
    %v4492 = vrot.slane %v4476, %v4491
    %v4494 = vunpack.c.l.s4 1966171168
    %v4495 = vunpack.c.0.s8 %v4494
    %v4496 = vlaneseq
    %v4497 = vshrl.u32 %v4496, 7
    %v4498 = vsub.s32 %v4495, %v4497
    %v4499 = vrot.slane %v4477, %v4498
    %v4501 = vunpack.c.l.s4 1966171168
    %v4502 = vunpack.c.0.s8 %v4501
    %v4503 = vlaneseq
    %v4504 = vshrl.u32 %v4503, 7
    %v4505 = vsub.s32 %v4502, %v4504
    %v4506 = vrot.slane %v4478, %v4505
    %v4507 = vcombine.low %v4485, %v4492
    %v4508 = vcombine.low %v4499, %v4506
    %v4510 = vunpack.c.l.s4 1966171168
    %v4511 = vunpack.c.0.s8 %v4510
    %v4512 = vlaneseq
    %v4513 = vshrl.u32 %v4512, 7
    %v4514 = vsub.s32 %v4511, %v4513
    %v4515 = vrot.slane %v4507, %v4514
    %v4517 = vunpack.c.l.s4 1966171168
    %v4518 = vunpack.c.0.s8 %v4517
    %v4519 = vlaneseq
    %v4520 = vshrl.u32 %v4519, 7
    %v4521 = vsub.s32 %v4518, %v4520
    %v4522 = vrot.slane %v4508, %v4521
    %v4523 = vcombine.low %v4515, %v4522
    %v4524 = vcombine.low %v2190, %v2194
    %v4525 = vcombine.low %v2198, %v2202
    %v4526 = vcombine.low %v2206, %v2210
    %v4527 = vcombine.low %v2214, %v2218
    %v4529 = vunpack.c.l.s4 1966171168
    %v4530 = vunpack.c.0.s8 %v4529
    %v4531 = vlaneseq
    %v4532 = vshrl.u32 %v4531, 7
    %v4533 = vsub.s32 %v4530, %v4532
    %v4534 = vrot.slane %v4524, %v4533
    %v4536 = vunpack.c.l.s4 1966171168
    %v4537 = vunpack.c.0.s8 %v4536
    %v4538 = vlaneseq
    %v4539 = vshrl.u32 %v4538, 7
    %v4540 = vsub.s32 %v4537, %v4539
    %v4541 = vrot.slane %v4525, %v4540
    %v4543 = vunpack.c.l.s4 1966171168
    %v4544 = vunpack.c.0.s8 %v4543
    %v4545 = vlaneseq
    %v4546 = vshrl.u32 %v4545, 7
    %v4547 = vsub.s32 %v4544, %v4546
    %v4548 = vrot.slane %v4526, %v4547
    %v4550 = vunpack.c.l.s4 1966171168
    %v4551 = vunpack.c.0.s8 %v4550
    %v4552 = vlaneseq
    %v4553 = vshrl.u32 %v4552, 7
    %v4554 = vsub.s32 %v4551, %v4553
    %v4555 = vrot.slane %v4527, %v4554
    %v4556 = vcombine.low %v4534, %v4541
    %v4557 = vcombine.low %v4548, %v4555
    %v4559 = vunpack.c.l.s4 1966171168
    %v4560 = vunpack.c.0.s8 %v4559
    %v4561 = vlaneseq
    %v4562 = vshrl.u32 %v4561, 7
    %v4563 = vsub.s32 %v4560, %v4562
    %v4564 = vrot.slane %v4556, %v4563
    %v4566 = vunpack.c.l.s4 1966171168
    %v4567 = vunpack.c.0.s8 %v4566
    %v4568 = vlaneseq
    %v4569 = vshrl.u32 %v4568, 7
    %v4570 = vsub.s32 %v4567, %v4569
    %v4571 = vrot.slane %v4557, %v4570
    %v4572 = vcombine.low %v4564, %v4571
    %v4573 = vcombine.low %v2222, %v2226
    %v4574 = vcombine.low %v2230, %v2234
    %v4575 = vcombine.low %v2238, %v2242
    %v4576 = vcombine.low %v2246, %v2250
    %v4578 = vunpack.c.l.s4 1966171168
    %v4579 = vunpack.c.0.s8 %v4578
    %v4580 = vlaneseq
    %v4581 = vshrl.u32 %v4580, 7
    %v4582 = vsub.s32 %v4579, %v4581
    %v4583 = vrot.slane %v4573, %v4582
    %v4585 = vunpack.c.l.s4 1966171168
    %v4586 = vunpack.c.0.s8 %v4585
    %v4587 = vlaneseq
    %v4588 = vshrl.u32 %v4587, 7
    %v4589 = vsub.s32 %v4586, %v4588
    %v4590 = vrot.slane %v4574, %v4589
    %v4592 = vunpack.c.l.s4 1966171168
    %v4593 = vunpack.c.0.s8 %v4592
    %v4594 = vlaneseq
    %v4595 = vshrl.u32 %v4594, 7
    %v4596 = vsub.s32 %v4593, %v4595
    %v4597 = vrot.slane %v4575, %v4596
    %v4599 = vunpack.c.l.s4 1966171168
    %v4600 = vunpack.c.0.s8 %v4599
    %v4601 = vlaneseq
    %v4602 = vshrl.u32 %v4601, 7
    %v4603 = vsub.s32 %v4600, %v4602
    %v4604 = vrot.slane %v4576, %v4603
    %v4605 = vcombine.low %v4583, %v4590
    %v4606 = vcombine.low %v4597, %v4604
    %v4608 = vunpack.c.l.s4 1966171168
    %v4609 = vunpack.c.0.s8 %v4608
    %v4610 = vlaneseq
    %v4611 = vshrl.u32 %v4610, 7
    %v4612 = vsub.s32 %v4609, %v4611
    %v4613 = vrot.slane %v4605, %v4612
    %v4615 = vunpack.c.l.s4 1966171168
    %v4616 = vunpack.c.0.s8 %v4615
    %v4617 = vlaneseq
    %v4618 = vshrl.u32 %v4617, 7
    %v4619 = vsub.s32 %v4616, %v4618
    %v4620 = vrot.slane %v4606, %v4619
    %v4621 = vcombine.low %v4613, %v4620
    %v4622 = vcombine.low %v2254, %v2258
    %v4623 = vcombine.low %v2262, %v2266
    %v4624 = vcombine.low %v2270, %v2274
    %v4625 = vcombine.low %v2278, %v2282
    %v4627 = vunpack.c.l.s4 1966171168
    %v4628 = vunpack.c.0.s8 %v4627
    %v4629 = vlaneseq
    %v4630 = vshrl.u32 %v4629, 7
    %v4631 = vsub.s32 %v4628, %v4630
    %v4632 = vrot.slane %v4622, %v4631
    %v4634 = vunpack.c.l.s4 1966171168
    %v4635 = vunpack.c.0.s8 %v4634
    %v4636 = vlaneseq
    %v4637 = vshrl.u32 %v4636, 7
    %v4638 = vsub.s32 %v4635, %v4637
    %v4639 = vrot.slane %v4623, %v4638
    %v4641 = vunpack.c.l.s4 1966171168
    %v4642 = vunpack.c.0.s8 %v4641
    %v4643 = vlaneseq
    %v4644 = vshrl.u32 %v4643, 7
    %v4645 = vsub.s32 %v4642, %v4644
    %v4646 = vrot.slane %v4624, %v4645
    %v4648 = vunpack.c.l.s4 1966171168
    %v4649 = vunpack.c.0.s8 %v4648
    %v4650 = vlaneseq
    %v4651 = vshrl.u32 %v4650, 7
    %v4652 = vsub.s32 %v4649, %v4651
    %v4653 = vrot.slane %v4625, %v4652
    %v4654 = vcombine.low %v4632, %v4639
    %v4655 = vcombine.low %v4646, %v4653
    %v4657 = vunpack.c.l.s4 1966171168
    %v4658 = vunpack.c.0.s8 %v4657
    %v4659 = vlaneseq
    %v4660 = vshrl.u32 %v4659, 7
    %v4661 = vsub.s32 %v4658, %v4660
    %v4662 = vrot.slane %v4654, %v4661
    %v4664 = vunpack.c.l.s4 1966171168
    %v4665 = vunpack.c.0.s8 %v4664
    %v4666 = vlaneseq
    %v4667 = vshrl.u32 %v4666, 7
    %v4668 = vsub.s32 %v4665, %v4667
    %v4669 = vrot.slane %v4655, %v4668
    %v4670 = vcombine.low %v4662, %v4669
    %v4671 = vcombine.low %v2286, %v2290
    %v4672 = vcombine.low %v2294, %v2298
    %v4673 = vcombine.low %v2302, %v2306
    %v4674 = vcombine.low %v2310, %v2314
    %v4676 = vunpack.c.l.s4 1966171168
    %v4677 = vunpack.c.0.s8 %v4676
    %v4678 = vlaneseq
    %v4679 = vshrl.u32 %v4678, 7
    %v4680 = vsub.s32 %v4677, %v4679
    %v4681 = vrot.slane %v4671, %v4680
    %v4683 = vunpack.c.l.s4 1966171168
    %v4684 = vunpack.c.0.s8 %v4683
    %v4685 = vlaneseq
    %v4686 = vshrl.u32 %v4685, 7
    %v4687 = vsub.s32 %v4684, %v4686
    %v4688 = vrot.slane %v4672, %v4687
    %v4690 = vunpack.c.l.s4 1966171168
    %v4691 = vunpack.c.0.s8 %v4690
    %v4692 = vlaneseq
    %v4693 = vshrl.u32 %v4692, 7
    %v4694 = vsub.s32 %v4691, %v4693
    %v4695 = vrot.slane %v4673, %v4694
    %v4697 = vunpack.c.l.s4 1966171168
    %v4698 = vunpack.c.0.s8 %v4697
    %v4699 = vlaneseq
    %v4700 = vshrl.u32 %v4699, 7
    %v4701 = vsub.s32 %v4698, %v4700
    %v4702 = vrot.slane %v4674, %v4701
    %v4703 = vcombine.low %v4681, %v4688
    %v4704 = vcombine.low %v4695, %v4702
    %v4706 = vunpack.c.l.s4 1966171168
    %v4707 = vunpack.c.0.s8 %v4706
    %v4708 = vlaneseq
    %v4709 = vshrl.u32 %v4708, 7
    %v4710 = vsub.s32 %v4707, %v4709
    %v4711 = vrot.slane %v4703, %v4710
    %v4713 = vunpack.c.l.s4 1966171168
    %v4714 = vunpack.c.0.s8 %v4713
    %v4715 = vlaneseq
    %v4716 = vshrl.u32 %v4715, 7
    %v4717 = vsub.s32 %v4714, %v4716
    %v4718 = vrot.slane %v4704, %v4717
    %v4719 = vcombine.low %v4711, %v4718
    %v4720 = vcombine.low %v2318, %v2322
    %v4721 = vcombine.low %v2326, %v2330
    %v4722 = vcombine.low %v2334, %v2338
    %v4723 = vcombine.low %v2342, %v2346
    %v4725 = vunpack.c.l.s4 1966171168
    %v4726 = vunpack.c.0.s8 %v4725
    %v4727 = vlaneseq
    %v4728 = vshrl.u32 %v4727, 7
    %v4729 = vsub.s32 %v4726, %v4728
    %v4730 = vrot.slane %v4720, %v4729
    %v4732 = vunpack.c.l.s4 1966171168
    %v4733 = vunpack.c.0.s8 %v4732
    %v4734 = vlaneseq
    %v4735 = vshrl.u32 %v4734, 7
    %v4736 = vsub.s32 %v4733, %v4735
    %v4737 = vrot.slane %v4721, %v4736
    %v4739 = vunpack.c.l.s4 1966171168
    %v4740 = vunpack.c.0.s8 %v4739
    %v4741 = vlaneseq
    %v4742 = vshrl.u32 %v4741, 7
    %v4743 = vsub.s32 %v4740, %v4742
    %v4744 = vrot.slane %v4722, %v4743
    %v4746 = vunpack.c.l.s4 1966171168
    %v4747 = vunpack.c.0.s8 %v4746
    %v4748 = vlaneseq
    %v4749 = vshrl.u32 %v4748, 7
    %v4750 = vsub.s32 %v4747, %v4749
    %v4751 = vrot.slane %v4723, %v4750
    %v4752 = vcombine.low %v4730, %v4737
    %v4753 = vcombine.low %v4744, %v4751
    %v4755 = vunpack.c.l.s4 1966171168
    %v4756 = vunpack.c.0.s8 %v4755
    %v4757 = vlaneseq
    %v4758 = vshrl.u32 %v4757, 7
    %v4759 = vsub.s32 %v4756, %v4758
    %v4760 = vrot.slane %v4752, %v4759
    %v4762 = vunpack.c.l.s4 1966171168
    %v4763 = vunpack.c.0.s8 %v4762
    %v4764 = vlaneseq
    %v4765 = vshrl.u32 %v4764, 7
    %v4766 = vsub.s32 %v4763, %v4765
    %v4767 = vrot.slane %v4753, %v4766
    %v4768 = vcombine.low %v4760, %v4767
    %v4769 = vcombine.low %v2350, %v2354
    %v4770 = vcombine.low %v2358, %v2362
    %v4771 = vcombine.low %v2366, %v2370
    %v4772 = vcombine.low %v2374, %v2378
    %v4774 = vunpack.c.l.s4 1966171168
    %v4775 = vunpack.c.0.s8 %v4774
    %v4776 = vlaneseq
    %v4777 = vshrl.u32 %v4776, 7
    %v4778 = vsub.s32 %v4775, %v4777
    %v4779 = vrot.slane %v4769, %v4778
    %v4781 = vunpack.c.l.s4 1966171168
    %v4782 = vunpack.c.0.s8 %v4781
    %v4783 = vlaneseq
    %v4784 = vshrl.u32 %v4783, 7
    %v4785 = vsub.s32 %v4782, %v4784
    %v4786 = vrot.slane %v4770, %v4785
    %v4788 = vunpack.c.l.s4 1966171168
    %v4789 = vunpack.c.0.s8 %v4788
    %v4790 = vlaneseq
    %v4791 = vshrl.u32 %v4790, 7
    %v4792 = vsub.s32 %v4789, %v4791
    %v4793 = vrot.slane %v4771, %v4792
    %v4795 = vunpack.c.l.s4 1966171168
    %v4796 = vunpack.c.0.s8 %v4795
    %v4797 = vlaneseq
    %v4798 = vshrl.u32 %v4797, 7
    %v4799 = vsub.s32 %v4796, %v4798
    %v4800 = vrot.slane %v4772, %v4799
    %v4801 = vcombine.low %v4779, %v4786
    %v4802 = vcombine.low %v4793, %v4800
    %v4804 = vunpack.c.l.s4 1966171168
    %v4805 = vunpack.c.0.s8 %v4804
    %v4806 = vlaneseq
    %v4807 = vshrl.u32 %v4806, 7
    %v4808 = vsub.s32 %v4805, %v4807
    %v4809 = vrot.slane %v4801, %v4808
    %v4811 = vunpack.c.l.s4 1966171168
    %v4812 = vunpack.c.0.s8 %v4811
    %v4813 = vlaneseq
    %v4814 = vshrl.u32 %v4813, 7
    %v4815 = vsub.s32 %v4812, %v4814
    %v4816 = vrot.slane %v4802, %v4815
    %v4817 = vcombine.low %v4809, %v4816
    %v4818 = vcombine.low %v2382, %v2386
    %v4819 = vcombine.low %v2390, %v2394
    %v4820 = vcombine.low %v2398, %v2402
    %v4821 = vcombine.low %v2406, %v2410
    %v4823 = vunpack.c.l.s4 1966171168
    %v4824 = vunpack.c.0.s8 %v4823
    %v4825 = vlaneseq
    %v4826 = vshrl.u32 %v4825, 7
    %v4827 = vsub.s32 %v4824, %v4826
    %v4828 = vrot.slane %v4818, %v4827
    %v4830 = vunpack.c.l.s4 1966171168
    %v4831 = vunpack.c.0.s8 %v4830
    %v4832 = vlaneseq
    %v4833 = vshrl.u32 %v4832, 7
    %v4834 = vsub.s32 %v4831, %v4833
    %v4835 = vrot.slane %v4819, %v4834
    %v4837 = vunpack.c.l.s4 1966171168
    %v4838 = vunpack.c.0.s8 %v4837
    %v4839 = vlaneseq
    %v4840 = vshrl.u32 %v4839, 7
    %v4841 = vsub.s32 %v4838, %v4840
    %v4842 = vrot.slane %v4820, %v4841
    %v4844 = vunpack.c.l.s4 1966171168
    %v4845 = vunpack.c.0.s8 %v4844
    %v4846 = vlaneseq
    %v4847 = vshrl.u32 %v4846, 7
    %v4848 = vsub.s32 %v4845, %v4847
    %v4849 = vrot.slane %v4821, %v4848
    %v4850 = vcombine.low %v4828, %v4835
    %v4851 = vcombine.low %v4842, %v4849
    %v4853 = vunpack.c.l.s4 1966171168
    %v4854 = vunpack.c.0.s8 %v4853
    %v4855 = vlaneseq
    %v4856 = vshrl.u32 %v4855, 7
    %v4857 = vsub.s32 %v4854, %v4856
    %v4858 = vrot.slane %v4850, %v4857
    %v4860 = vunpack.c.l.s4 1966171168
    %v4861 = vunpack.c.0.s8 %v4860
    %v4862 = vlaneseq
    %v4863 = vshrl.u32 %v4862, 7
    %v4864 = vsub.s32 %v4861, %v4863
    %v4865 = vrot.slane %v4851, %v4864
    %v4866 = vcombine.low %v4858, %v4865
    %v4867 = vcombine.low %v2414, %v2418
    %v4868 = vcombine.low %v2422, %v2426
    %v4869 = vcombine.low %v2430, %v2434
    %v4870 = vcombine.low %v2438, %v2442
    %v4872 = vunpack.c.l.s4 1966171168
    %v4873 = vunpack.c.0.s8 %v4872
    %v4874 = vlaneseq
    %v4875 = vshrl.u32 %v4874, 7
    %v4876 = vsub.s32 %v4873, %v4875
    %v4877 = vrot.slane %v4867, %v4876
    %v4879 = vunpack.c.l.s4 1966171168
    %v4880 = vunpack.c.0.s8 %v4879
    %v4881 = vlaneseq
    %v4882 = vshrl.u32 %v4881, 7
    %v4883 = vsub.s32 %v4880, %v4882
    %v4884 = vrot.slane %v4868, %v4883
    %v4886 = vunpack.c.l.s4 1966171168
    %v4887 = vunpack.c.0.s8 %v4886
    %v4888 = vlaneseq
    %v4889 = vshrl.u32 %v4888, 7
    %v4890 = vsub.s32 %v4887, %v4889
    %v4891 = vrot.slane %v4869, %v4890
    %v4893 = vunpack.c.l.s4 1966171168
    %v4894 = vunpack.c.0.s8 %v4893
    %v4895 = vlaneseq
    %v4896 = vshrl.u32 %v4895, 7
    %v4897 = vsub.s32 %v4894, %v4896
    %v4898 = vrot.slane %v4870, %v4897
    %v4899 = vcombine.low %v4877, %v4884
    %v4900 = vcombine.low %v4891, %v4898
    %v4902 = vunpack.c.l.s4 1966171168
    %v4903 = vunpack.c.0.s8 %v4902
    %v4904 = vlaneseq
    %v4905 = vshrl.u32 %v4904, 7
    %v4906 = vsub.s32 %v4903, %v4905
    %v4907 = vrot.slane %v4899, %v4906
    %v4909 = vunpack.c.l.s4 1966171168
    %v4910 = vunpack.c.0.s8 %v4909
    %v4911 = vlaneseq
    %v4912 = vshrl.u32 %v4911, 7
    %v4913 = vsub.s32 %v4910, %v4912
    %v4914 = vrot.slane %v4900, %v4913
    %v4915 = vcombine.low %v4907, %v4914
    %v4916 = vcombine.low %v2446, %v2450
    %v4917 = vcombine.low %v2454, %v2458
    %v4918 = vcombine.low %v2462, %v2466
    %v4919 = vcombine.low %v2470, %v2474
    %v4921 = vunpack.c.l.s4 1966171168
    %v4922 = vunpack.c.0.s8 %v4921
    %v4923 = vlaneseq
    %v4924 = vshrl.u32 %v4923, 7
    %v4925 = vsub.s32 %v4922, %v4924
    %v4926 = vrot.slane %v4916, %v4925
    %v4928 = vunpack.c.l.s4 1966171168
    %v4929 = vunpack.c.0.s8 %v4928
    %v4930 = vlaneseq
    %v4931 = vshrl.u32 %v4930, 7
    %v4932 = vsub.s32 %v4929, %v4931
    %v4933 = vrot.slane %v4917, %v4932
    %v4935 = vunpack.c.l.s4 1966171168
    %v4936 = vunpack.c.0.s8 %v4935
    %v4937 = vlaneseq
    %v4938 = vshrl.u32 %v4937, 7
    %v4939 = vsub.s32 %v4936, %v4938
    %v4940 = vrot.slane %v4918, %v4939
    %v4942 = vunpack.c.l.s4 1966171168
    %v4943 = vunpack.c.0.s8 %v4942
    %v4944 = vlaneseq
    %v4945 = vshrl.u32 %v4944, 7
    %v4946 = vsub.s32 %v4943, %v4945
    %v4947 = vrot.slane %v4919, %v4946
    %v4948 = vcombine.low %v4926, %v4933
    %v4949 = vcombine.low %v4940, %v4947
    %v4951 = vunpack.c.l.s4 1966171168
    %v4952 = vunpack.c.0.s8 %v4951
    %v4953 = vlaneseq
    %v4954 = vshrl.u32 %v4953, 7
    %v4955 = vsub.s32 %v4952, %v4954
    %v4956 = vrot.slane %v4948, %v4955
    %v4958 = vunpack.c.l.s4 1966171168
    %v4959 = vunpack.c.0.s8 %v4958
    %v4960 = vlaneseq
    %v4961 = vshrl.u32 %v4960, 7
    %v4962 = vsub.s32 %v4959, %v4961
    %v4963 = vrot.slane %v4949, %v4962
    %v4964 = vcombine.low %v4956, %v4963
    %v4965 = vcombine.low %v2478, %v2482
    %v4966 = vcombine.low %v2486, %v2490
    %v4967 = vcombine.low %v2494, %v2498
    %v4968 = vcombine.low %v2502, %v2506
    %v4970 = vunpack.c.l.s4 1966171168
    %v4971 = vunpack.c.0.s8 %v4970
    %v4972 = vlaneseq
    %v4973 = vshrl.u32 %v4972, 7
    %v4974 = vsub.s32 %v4971, %v4973
    %v4975 = vrot.slane %v4965, %v4974
    %v4977 = vunpack.c.l.s4 1966171168
    %v4978 = vunpack.c.0.s8 %v4977
    %v4979 = vlaneseq
    %v4980 = vshrl.u32 %v4979, 7
    %v4981 = vsub.s32 %v4978, %v4980
    %v4982 = vrot.slane %v4966, %v4981
    %v4984 = vunpack.c.l.s4 1966171168
    %v4985 = vunpack.c.0.s8 %v4984
    %v4986 = vlaneseq
    %v4987 = vshrl.u32 %v4986, 7
    %v4988 = vsub.s32 %v4985, %v4987
    %v4989 = vrot.slane %v4967, %v4988
    %v4991 = vunpack.c.l.s4 1966171168
    %v4992 = vunpack.c.0.s8 %v4991
    %v4993 = vlaneseq
    %v4994 = vshrl.u32 %v4993, 7
    %v4995 = vsub.s32 %v4992, %v4994
    %v4996 = vrot.slane %v4968, %v4995
    %v4997 = vcombine.low %v4975, %v4982
    %v4998 = vcombine.low %v4989, %v4996
    %v5000 = vunpack.c.l.s4 1966171168
    %v5001 = vunpack.c.0.s8 %v5000
    %v5002 = vlaneseq
    %v5003 = vshrl.u32 %v5002, 7
    %v5004 = vsub.s32 %v5001, %v5003
    %v5005 = vrot.slane %v4997, %v5004
    %v5007 = vunpack.c.l.s4 1966171168
    %v5008 = vunpack.c.0.s8 %v5007
    %v5009 = vlaneseq
    %v5010 = vshrl.u32 %v5009, 7
    %v5011 = vsub.s32 %v5008, %v5010
    %v5012 = vrot.slane %v4998, %v5011
    %v5013 = vcombine.low %v5005, %v5012
    %v5014 = vcombine.low %v2510, %v2514
    %v5015 = vcombine.low %v2518, %v2522
    %v5016 = vcombine.low %v2526, %v2530
    %v5017 = vcombine.low %v2534, %v2538
    %v5019 = vunpack.c.l.s4 1966171168
    %v5020 = vunpack.c.0.s8 %v5019
    %v5021 = vlaneseq
    %v5022 = vshrl.u32 %v5021, 7
    %v5023 = vsub.s32 %v5020, %v5022
    %v5024 = vrot.slane %v5014, %v5023
    %v5026 = vunpack.c.l.s4 1966171168
    %v5027 = vunpack.c.0.s8 %v5026
    %v5028 = vlaneseq
    %v5029 = vshrl.u32 %v5028, 7
    %v5030 = vsub.s32 %v5027, %v5029
    %v5031 = vrot.slane %v5015, %v5030
    %v5033 = vunpack.c.l.s4 1966171168
    %v5034 = vunpack.c.0.s8 %v5033
    %v5035 = vlaneseq
    %v5036 = vshrl.u32 %v5035, 7
    %v5037 = vsub.s32 %v5034, %v5036
    %v5038 = vrot.slane %v5016, %v5037
    %v5040 = vunpack.c.l.s4 1966171168
    %v5041 = vunpack.c.0.s8 %v5040
    %v5042 = vlaneseq
    %v5043 = vshrl.u32 %v5042, 7
    %v5044 = vsub.s32 %v5041, %v5043
    %v5045 = vrot.slane %v5017, %v5044
    %v5046 = vcombine.low %v5024, %v5031
    %v5047 = vcombine.low %v5038, %v5045
    %v5049 = vunpack.c.l.s4 1966171168
    %v5050 = vunpack.c.0.s8 %v5049
    %v5051 = vlaneseq
    %v5052 = vshrl.u32 %v5051, 7
    %v5053 = vsub.s32 %v5050, %v5052
    %v5054 = vrot.slane %v5046, %v5053
    %v5056 = vunpack.c.l.s4 1966171168
    %v5057 = vunpack.c.0.s8 %v5056
    %v5058 = vlaneseq
    %v5059 = vshrl.u32 %v5058, 7
    %v5060 = vsub.s32 %v5057, %v5059
    %v5061 = vrot.slane %v5047, %v5060
    %v5062 = vcombine.low %v5054, %v5061
    %v5063 = vcombine.low %v2542, %v2546
    %v5064 = vcombine.low %v2550, %v2554
    %v5065 = vcombine.low %v2558, %v2562
    %v5066 = vcombine.low %v2566, %v2570
    %v5068 = vunpack.c.l.s4 1966171168
    %v5069 = vunpack.c.0.s8 %v5068
    %v5070 = vlaneseq
    %v5071 = vshrl.u32 %v5070, 7
    %v5072 = vsub.s32 %v5069, %v5071
    %v5073 = vrot.slane %v5063, %v5072
    %v5075 = vunpack.c.l.s4 1966171168
    %v5076 = vunpack.c.0.s8 %v5075
    %v5077 = vlaneseq
    %v5078 = vshrl.u32 %v5077, 7
    %v5079 = vsub.s32 %v5076, %v5078
    %v5080 = vrot.slane %v5064, %v5079
    %v5082 = vunpack.c.l.s4 1966171168
    %v5083 = vunpack.c.0.s8 %v5082
    %v5084 = vlaneseq
    %v5085 = vshrl.u32 %v5084, 7
    %v5086 = vsub.s32 %v5083, %v5085
    %v5087 = vrot.slane %v5065, %v5086
    %v5089 = vunpack.c.l.s4 1966171168
    %v5090 = vunpack.c.0.s8 %v5089
    %v5091 = vlaneseq
    %v5092 = vshrl.u32 %v5091, 7
    %v5093 = vsub.s32 %v5090, %v5092
    %v5094 = vrot.slane %v5066, %v5093
    %v5095 = vcombine.low %v5073, %v5080
    %v5096 = vcombine.low %v5087, %v5094
    %v5098 = vunpack.c.l.s4 1966171168
    %v5099 = vunpack.c.0.s8 %v5098
    %v5100 = vlaneseq
    %v5101 = vshrl.u32 %v5100, 7
    %v5102 = vsub.s32 %v5099, %v5101
    %v5103 = vrot.slane %v5095, %v5102
    %v5105 = vunpack.c.l.s4 1966171168
    %v5106 = vunpack.c.0.s8 %v5105
    %v5107 = vlaneseq
    %v5108 = vshrl.u32 %v5107, 7
    %v5109 = vsub.s32 %v5106, %v5108
    %v5110 = vrot.slane %v5096, %v5109
    %v5111 = vcombine.low %v5103, %v5110
    %v5112 = vcombine.low %v2574, %v2578
    %v5113 = vcombine.low %v2582, %v2586
    %v5114 = vcombine.low %v2590, %v2594
    %v5115 = vcombine.low %v2598, %v2602
    %v5117 = vunpack.c.l.s4 1966171168
    %v5118 = vunpack.c.0.s8 %v5117
    %v5119 = vlaneseq
    %v5120 = vshrl.u32 %v5119, 7
    %v5121 = vsub.s32 %v5118, %v5120
    %v5122 = vrot.slane %v5112, %v5121
    %v5124 = vunpack.c.l.s4 1966171168
    %v5125 = vunpack.c.0.s8 %v5124
    %v5126 = vlaneseq
    %v5127 = vshrl.u32 %v5126, 7
    %v5128 = vsub.s32 %v5125, %v5127
    %v5129 = vrot.slane %v5113, %v5128
    %v5131 = vunpack.c.l.s4 1966171168
    %v5132 = vunpack.c.0.s8 %v5131
    %v5133 = vlaneseq
    %v5134 = vshrl.u32 %v5133, 7
    %v5135 = vsub.s32 %v5132, %v5134
    %v5136 = vrot.slane %v5114, %v5135
    %v5138 = vunpack.c.l.s4 1966171168
    %v5139 = vunpack.c.0.s8 %v5138
    %v5140 = vlaneseq
    %v5141 = vshrl.u32 %v5140, 7
    %v5142 = vsub.s32 %v5139, %v5141
    %v5143 = vrot.slane %v5115, %v5142
    %v5144 = vcombine.low %v5122, %v5129
    %v5145 = vcombine.low %v5136, %v5143
    %v5147 = vunpack.c.l.s4 1966171168
    %v5148 = vunpack.c.0.s8 %v5147
    %v5149 = vlaneseq
    %v5150 = vshrl.u32 %v5149, 7
    %v5151 = vsub.s32 %v5148, %v5150
    %v5152 = vrot.slane %v5144, %v5151
    %v5154 = vunpack.c.l.s4 1966171168
    %v5155 = vunpack.c.0.s8 %v5154
    %v5156 = vlaneseq
    %v5157 = vshrl.u32 %v5156, 7
    %v5158 = vsub.s32 %v5155, %v5157
    %v5159 = vrot.slane %v5145, %v5158
    %v5160 = vcombine.low %v5152, %v5159
    %v5161 = vcombine.low %v2606, %v2610
    %v5162 = vcombine.low %v2614, %v2618
    %v5163 = vcombine.low %v2622, %v2626
    %v5164 = vcombine.low %v2630, %v2634
    %v5166 = vunpack.c.l.s4 1966171168
    %v5167 = vunpack.c.0.s8 %v5166
    %v5168 = vlaneseq
    %v5169 = vshrl.u32 %v5168, 7
    %v5170 = vsub.s32 %v5167, %v5169
    %v5171 = vrot.slane %v5161, %v5170
    %v5173 = vunpack.c.l.s4 1966171168
    %v5174 = vunpack.c.0.s8 %v5173
    %v5175 = vlaneseq
    %v5176 = vshrl.u32 %v5175, 7
    %v5177 = vsub.s32 %v5174, %v5176
    %v5178 = vrot.slane %v5162, %v5177
    %v5180 = vunpack.c.l.s4 1966171168
    %v5181 = vunpack.c.0.s8 %v5180
    %v5182 = vlaneseq
    %v5183 = vshrl.u32 %v5182, 7
    %v5184 = vsub.s32 %v5181, %v5183
    %v5185 = vrot.slane %v5163, %v5184
    %v5187 = vunpack.c.l.s4 1966171168
    %v5188 = vunpack.c.0.s8 %v5187
    %v5189 = vlaneseq
    %v5190 = vshrl.u32 %v5189, 7
    %v5191 = vsub.s32 %v5188, %v5190
    %v5192 = vrot.slane %v5164, %v5191
    %v5193 = vcombine.low %v5171, %v5178
    %v5194 = vcombine.low %v5185, %v5192
    %v5196 = vunpack.c.l.s4 1966171168
    %v5197 = vunpack.c.0.s8 %v5196
    %v5198 = vlaneseq
    %v5199 = vshrl.u32 %v5198, 7
    %v5200 = vsub.s32 %v5197, %v5199
    %v5201 = vrot.slane %v5193, %v5200
    %v5203 = vunpack.c.l.s4 1966171168
    %v5204 = vunpack.c.0.s8 %v5203
    %v5205 = vlaneseq
    %v5206 = vshrl.u32 %v5205, 7
    %v5207 = vsub.s32 %v5204, %v5206
    %v5208 = vrot.slane %v5194, %v5207
    %v5209 = vcombine.low %v5201, %v5208
    %v5210 = vcombine.low %v2638, %v2642
    %v5211 = vcombine.low %v2646, %v2650
    %v5212 = vcombine.low %v2654, %v2658
    %v5213 = vcombine.low %v2662, %v2666
    %v5215 = vunpack.c.l.s4 1966171168
    %v5216 = vunpack.c.0.s8 %v5215
    %v5217 = vlaneseq
    %v5218 = vshrl.u32 %v5217, 7
    %v5219 = vsub.s32 %v5216, %v5218
    %v5220 = vrot.slane %v5210, %v5219
    %v5222 = vunpack.c.l.s4 1966171168
    %v5223 = vunpack.c.0.s8 %v5222
    %v5224 = vlaneseq
    %v5225 = vshrl.u32 %v5224, 7
    %v5226 = vsub.s32 %v5223, %v5225
    %v5227 = vrot.slane %v5211, %v5226
    %v5229 = vunpack.c.l.s4 1966171168
    %v5230 = vunpack.c.0.s8 %v5229
    %v5231 = vlaneseq
    %v5232 = vshrl.u32 %v5231, 7
    %v5233 = vsub.s32 %v5230, %v5232
    %v5234 = vrot.slane %v5212, %v5233
    %v5236 = vunpack.c.l.s4 1966171168
    %v5237 = vunpack.c.0.s8 %v5236
    %v5238 = vlaneseq
    %v5239 = vshrl.u32 %v5238, 7
    %v5240 = vsub.s32 %v5237, %v5239
    %v5241 = vrot.slane %v5213, %v5240
    %v5242 = vcombine.low %v5220, %v5227
    %v5243 = vcombine.low %v5234, %v5241
    %v5245 = vunpack.c.l.s4 1966171168
    %v5246 = vunpack.c.0.s8 %v5245
    %v5247 = vlaneseq
    %v5248 = vshrl.u32 %v5247, 7
    %v5249 = vsub.s32 %v5246, %v5248
    %v5250 = vrot.slane %v5242, %v5249
    %v5252 = vunpack.c.l.s4 1966171168
    %v5253 = vunpack.c.0.s8 %v5252
    %v5254 = vlaneseq
    %v5255 = vshrl.u32 %v5254, 7
    %v5256 = vsub.s32 %v5253, %v5255
    %v5257 = vrot.slane %v5243, %v5256
    %v5258 = vcombine.low %v5250, %v5257
    %v5259 = vcombine.low %v2670, %v2674
    %v5260 = vcombine.low %v2678, %v2682
    %v5261 = vcombine.low %v2686, %v2690
    %v5262 = vcombine.low %v2694, %v2698
    %v5264 = vunpack.c.l.s4 1966171168
    %v5265 = vunpack.c.0.s8 %v5264
    %v5266 = vlaneseq
    %v5267 = vshrl.u32 %v5266, 7
    %v5268 = vsub.s32 %v5265, %v5267
    %v5269 = vrot.slane %v5259, %v5268
    %v5271 = vunpack.c.l.s4 1966171168
    %v5272 = vunpack.c.0.s8 %v5271
    %v5273 = vlaneseq
    %v5274 = vshrl.u32 %v5273, 7
    %v5275 = vsub.s32 %v5272, %v5274
    %v5276 = vrot.slane %v5260, %v5275
    %v5278 = vunpack.c.l.s4 1966171168
    %v5279 = vunpack.c.0.s8 %v5278
    %v5280 = vlaneseq
    %v5281 = vshrl.u32 %v5280, 7
    %v5282 = vsub.s32 %v5279, %v5281
    %v5283 = vrot.slane %v5261, %v5282
    %v5285 = vunpack.c.l.s4 1966171168
    %v5286 = vunpack.c.0.s8 %v5285
    %v5287 = vlaneseq
    %v5288 = vshrl.u32 %v5287, 7
    %v5289 = vsub.s32 %v5286, %v5288
    %v5290 = vrot.slane %v5262, %v5289
    %v5291 = vcombine.low %v5269, %v5276
    %v5292 = vcombine.low %v5283, %v5290
    %v5294 = vunpack.c.l.s4 1966171168
    %v5295 = vunpack.c.0.s8 %v5294
    %v5296 = vlaneseq
    %v5297 = vshrl.u32 %v5296, 7
    %v5298 = vsub.s32 %v5295, %v5297
    %v5299 = vrot.slane %v5291, %v5298
    %v5301 = vunpack.c.l.s4 1966171168
    %v5302 = vunpack.c.0.s8 %v5301
    %v5303 = vlaneseq
    %v5304 = vshrl.u32 %v5303, 7
    %v5305 = vsub.s32 %v5302, %v5304
    %v5306 = vrot.slane %v5292, %v5305
    %v5307 = vcombine.low %v5299, %v5306
    %v5308 = vcombine.low %v2702, %v2706
    %v5309 = vcombine.low %v2710, %v2714
    %v5310 = vcombine.low %v2718, %v2722
    %v5311 = vcombine.low %v2726, %v2730
    %v5313 = vunpack.c.l.s4 1966171168
    %v5314 = vunpack.c.0.s8 %v5313
    %v5315 = vlaneseq
    %v5316 = vshrl.u32 %v5315, 7
    %v5317 = vsub.s32 %v5314, %v5316
    %v5318 = vrot.slane %v5308, %v5317
    %v5320 = vunpack.c.l.s4 1966171168
    %v5321 = vunpack.c.0.s8 %v5320
    %v5322 = vlaneseq
    %v5323 = vshrl.u32 %v5322, 7
    %v5324 = vsub.s32 %v5321, %v5323
    %v5325 = vrot.slane %v5309, %v5324
    %v5327 = vunpack.c.l.s4 1966171168
    %v5328 = vunpack.c.0.s8 %v5327
    %v5329 = vlaneseq
    %v5330 = vshrl.u32 %v5329, 7
    %v5331 = vsub.s32 %v5328, %v5330
    %v5332 = vrot.slane %v5310, %v5331
    %v5334 = vunpack.c.l.s4 1966171168
    %v5335 = vunpack.c.0.s8 %v5334
    %v5336 = vlaneseq
    %v5337 = vshrl.u32 %v5336, 7
    %v5338 = vsub.s32 %v5335, %v5337
    %v5339 = vrot.slane %v5311, %v5338
    %v5340 = vcombine.low %v5318, %v5325
    %v5341 = vcombine.low %v5332, %v5339
    %v5343 = vunpack.c.l.s4 1966171168
    %v5344 = vunpack.c.0.s8 %v5343
    %v5345 = vlaneseq
    %v5346 = vshrl.u32 %v5345, 7
    %v5347 = vsub.s32 %v5344, %v5346
    %v5348 = vrot.slane %v5340, %v5347
    %v5350 = vunpack.c.l.s4 1966171168
    %v5351 = vunpack.c.0.s8 %v5350
    %v5352 = vlaneseq
    %v5353 = vshrl.u32 %v5352, 7
    %v5354 = vsub.s32 %v5351, %v5353
    %v5355 = vrot.slane %v5341, %v5354
    %v5356 = vcombine.low %v5348, %v5355
    %v5357 = vcombine.low %v2734, %v2738
    %v5358 = vcombine.low %v2742, %v2746
    %v5359 = vcombine.low %v2750, %v2754
    %v5360 = vcombine.low %v2758, %v2762
    %v5362 = vunpack.c.l.s4 1966171168
    %v5363 = vunpack.c.0.s8 %v5362
    %v5364 = vlaneseq
    %v5365 = vshrl.u32 %v5364, 7
    %v5366 = vsub.s32 %v5363, %v5365
    %v5367 = vrot.slane %v5357, %v5366
    %v5369 = vunpack.c.l.s4 1966171168
    %v5370 = vunpack.c.0.s8 %v5369
    %v5371 = vlaneseq
    %v5372 = vshrl.u32 %v5371, 7
    %v5373 = vsub.s32 %v5370, %v5372
    %v5374 = vrot.slane %v5358, %v5373
    %v5376 = vunpack.c.l.s4 1966171168
    %v5377 = vunpack.c.0.s8 %v5376
    %v5378 = vlaneseq
    %v5379 = vshrl.u32 %v5378, 7
    %v5380 = vsub.s32 %v5377, %v5379
    %v5381 = vrot.slane %v5359, %v5380
    %v5383 = vunpack.c.l.s4 1966171168
    %v5384 = vunpack.c.0.s8 %v5383
    %v5385 = vlaneseq
    %v5386 = vshrl.u32 %v5385, 7
    %v5387 = vsub.s32 %v5384, %v5386
    %v5388 = vrot.slane %v5360, %v5387
    %v5389 = vcombine.low %v5367, %v5374
    %v5390 = vcombine.low %v5381, %v5388
    %v5392 = vunpack.c.l.s4 1966171168
    %v5393 = vunpack.c.0.s8 %v5392
    %v5394 = vlaneseq
    %v5395 = vshrl.u32 %v5394, 7
    %v5396 = vsub.s32 %v5393, %v5395
    %v5397 = vrot.slane %v5389, %v5396
    %v5399 = vunpack.c.l.s4 1966171168
    %v5400 = vunpack.c.0.s8 %v5399
    %v5401 = vlaneseq
    %v5402 = vshrl.u32 %v5401, 7
    %v5403 = vsub.s32 %v5400, %v5402
    %v5404 = vrot.slane %v5390, %v5403
    %v5405 = vcombine.low %v5397, %v5404
    %v5406 = vcombine.low %v2766, %v2770
    %v5407 = vcombine.low %v2774, %v2778
    %v5408 = vcombine.low %v2782, %v2786
    %v5409 = vcombine.low %v2790, %v2794
    %v5411 = vunpack.c.l.s4 1966171168
    %v5412 = vunpack.c.0.s8 %v5411
    %v5413 = vlaneseq
    %v5414 = vshrl.u32 %v5413, 7
    %v5415 = vsub.s32 %v5412, %v5414
    %v5416 = vrot.slane %v5406, %v5415
    %v5418 = vunpack.c.l.s4 1966171168
    %v5419 = vunpack.c.0.s8 %v5418
    %v5420 = vlaneseq
    %v5421 = vshrl.u32 %v5420, 7
    %v5422 = vsub.s32 %v5419, %v5421
    %v5423 = vrot.slane %v5407, %v5422
    %v5425 = vunpack.c.l.s4 1966171168
    %v5426 = vunpack.c.0.s8 %v5425
    %v5427 = vlaneseq
    %v5428 = vshrl.u32 %v5427, 7
    %v5429 = vsub.s32 %v5426, %v5428
    %v5430 = vrot.slane %v5408, %v5429
    %v5432 = vunpack.c.l.s4 1966171168
    %v5433 = vunpack.c.0.s8 %v5432
    %v5434 = vlaneseq
    %v5435 = vshrl.u32 %v5434, 7
    %v5436 = vsub.s32 %v5433, %v5435
    %v5437 = vrot.slane %v5409, %v5436
    %v5438 = vcombine.low %v5416, %v5423
    %v5439 = vcombine.low %v5430, %v5437
    %v5441 = vunpack.c.l.s4 1966171168
    %v5442 = vunpack.c.0.s8 %v5441
    %v5443 = vlaneseq
    %v5444 = vshrl.u32 %v5443, 7
    %v5445 = vsub.s32 %v5442, %v5444
    %v5446 = vrot.slane %v5438, %v5445
    %v5448 = vunpack.c.l.s4 1966171168
    %v5449 = vunpack.c.0.s8 %v5448
    %v5450 = vlaneseq
    %v5451 = vshrl.u32 %v5450, 7
    %v5452 = vsub.s32 %v5449, %v5451
    %v5453 = vrot.slane %v5439, %v5452
    %v5454 = vcombine.low %v5446, %v5453
    %v5455 = vcombine.low %v2798, %v2802
    %v5456 = vcombine.low %v2806, %v2810
    %v5457 = vcombine.low %v2814, %v2818
    %v5458 = vcombine.low %v2822, %v2826
    %v5460 = vunpack.c.l.s4 1966171168
    %v5461 = vunpack.c.0.s8 %v5460
    %v5462 = vlaneseq
    %v5463 = vshrl.u32 %v5462, 7
    %v5464 = vsub.s32 %v5461, %v5463
    %v5465 = vrot.slane %v5455, %v5464
    %v5467 = vunpack.c.l.s4 1966171168
    %v5468 = vunpack.c.0.s8 %v5467
    %v5469 = vlaneseq
    %v5470 = vshrl.u32 %v5469, 7
    %v5471 = vsub.s32 %v5468, %v5470
    %v5472 = vrot.slane %v5456, %v5471
    %v5474 = vunpack.c.l.s4 1966171168
    %v5475 = vunpack.c.0.s8 %v5474
    %v5476 = vlaneseq
    %v5477 = vshrl.u32 %v5476, 7
    %v5478 = vsub.s32 %v5475, %v5477
    %v5479 = vrot.slane %v5457, %v5478
    %v5481 = vunpack.c.l.s4 1966171168
    %v5482 = vunpack.c.0.s8 %v5481
    %v5483 = vlaneseq
    %v5484 = vshrl.u32 %v5483, 7
    %v5485 = vsub.s32 %v5482, %v5484
    %v5486 = vrot.slane %v5458, %v5485
    %v5487 = vcombine.low %v5465, %v5472
    %v5488 = vcombine.low %v5479, %v5486
    %v5490 = vunpack.c.l.s4 1966171168
    %v5491 = vunpack.c.0.s8 %v5490
    %v5492 = vlaneseq
    %v5493 = vshrl.u32 %v5492, 7
    %v5494 = vsub.s32 %v5491, %v5493
    %v5495 = vrot.slane %v5487, %v5494
    %v5497 = vunpack.c.l.s4 1966171168
    %v5498 = vunpack.c.0.s8 %v5497
    %v5499 = vlaneseq
    %v5500 = vshrl.u32 %v5499, 7
    %v5501 = vsub.s32 %v5498, %v5500
    %v5502 = vrot.slane %v5488, %v5501
    %v5503 = vcombine.low %v5495, %v5502
    %v5504 = vcombine.low %v2830, %v2834
    %v5505 = vcombine.low %v2838, %v2842
    %v5506 = vcombine.low %v2846, %v2850
    %v5507 = vcombine.low %v2854, %v2858
    %v5509 = vunpack.c.l.s4 1966171168
    %v5510 = vunpack.c.0.s8 %v5509
    %v5511 = vlaneseq
    %v5512 = vshrl.u32 %v5511, 7
    %v5513 = vsub.s32 %v5510, %v5512
    %v5514 = vrot.slane %v5504, %v5513
    %v5516 = vunpack.c.l.s4 1966171168
    %v5517 = vunpack.c.0.s8 %v5516
    %v5518 = vlaneseq
    %v5519 = vshrl.u32 %v5518, 7
    %v5520 = vsub.s32 %v5517, %v5519
    %v5521 = vrot.slane %v5505, %v5520
    %v5523 = vunpack.c.l.s4 1966171168
    %v5524 = vunpack.c.0.s8 %v5523
    %v5525 = vlaneseq
    %v5526 = vshrl.u32 %v5525, 7
    %v5527 = vsub.s32 %v5524, %v5526
    %v5528 = vrot.slane %v5506, %v5527
    %v5530 = vunpack.c.l.s4 1966171168
    %v5531 = vunpack.c.0.s8 %v5530
    %v5532 = vlaneseq
    %v5533 = vshrl.u32 %v5532, 7
    %v5534 = vsub.s32 %v5531, %v5533
    %v5535 = vrot.slane %v5507, %v5534
    %v5536 = vcombine.low %v5514, %v5521
    %v5537 = vcombine.low %v5528, %v5535
    %v5539 = vunpack.c.l.s4 1966171168
    %v5540 = vunpack.c.0.s8 %v5539
    %v5541 = vlaneseq
    %v5542 = vshrl.u32 %v5541, 7
    %v5543 = vsub.s32 %v5540, %v5542
    %v5544 = vrot.slane %v5536, %v5543
    %v5546 = vunpack.c.l.s4 1966171168
    %v5547 = vunpack.c.0.s8 %v5546
    %v5548 = vlaneseq
    %v5549 = vshrl.u32 %v5548, 7
    %v5550 = vsub.s32 %v5547, %v5549
    %v5551 = vrot.slane %v5537, %v5550
    %v5552 = vcombine.low %v5544, %v5551
    %v5553 = vcombine.low %v2862, %v2866
    %v5554 = vcombine.low %v2870, %v2874
    %v5555 = vcombine.low %v2878, %v2882
    %v5556 = vcombine.low %v2886, %v2890
    %v5558 = vunpack.c.l.s4 1966171168
    %v5559 = vunpack.c.0.s8 %v5558
    %v5560 = vlaneseq
    %v5561 = vshrl.u32 %v5560, 7
    %v5562 = vsub.s32 %v5559, %v5561
    %v5563 = vrot.slane %v5553, %v5562
    %v5565 = vunpack.c.l.s4 1966171168
    %v5566 = vunpack.c.0.s8 %v5565
    %v5567 = vlaneseq
    %v5568 = vshrl.u32 %v5567, 7
    %v5569 = vsub.s32 %v5566, %v5568
    %v5570 = vrot.slane %v5554, %v5569
    %v5572 = vunpack.c.l.s4 1966171168
    %v5573 = vunpack.c.0.s8 %v5572
    %v5574 = vlaneseq
    %v5575 = vshrl.u32 %v5574, 7
    %v5576 = vsub.s32 %v5573, %v5575
    %v5577 = vrot.slane %v5555, %v5576
    %v5579 = vunpack.c.l.s4 1966171168
    %v5580 = vunpack.c.0.s8 %v5579
    %v5581 = vlaneseq
    %v5582 = vshrl.u32 %v5581, 7
    %v5583 = vsub.s32 %v5580, %v5582
    %v5584 = vrot.slane %v5556, %v5583
    %v5585 = vcombine.low %v5563, %v5570
    %v5586 = vcombine.low %v5577, %v5584
    %v5588 = vunpack.c.l.s4 1966171168
    %v5589 = vunpack.c.0.s8 %v5588
    %v5590 = vlaneseq
    %v5591 = vshrl.u32 %v5590, 7
    %v5592 = vsub.s32 %v5589, %v5591
    %v5593 = vrot.slane %v5585, %v5592
    %v5595 = vunpack.c.l.s4 1966171168
    %v5596 = vunpack.c.0.s8 %v5595
    %v5597 = vlaneseq
    %v5598 = vshrl.u32 %v5597, 7
    %v5599 = vsub.s32 %v5596, %v5598
    %v5600 = vrot.slane %v5586, %v5599
    %v5601 = vcombine.low %v5593, %v5600
    %v5602 = vcombine.low %v2894, %v2898
    %v5603 = vcombine.low %v2902, %v2906
    %v5604 = vcombine.low %v2910, %v2914
    %v5605 = vcombine.low %v2918, %v2922
    %v5607 = vunpack.c.l.s4 1966171168
    %v5608 = vunpack.c.0.s8 %v5607
    %v5609 = vlaneseq
    %v5610 = vshrl.u32 %v5609, 7
    %v5611 = vsub.s32 %v5608, %v5610
    %v5612 = vrot.slane %v5602, %v5611
    %v5614 = vunpack.c.l.s4 1966171168
    %v5615 = vunpack.c.0.s8 %v5614
    %v5616 = vlaneseq
    %v5617 = vshrl.u32 %v5616, 7
    %v5618 = vsub.s32 %v5615, %v5617
    %v5619 = vrot.slane %v5603, %v5618
    %v5621 = vunpack.c.l.s4 1966171168
    %v5622 = vunpack.c.0.s8 %v5621
    %v5623 = vlaneseq
    %v5624 = vshrl.u32 %v5623, 7
    %v5625 = vsub.s32 %v5622, %v5624
    %v5626 = vrot.slane %v5604, %v5625
    %v5628 = vunpack.c.l.s4 1966171168
    %v5629 = vunpack.c.0.s8 %v5628
    %v5630 = vlaneseq
    %v5631 = vshrl.u32 %v5630, 7
    %v5632 = vsub.s32 %v5629, %v5631
    %v5633 = vrot.slane %v5605, %v5632
    %v5634 = vcombine.low %v5612, %v5619
    %v5635 = vcombine.low %v5626, %v5633
    %v5637 = vunpack.c.l.s4 1966171168
    %v5638 = vunpack.c.0.s8 %v5637
    %v5639 = vlaneseq
    %v5640 = vshrl.u32 %v5639, 7
    %v5641 = vsub.s32 %v5638, %v5640
    %v5642 = vrot.slane %v5634, %v5641
    %v5644 = vunpack.c.l.s4 1966171168
    %v5645 = vunpack.c.0.s8 %v5644
    %v5646 = vlaneseq
    %v5647 = vshrl.u32 %v5646, 7
    %v5648 = vsub.s32 %v5645, %v5647
    %v5649 = vrot.slane %v5635, %v5648
    %v5650 = vcombine.low %v5642, %v5649
    %v5651 = vcombine.low %v2926, %v2930
    %v5652 = vcombine.low %v2934, %v2938
    %v5653 = vcombine.low %v2942, %v2946
    %v5654 = vcombine.low %v2950, %v2954
    %v5656 = vunpack.c.l.s4 1966171168
    %v5657 = vunpack.c.0.s8 %v5656
    %v5658 = vlaneseq
    %v5659 = vshrl.u32 %v5658, 7
    %v5660 = vsub.s32 %v5657, %v5659
    %v5661 = vrot.slane %v5651, %v5660
    %v5663 = vunpack.c.l.s4 1966171168
    %v5664 = vunpack.c.0.s8 %v5663
    %v5665 = vlaneseq
    %v5666 = vshrl.u32 %v5665, 7
    %v5667 = vsub.s32 %v5664, %v5666
    %v5668 = vrot.slane %v5652, %v5667
    %v5670 = vunpack.c.l.s4 1966171168
    %v5671 = vunpack.c.0.s8 %v5670
    %v5672 = vlaneseq
    %v5673 = vshrl.u32 %v5672, 7
    %v5674 = vsub.s32 %v5671, %v5673
    %v5675 = vrot.slane %v5653, %v5674
    %v5677 = vunpack.c.l.s4 1966171168
    %v5678 = vunpack.c.0.s8 %v5677
    %v5679 = vlaneseq
    %v5680 = vshrl.u32 %v5679, 7
    %v5681 = vsub.s32 %v5678, %v5680
    %v5682 = vrot.slane %v5654, %v5681
    %v5683 = vcombine.low %v5661, %v5668
    %v5684 = vcombine.low %v5675, %v5682
    %v5686 = vunpack.c.l.s4 1966171168
    %v5687 = vunpack.c.0.s8 %v5686
    %v5688 = vlaneseq
    %v5689 = vshrl.u32 %v5688, 7
    %v5690 = vsub.s32 %v5687, %v5689
    %v5691 = vrot.slane %v5683, %v5690
    %v5693 = vunpack.c.l.s4 1966171168
    %v5694 = vunpack.c.0.s8 %v5693
    %v5695 = vlaneseq
    %v5696 = vshrl.u32 %v5695, 7
    %v5697 = vsub.s32 %v5694, %v5696
    %v5698 = vrot.slane %v5684, %v5697
    %v5699 = vcombine.low %v5691, %v5698
    %v5700 = vcombine.low %v2958, %v2962
    %v5701 = vcombine.low %v2966, %v2970
    %v5702 = vcombine.low %v2974, %v2978
    %v5703 = vcombine.low %v2982, %v2986
    %v5705 = vunpack.c.l.s4 1966171168
    %v5706 = vunpack.c.0.s8 %v5705
    %v5707 = vlaneseq
    %v5708 = vshrl.u32 %v5707, 7
    %v5709 = vsub.s32 %v5706, %v5708
    %v5710 = vrot.slane %v5700, %v5709
    %v5712 = vunpack.c.l.s4 1966171168
    %v5713 = vunpack.c.0.s8 %v5712
    %v5714 = vlaneseq
    %v5715 = vshrl.u32 %v5714, 7
    %v5716 = vsub.s32 %v5713, %v5715
    %v5717 = vrot.slane %v5701, %v5716
    %v5719 = vunpack.c.l.s4 1966171168
    %v5720 = vunpack.c.0.s8 %v5719
    %v5721 = vlaneseq
    %v5722 = vshrl.u32 %v5721, 7
    %v5723 = vsub.s32 %v5720, %v5722
    %v5724 = vrot.slane %v5702, %v5723
    %v5726 = vunpack.c.l.s4 1966171168
    %v5727 = vunpack.c.0.s8 %v5726
    %v5728 = vlaneseq
    %v5729 = vshrl.u32 %v5728, 7
    %v5730 = vsub.s32 %v5727, %v5729
    %v5731 = vrot.slane %v5703, %v5730
    %v5732 = vcombine.low %v5710, %v5717
    %v5733 = vcombine.low %v5724, %v5731
    %v5735 = vunpack.c.l.s4 1966171168
    %v5736 = vunpack.c.0.s8 %v5735
    %v5737 = vlaneseq
    %v5738 = vshrl.u32 %v5737, 7
    %v5739 = vsub.s32 %v5736, %v5738
    %v5740 = vrot.slane %v5732, %v5739
    %v5742 = vunpack.c.l.s4 1966171168
    %v5743 = vunpack.c.0.s8 %v5742
    %v5744 = vlaneseq
    %v5745 = vshrl.u32 %v5744, 7
    %v5746 = vsub.s32 %v5743, %v5745
    %v5747 = vrot.slane %v5733, %v5746
    %v5748 = vcombine.low %v5740, %v5747
    %v5749 = vcombine.low %v2990, %v2994
    %v5750 = vcombine.low %v2998, %v3002
    %v5751 = vcombine.low %v3006, %v3010
    %v5752 = vcombine.low %v3014, %v3018
    %v5754 = vunpack.c.l.s4 1966171168
    %v5755 = vunpack.c.0.s8 %v5754
    %v5756 = vlaneseq
    %v5757 = vshrl.u32 %v5756, 7
    %v5758 = vsub.s32 %v5755, %v5757
    %v5759 = vrot.slane %v5749, %v5758
    %v5761 = vunpack.c.l.s4 1966171168
    %v5762 = vunpack.c.0.s8 %v5761
    %v5763 = vlaneseq
    %v5764 = vshrl.u32 %v5763, 7
    %v5765 = vsub.s32 %v5762, %v5764
    %v5766 = vrot.slane %v5750, %v5765
    %v5768 = vunpack.c.l.s4 1966171168
    %v5769 = vunpack.c.0.s8 %v5768
    %v5770 = vlaneseq
    %v5771 = vshrl.u32 %v5770, 7
    %v5772 = vsub.s32 %v5769, %v5771
    %v5773 = vrot.slane %v5751, %v5772
    %v5775 = vunpack.c.l.s4 1966171168
    %v5776 = vunpack.c.0.s8 %v5775
    %v5777 = vlaneseq
    %v5778 = vshrl.u32 %v5777, 7
    %v5779 = vsub.s32 %v5776, %v5778
    %v5780 = vrot.slane %v5752, %v5779
    %v5781 = vcombine.low %v5759, %v5766
    %v5782 = vcombine.low %v5773, %v5780
    %v5784 = vunpack.c.l.s4 1966171168
    %v5785 = vunpack.c.0.s8 %v5784
    %v5786 = vlaneseq
    %v5787 = vshrl.u32 %v5786, 7
    %v5788 = vsub.s32 %v5785, %v5787
    %v5789 = vrot.slane %v5781, %v5788
    %v5791 = vunpack.c.l.s4 1966171168
    %v5792 = vunpack.c.0.s8 %v5791
    %v5793 = vlaneseq
    %v5794 = vshrl.u32 %v5793, 7
    %v5795 = vsub.s32 %v5792, %v5794
    %v5796 = vrot.slane %v5782, %v5795
    %v5797 = vcombine.low %v5789, %v5796
    %v5798 = vcombine.low %v3022, %v3026
    %v5799 = vcombine.low %v3030, %v3034
    %v5800 = vcombine.low %v3038, %v3042
    %v5801 = vcombine.low %v3046, %v3050
    %v5803 = vunpack.c.l.s4 1966171168
    %v5804 = vunpack.c.0.s8 %v5803
    %v5805 = vlaneseq
    %v5806 = vshrl.u32 %v5805, 7
    %v5807 = vsub.s32 %v5804, %v5806
    %v5808 = vrot.slane %v5798, %v5807
    %v5810 = vunpack.c.l.s4 1966171168
    %v5811 = vunpack.c.0.s8 %v5810
    %v5812 = vlaneseq
    %v5813 = vshrl.u32 %v5812, 7
    %v5814 = vsub.s32 %v5811, %v5813
    %v5815 = vrot.slane %v5799, %v5814
    %v5817 = vunpack.c.l.s4 1966171168
    %v5818 = vunpack.c.0.s8 %v5817
    %v5819 = vlaneseq
    %v5820 = vshrl.u32 %v5819, 7
    %v5821 = vsub.s32 %v5818, %v5820
    %v5822 = vrot.slane %v5800, %v5821
    %v5824 = vunpack.c.l.s4 1966171168
    %v5825 = vunpack.c.0.s8 %v5824
    %v5826 = vlaneseq
    %v5827 = vshrl.u32 %v5826, 7
    %v5828 = vsub.s32 %v5825, %v5827
    %v5829 = vrot.slane %v5801, %v5828
    %v5830 = vcombine.low %v5808, %v5815
    %v5831 = vcombine.low %v5822, %v5829
    %v5833 = vunpack.c.l.s4 1966171168
    %v5834 = vunpack.c.0.s8 %v5833
    %v5835 = vlaneseq
    %v5836 = vshrl.u32 %v5835, 7
    %v5837 = vsub.s32 %v5834, %v5836
    %v5838 = vrot.slane %v5830, %v5837
    %v5840 = vunpack.c.l.s4 1966171168
    %v5841 = vunpack.c.0.s8 %v5840
    %v5842 = vlaneseq
    %v5843 = vshrl.u32 %v5842, 7
    %v5844 = vsub.s32 %v5841, %v5843
    %v5845 = vrot.slane %v5831, %v5844
    %v5846 = vcombine.low %v5838, %v5845
    %v5847 = vcombine.low %v3054, %v3058
    %v5848 = vcombine.low %v3062, %v3066
    %v5849 = vcombine.low %v3070, %v3074
    %v5850 = vcombine.low %v3078, %v3082
    %v5852 = vunpack.c.l.s4 1966171168
    %v5853 = vunpack.c.0.s8 %v5852
    %v5854 = vlaneseq
    %v5855 = vshrl.u32 %v5854, 7
    %v5856 = vsub.s32 %v5853, %v5855
    %v5857 = vrot.slane %v5847, %v5856
    %v5859 = vunpack.c.l.s4 1966171168
    %v5860 = vunpack.c.0.s8 %v5859
    %v5861 = vlaneseq
    %v5862 = vshrl.u32 %v5861, 7
    %v5863 = vsub.s32 %v5860, %v5862
    %v5864 = vrot.slane %v5848, %v5863
    %v5866 = vunpack.c.l.s4 1966171168
    %v5867 = vunpack.c.0.s8 %v5866
    %v5868 = vlaneseq
    %v5869 = vshrl.u32 %v5868, 7
    %v5870 = vsub.s32 %v5867, %v5869
    %v5871 = vrot.slane %v5849, %v5870
    %v5873 = vunpack.c.l.s4 1966171168
    %v5874 = vunpack.c.0.s8 %v5873
    %v5875 = vlaneseq
    %v5876 = vshrl.u32 %v5875, 7
    %v5877 = vsub.s32 %v5874, %v5876
    %v5878 = vrot.slane %v5850, %v5877
    %v5879 = vcombine.low %v5857, %v5864
    %v5880 = vcombine.low %v5871, %v5878
    %v5882 = vunpack.c.l.s4 1966171168
    %v5883 = vunpack.c.0.s8 %v5882
    %v5884 = vlaneseq
    %v5885 = vshrl.u32 %v5884, 7
    %v5886 = vsub.s32 %v5883, %v5885
    %v5887 = vrot.slane %v5879, %v5886
    %v5889 = vunpack.c.l.s4 1966171168
    %v5890 = vunpack.c.0.s8 %v5889
    %v5891 = vlaneseq
    %v5892 = vshrl.u32 %v5891, 7
    %v5893 = vsub.s32 %v5890, %v5892
    %v5894 = vrot.slane %v5880, %v5893
    %v5895 = vcombine.low %v5887, %v5894
    %v5896 = vcombine.low %v3086, %v3090
    %v5897 = vcombine.low %v3094, %v3098
    %v5898 = vcombine.low %v3102, %v3106
    %v5899 = vcombine.low %v3110, %v3114
    %v5901 = vunpack.c.l.s4 1966171168
    %v5902 = vunpack.c.0.s8 %v5901
    %v5903 = vlaneseq
    %v5904 = vshrl.u32 %v5903, 7
    %v5905 = vsub.s32 %v5902, %v5904
    %v5906 = vrot.slane %v5896, %v5905
    %v5908 = vunpack.c.l.s4 1966171168
    %v5909 = vunpack.c.0.s8 %v5908
    %v5910 = vlaneseq
    %v5911 = vshrl.u32 %v5910, 7
    %v5912 = vsub.s32 %v5909, %v5911
    %v5913 = vrot.slane %v5897, %v5912
    %v5915 = vunpack.c.l.s4 1966171168
    %v5916 = vunpack.c.0.s8 %v5915
    %v5917 = vlaneseq
    %v5918 = vshrl.u32 %v5917, 7
    %v5919 = vsub.s32 %v5916, %v5918
    %v5920 = vrot.slane %v5898, %v5919
    %v5922 = vunpack.c.l.s4 1966171168
    %v5923 = vunpack.c.0.s8 %v5922
    %v5924 = vlaneseq
    %v5925 = vshrl.u32 %v5924, 7
    %v5926 = vsub.s32 %v5923, %v5925
    %v5927 = vrot.slane %v5899, %v5926
    %v5928 = vcombine.low %v5906, %v5913
    %v5929 = vcombine.low %v5920, %v5927
    %v5931 = vunpack.c.l.s4 1966171168
    %v5932 = vunpack.c.0.s8 %v5931
    %v5933 = vlaneseq
    %v5934 = vshrl.u32 %v5933, 7
    %v5935 = vsub.s32 %v5932, %v5934
    %v5936 = vrot.slane %v5928, %v5935
    %v5938 = vunpack.c.l.s4 1966171168
    %v5939 = vunpack.c.0.s8 %v5938
    %v5940 = vlaneseq
    %v5941 = vshrl.u32 %v5940, 7
    %v5942 = vsub.s32 %v5939, %v5941
    %v5943 = vrot.slane %v5929, %v5942
    %v5944 = vcombine.low %v5936, %v5943
    %v5945 = vcombine.low %v3118, %v3122
    %v5946 = vcombine.low %v3126, %v3130
    %v5947 = vcombine.low %v3134, %v3138
    %v5948 = vcombine.low %v3142, %v3146
    %v5950 = vunpack.c.l.s4 1966171168
    %v5951 = vunpack.c.0.s8 %v5950
    %v5952 = vlaneseq
    %v5953 = vshrl.u32 %v5952, 7
    %v5954 = vsub.s32 %v5951, %v5953
    %v5955 = vrot.slane %v5945, %v5954
    %v5957 = vunpack.c.l.s4 1966171168
    %v5958 = vunpack.c.0.s8 %v5957
    %v5959 = vlaneseq
    %v5960 = vshrl.u32 %v5959, 7
    %v5961 = vsub.s32 %v5958, %v5960
    %v5962 = vrot.slane %v5946, %v5961
    %v5964 = vunpack.c.l.s4 1966171168
    %v5965 = vunpack.c.0.s8 %v5964
    %v5966 = vlaneseq
    %v5967 = vshrl.u32 %v5966, 7
    %v5968 = vsub.s32 %v5965, %v5967
    %v5969 = vrot.slane %v5947, %v5968
    %v5971 = vunpack.c.l.s4 1966171168
    %v5972 = vunpack.c.0.s8 %v5971
    %v5973 = vlaneseq
    %v5974 = vshrl.u32 %v5973, 7
    %v5975 = vsub.s32 %v5972, %v5974
    %v5976 = vrot.slane %v5948, %v5975
    %v5977 = vcombine.low %v5955, %v5962
    %v5978 = vcombine.low %v5969, %v5976
    %v5980 = vunpack.c.l.s4 1966171168
    %v5981 = vunpack.c.0.s8 %v5980
    %v5982 = vlaneseq
    %v5983 = vshrl.u32 %v5982, 7
    %v5984 = vsub.s32 %v5981, %v5983
    %v5985 = vrot.slane %v5977, %v5984
    %v5987 = vunpack.c.l.s4 1966171168
    %v5988 = vunpack.c.0.s8 %v5987
    %v5989 = vlaneseq
    %v5990 = vshrl.u32 %v5989, 7
    %v5991 = vsub.s32 %v5988, %v5990
    %v5992 = vrot.slane %v5978, %v5991
    %v5993 = vcombine.low %v5985, %v5992
    %v5994 = vcombine.low %v3150, %v3154
    %v5995 = vcombine.low %v3158, %v3162
    %v5996 = vcombine.low %v3166, %v3170
    %v5997 = vcombine.low %v3174, %v3178
    %v5999 = vunpack.c.l.s4 1966171168
    %v6000 = vunpack.c.0.s8 %v5999
    %v6001 = vlaneseq
    %v6002 = vshrl.u32 %v6001, 7
    %v6003 = vsub.s32 %v6000, %v6002
    %v6004 = vrot.slane %v5994, %v6003
    %v6006 = vunpack.c.l.s4 1966171168
    %v6007 = vunpack.c.0.s8 %v6006
    %v6008 = vlaneseq
    %v6009 = vshrl.u32 %v6008, 7
    %v6010 = vsub.s32 %v6007, %v6009
    %v6011 = vrot.slane %v5995, %v6010
    %v6013 = vunpack.c.l.s4 1966171168
    %v6014 = vunpack.c.0.s8 %v6013
    %v6015 = vlaneseq
    %v6016 = vshrl.u32 %v6015, 7
    %v6017 = vsub.s32 %v6014, %v6016
    %v6018 = vrot.slane %v5996, %v6017
    %v6020 = vunpack.c.l.s4 1966171168
    %v6021 = vunpack.c.0.s8 %v6020
    %v6022 = vlaneseq
    %v6023 = vshrl.u32 %v6022, 7
    %v6024 = vsub.s32 %v6021, %v6023
    %v6025 = vrot.slane %v5997, %v6024
    %v6026 = vcombine.low %v6004, %v6011
    %v6027 = vcombine.low %v6018, %v6025
    %v6029 = vunpack.c.l.s4 1966171168
    %v6030 = vunpack.c.0.s8 %v6029
    %v6031 = vlaneseq
    %v6032 = vshrl.u32 %v6031, 7
    %v6033 = vsub.s32 %v6030, %v6032
    %v6034 = vrot.slane %v6026, %v6033
    %v6036 = vunpack.c.l.s4 1966171168
    %v6037 = vunpack.c.0.s8 %v6036
    %v6038 = vlaneseq
    %v6039 = vshrl.u32 %v6038, 7
    %v6040 = vsub.s32 %v6037, %v6039
    %v6041 = vrot.slane %v6027, %v6040
    %v6042 = vcombine.low %v6034, %v6041
    %v6043 = vcombine.low %v3182, %v3186
    %v6044 = vcombine.low %v3190, %v3194
    %v6045 = vcombine.low %v3198, %v3202
    %v6046 = vcombine.low %v3206, %v3210
    %v6048 = vunpack.c.l.s4 1966171168
    %v6049 = vunpack.c.0.s8 %v6048
    %v6050 = vlaneseq
    %v6051 = vshrl.u32 %v6050, 7
    %v6052 = vsub.s32 %v6049, %v6051
    %v6053 = vrot.slane %v6043, %v6052
    %v6055 = vunpack.c.l.s4 1966171168
    %v6056 = vunpack.c.0.s8 %v6055
    %v6057 = vlaneseq
    %v6058 = vshrl.u32 %v6057, 7
    %v6059 = vsub.s32 %v6056, %v6058
    %v6060 = vrot.slane %v6044, %v6059
    %v6062 = vunpack.c.l.s4 1966171168
    %v6063 = vunpack.c.0.s8 %v6062
    %v6064 = vlaneseq
    %v6065 = vshrl.u32 %v6064, 7
    %v6066 = vsub.s32 %v6063, %v6065
    %v6067 = vrot.slane %v6045, %v6066
    %v6069 = vunpack.c.l.s4 1966171168
    %v6070 = vunpack.c.0.s8 %v6069
    %v6071 = vlaneseq
    %v6072 = vshrl.u32 %v6071, 7
    %v6073 = vsub.s32 %v6070, %v6072
    %v6074 = vrot.slane %v6046, %v6073
    %v6075 = vcombine.low %v6053, %v6060
    %v6076 = vcombine.low %v6067, %v6074
    %v6078 = vunpack.c.l.s4 1966171168
    %v6079 = vunpack.c.0.s8 %v6078
    %v6080 = vlaneseq
    %v6081 = vshrl.u32 %v6080, 7
    %v6082 = vsub.s32 %v6079, %v6081
    %v6083 = vrot.slane %v6075, %v6082
    %v6085 = vunpack.c.l.s4 1966171168
    %v6086 = vunpack.c.0.s8 %v6085
    %v6087 = vlaneseq
    %v6088 = vshrl.u32 %v6087, 7
    %v6089 = vsub.s32 %v6086, %v6088
    %v6090 = vrot.slane %v6076, %v6089
    %v6091 = vcombine.low %v6083, %v6090
    %v6092 = vcombine.low %v3214, %v3218
    %v6093 = vcombine.low %v3222, %v3226
    %v6094 = vcombine.low %v3230, %v3234
    %v6095 = vcombine.low %v3238, %v3242
    %v6097 = vunpack.c.l.s4 1966171168
    %v6098 = vunpack.c.0.s8 %v6097
    %v6099 = vlaneseq
    %v6100 = vshrl.u32 %v6099, 7
    %v6101 = vsub.s32 %v6098, %v6100
    %v6102 = vrot.slane %v6092, %v6101
    %v6104 = vunpack.c.l.s4 1966171168
    %v6105 = vunpack.c.0.s8 %v6104
    %v6106 = vlaneseq
    %v6107 = vshrl.u32 %v6106, 7
    %v6108 = vsub.s32 %v6105, %v6107
    %v6109 = vrot.slane %v6093, %v6108
    %v6111 = vunpack.c.l.s4 1966171168
    %v6112 = vunpack.c.0.s8 %v6111
    %v6113 = vlaneseq
    %v6114 = vshrl.u32 %v6113, 7
    %v6115 = vsub.s32 %v6112, %v6114
    %v6116 = vrot.slane %v6094, %v6115
    %v6118 = vunpack.c.l.s4 1966171168
    %v6119 = vunpack.c.0.s8 %v6118
    %v6120 = vlaneseq
    %v6121 = vshrl.u32 %v6120, 7
    %v6122 = vsub.s32 %v6119, %v6121
    %v6123 = vrot.slane %v6095, %v6122
    %v6124 = vcombine.low %v6102, %v6109
    %v6125 = vcombine.low %v6116, %v6123
    %v6127 = vunpack.c.l.s4 1966171168
    %v6128 = vunpack.c.0.s8 %v6127
    %v6129 = vlaneseq
    %v6130 = vshrl.u32 %v6129, 7
    %v6131 = vsub.s32 %v6128, %v6130
    %v6132 = vrot.slane %v6124, %v6131
    %v6134 = vunpack.c.l.s4 1966171168
    %v6135 = vunpack.c.0.s8 %v6134
    %v6136 = vlaneseq
    %v6137 = vshrl.u32 %v6136, 7
    %v6138 = vsub.s32 %v6135, %v6137
    %v6139 = vrot.slane %v6125, %v6138
    %v6140 = vcombine.low %v6132, %v6139
    %v6141 = vcombine.low %v3246, %v3250
    %v6142 = vcombine.low %v3254, %v3258
    %v6143 = vcombine.low %v3262, %v3266
    %v6144 = vcombine.low %v3270, %v3274
    %v6146 = vunpack.c.l.s4 1966171168
    %v6147 = vunpack.c.0.s8 %v6146
    %v6148 = vlaneseq
    %v6149 = vshrl.u32 %v6148, 7
    %v6150 = vsub.s32 %v6147, %v6149
    %v6151 = vrot.slane %v6141, %v6150
    %v6153 = vunpack.c.l.s4 1966171168
    %v6154 = vunpack.c.0.s8 %v6153
    %v6155 = vlaneseq
    %v6156 = vshrl.u32 %v6155, 7
    %v6157 = vsub.s32 %v6154, %v6156
    %v6158 = vrot.slane %v6142, %v6157
    %v6160 = vunpack.c.l.s4 1966171168
    %v6161 = vunpack.c.0.s8 %v6160
    %v6162 = vlaneseq
    %v6163 = vshrl.u32 %v6162, 7
    %v6164 = vsub.s32 %v6161, %v6163
    %v6165 = vrot.slane %v6143, %v6164
    %v6167 = vunpack.c.l.s4 1966171168
    %v6168 = vunpack.c.0.s8 %v6167
    %v6169 = vlaneseq
    %v6170 = vshrl.u32 %v6169, 7
    %v6171 = vsub.s32 %v6168, %v6170
    %v6172 = vrot.slane %v6144, %v6171
    %v6173 = vcombine.low %v6151, %v6158
    %v6174 = vcombine.low %v6165, %v6172
    %v6176 = vunpack.c.l.s4 1966171168
    %v6177 = vunpack.c.0.s8 %v6176
    %v6178 = vlaneseq
    %v6179 = vshrl.u32 %v6178, 7
    %v6180 = vsub.s32 %v6177, %v6179
    %v6181 = vrot.slane %v6173, %v6180
    %v6183 = vunpack.c.l.s4 1966171168
    %v6184 = vunpack.c.0.s8 %v6183
    %v6185 = vlaneseq
    %v6186 = vshrl.u32 %v6185, 7
    %v6187 = vsub.s32 %v6184, %v6186
    %v6188 = vrot.slane %v6174, %v6187
    %v6189 = vcombine.low %v6181, %v6188
    %v6190 = vcombine.low %v3278, %v3282
    %v6191 = vcombine.low %v3286, %v3290
    %v6192 = vcombine.low %v3294, %v3298
    %v6193 = vcombine.low %v3302, %v3306
    %v6195 = vunpack.c.l.s4 1966171168
    %v6196 = vunpack.c.0.s8 %v6195
    %v6197 = vlaneseq
    %v6198 = vshrl.u32 %v6197, 7
    %v6199 = vsub.s32 %v6196, %v6198
    %v6200 = vrot.slane %v6190, %v6199
    %v6202 = vunpack.c.l.s4 1966171168
    %v6203 = vunpack.c.0.s8 %v6202
    %v6204 = vlaneseq
    %v6205 = vshrl.u32 %v6204, 7
    %v6206 = vsub.s32 %v6203, %v6205
    %v6207 = vrot.slane %v6191, %v6206
    %v6209 = vunpack.c.l.s4 1966171168
    %v6210 = vunpack.c.0.s8 %v6209
    %v6211 = vlaneseq
    %v6212 = vshrl.u32 %v6211, 7
    %v6213 = vsub.s32 %v6210, %v6212
    %v6214 = vrot.slane %v6192, %v6213
    %v6216 = vunpack.c.l.s4 1966171168
    %v6217 = vunpack.c.0.s8 %v6216
    %v6218 = vlaneseq
    %v6219 = vshrl.u32 %v6218, 7
    %v6220 = vsub.s32 %v6217, %v6219
    %v6221 = vrot.slane %v6193, %v6220
    %v6222 = vcombine.low %v6200, %v6207
    %v6223 = vcombine.low %v6214, %v6221
    %v6225 = vunpack.c.l.s4 1966171168
    %v6226 = vunpack.c.0.s8 %v6225
    %v6227 = vlaneseq
    %v6228 = vshrl.u32 %v6227, 7
    %v6229 = vsub.s32 %v6226, %v6228
    %v6230 = vrot.slane %v6222, %v6229
    %v6232 = vunpack.c.l.s4 1966171168
    %v6233 = vunpack.c.0.s8 %v6232
    %v6234 = vlaneseq
    %v6235 = vshrl.u32 %v6234, 7
    %v6236 = vsub.s32 %v6233, %v6235
    %v6237 = vrot.slane %v6223, %v6236
    %v6238 = vcombine.low %v6230, %v6237
    %v6239 = vcombine.low %v3310, %v3314
    %v6240 = vcombine.low %v3318, %v3322
    %v6241 = vcombine.low %v3326, %v3330
    %v6242 = vcombine.low %v3334, %v3338
    %v6244 = vunpack.c.l.s4 1966171168
    %v6245 = vunpack.c.0.s8 %v6244
    %v6246 = vlaneseq
    %v6247 = vshrl.u32 %v6246, 7
    %v6248 = vsub.s32 %v6245, %v6247
    %v6249 = vrot.slane %v6239, %v6248
    %v6251 = vunpack.c.l.s4 1966171168
    %v6252 = vunpack.c.0.s8 %v6251
    %v6253 = vlaneseq
    %v6254 = vshrl.u32 %v6253, 7
    %v6255 = vsub.s32 %v6252, %v6254
    %v6256 = vrot.slane %v6240, %v6255
    %v6258 = vunpack.c.l.s4 1966171168
    %v6259 = vunpack.c.0.s8 %v6258
    %v6260 = vlaneseq
    %v6261 = vshrl.u32 %v6260, 7
    %v6262 = vsub.s32 %v6259, %v6261
    %v6263 = vrot.slane %v6241, %v6262
    %v6265 = vunpack.c.l.s4 1966171168
    %v6266 = vunpack.c.0.s8 %v6265
    %v6267 = vlaneseq
    %v6268 = vshrl.u32 %v6267, 7
    %v6269 = vsub.s32 %v6266, %v6268
    %v6270 = vrot.slane %v6242, %v6269
    %v6271 = vcombine.low %v6249, %v6256
    %v6272 = vcombine.low %v6263, %v6270
    %v6274 = vunpack.c.l.s4 1966171168
    %v6275 = vunpack.c.0.s8 %v6274
    %v6276 = vlaneseq
    %v6277 = vshrl.u32 %v6276, 7
    %v6278 = vsub.s32 %v6275, %v6277
    %v6279 = vrot.slane %v6271, %v6278
    %v6281 = vunpack.c.l.s4 1966171168
    %v6282 = vunpack.c.0.s8 %v6281
    %v6283 = vlaneseq
    %v6284 = vshrl.u32 %v6283, 7
    %v6285 = vsub.s32 %v6282, %v6284
    %v6286 = vrot.slane %v6272, %v6285
    %v6287 = vcombine.low %v6279, %v6286
    %v6288 = vcombine.low %v3342, %v3346
    %v6289 = vcombine.low %v3350, %v3354
    %v6290 = vcombine.low %v3358, %v3362
    %v6291 = vcombine.low %v3366, %v3370
    %v6293 = vunpack.c.l.s4 1966171168
    %v6294 = vunpack.c.0.s8 %v6293
    %v6295 = vlaneseq
    %v6296 = vshrl.u32 %v6295, 7
    %v6297 = vsub.s32 %v6294, %v6296
    %v6298 = vrot.slane %v6288, %v6297
    %v6300 = vunpack.c.l.s4 1966171168
    %v6301 = vunpack.c.0.s8 %v6300
    %v6302 = vlaneseq
    %v6303 = vshrl.u32 %v6302, 7
    %v6304 = vsub.s32 %v6301, %v6303
    %v6305 = vrot.slane %v6289, %v6304
    %v6307 = vunpack.c.l.s4 1966171168
    %v6308 = vunpack.c.0.s8 %v6307
    %v6309 = vlaneseq
    %v6310 = vshrl.u32 %v6309, 7
    %v6311 = vsub.s32 %v6308, %v6310
    %v6312 = vrot.slane %v6290, %v6311
    %v6314 = vunpack.c.l.s4 1966171168
    %v6315 = vunpack.c.0.s8 %v6314
    %v6316 = vlaneseq
    %v6317 = vshrl.u32 %v6316, 7
    %v6318 = vsub.s32 %v6315, %v6317
    %v6319 = vrot.slane %v6291, %v6318
    %v6320 = vcombine.low %v6298, %v6305
    %v6321 = vcombine.low %v6312, %v6319
    %v6323 = vunpack.c.l.s4 1966171168
    %v6324 = vunpack.c.0.s8 %v6323
    %v6325 = vlaneseq
    %v6326 = vshrl.u32 %v6325, 7
    %v6327 = vsub.s32 %v6324, %v6326
    %v6328 = vrot.slane %v6320, %v6327
    %v6330 = vunpack.c.l.s4 1966171168
    %v6331 = vunpack.c.0.s8 %v6330
    %v6332 = vlaneseq
    %v6333 = vshrl.u32 %v6332, 7
    %v6334 = vsub.s32 %v6331, %v6333
    %v6335 = vrot.slane %v6321, %v6334
    %v6336 = vcombine.low %v6328, %v6335
    %v6337 = vcombine.low %v3374, %v3378
    %v6338 = vcombine.low %v3382, %v3386
    %v6339 = vcombine.low %v3390, %v3394
    %v6340 = vcombine.low %v3398, %v3402
    %v6342 = vunpack.c.l.s4 1966171168
    %v6343 = vunpack.c.0.s8 %v6342
    %v6344 = vlaneseq
    %v6345 = vshrl.u32 %v6344, 7
    %v6346 = vsub.s32 %v6343, %v6345
    %v6347 = vrot.slane %v6337, %v6346
    %v6349 = vunpack.c.l.s4 1966171168
    %v6350 = vunpack.c.0.s8 %v6349
    %v6351 = vlaneseq
    %v6352 = vshrl.u32 %v6351, 7
    %v6353 = vsub.s32 %v6350, %v6352
    %v6354 = vrot.slane %v6338, %v6353
    %v6356 = vunpack.c.l.s4 1966171168
    %v6357 = vunpack.c.0.s8 %v6356
    %v6358 = vlaneseq
    %v6359 = vshrl.u32 %v6358, 7
    %v6360 = vsub.s32 %v6357, %v6359
    %v6361 = vrot.slane %v6339, %v6360
    %v6363 = vunpack.c.l.s4 1966171168
    %v6364 = vunpack.c.0.s8 %v6363
    %v6365 = vlaneseq
    %v6366 = vshrl.u32 %v6365, 7
    %v6367 = vsub.s32 %v6364, %v6366
    %v6368 = vrot.slane %v6340, %v6367
    %v6369 = vcombine.low %v6347, %v6354
    %v6370 = vcombine.low %v6361, %v6368
    %v6372 = vunpack.c.l.s4 1966171168
    %v6373 = vunpack.c.0.s8 %v6372
    %v6374 = vlaneseq
    %v6375 = vshrl.u32 %v6374, 7
    %v6376 = vsub.s32 %v6373, %v6375
    %v6377 = vrot.slane %v6369, %v6376
    %v6379 = vunpack.c.l.s4 1966171168
    %v6380 = vunpack.c.0.s8 %v6379
    %v6381 = vlaneseq
    %v6382 = vshrl.u32 %v6381, 7
    %v6383 = vsub.s32 %v6380, %v6382
    %v6384 = vrot.slane %v6370, %v6383
    %v6385 = vcombine.low %v6377, %v6384
    %v6386 = vcombine.low %v3406, %v3410
    %v6387 = vcombine.low %v3414, %v3418
    %v6388 = vcombine.low %v3422, %v3426
    %v6389 = vcombine.low %v3430, %v3434
    %v6391 = vunpack.c.l.s4 1966171168
    %v6392 = vunpack.c.0.s8 %v6391
    %v6393 = vlaneseq
    %v6394 = vshrl.u32 %v6393, 7
    %v6395 = vsub.s32 %v6392, %v6394
    %v6396 = vrot.slane %v6386, %v6395
    %v6398 = vunpack.c.l.s4 1966171168
    %v6399 = vunpack.c.0.s8 %v6398
    %v6400 = vlaneseq
    %v6401 = vshrl.u32 %v6400, 7
    %v6402 = vsub.s32 %v6399, %v6401
    %v6403 = vrot.slane %v6387, %v6402
    %v6405 = vunpack.c.l.s4 1966171168
    %v6406 = vunpack.c.0.s8 %v6405
    %v6407 = vlaneseq
    %v6408 = vshrl.u32 %v6407, 7
    %v6409 = vsub.s32 %v6406, %v6408
    %v6410 = vrot.slane %v6388, %v6409
    %v6412 = vunpack.c.l.s4 1966171168
    %v6413 = vunpack.c.0.s8 %v6412
    %v6414 = vlaneseq
    %v6415 = vshrl.u32 %v6414, 7
    %v6416 = vsub.s32 %v6413, %v6415
    %v6417 = vrot.slane %v6389, %v6416
    %v6418 = vcombine.low %v6396, %v6403
    %v6419 = vcombine.low %v6410, %v6417
    %v6421 = vunpack.c.l.s4 1966171168
    %v6422 = vunpack.c.0.s8 %v6421
    %v6423 = vlaneseq
    %v6424 = vshrl.u32 %v6423, 7
    %v6425 = vsub.s32 %v6422, %v6424
    %v6426 = vrot.slane %v6418, %v6425
    %v6428 = vunpack.c.l.s4 1966171168
    %v6429 = vunpack.c.0.s8 %v6428
    %v6430 = vlaneseq
    %v6431 = vshrl.u32 %v6430, 7
    %v6432 = vsub.s32 %v6429, %v6431
    %v6433 = vrot.slane %v6419, %v6432
    %v6434 = vcombine.low %v6426, %v6433
    %v6435 = vcombine.low %v3438, %v3442
    %v6436 = vcombine.low %v3446, %v3450
    %v6437 = vcombine.low %v3454, %v3458
    %v6438 = vcombine.low %v3462, %v3466
    %v6440 = vunpack.c.l.s4 1966171168
    %v6441 = vunpack.c.0.s8 %v6440
    %v6442 = vlaneseq
    %v6443 = vshrl.u32 %v6442, 7
    %v6444 = vsub.s32 %v6441, %v6443
    %v6445 = vrot.slane %v6435, %v6444
    %v6447 = vunpack.c.l.s4 1966171168
    %v6448 = vunpack.c.0.s8 %v6447
    %v6449 = vlaneseq
    %v6450 = vshrl.u32 %v6449, 7
    %v6451 = vsub.s32 %v6448, %v6450
    %v6452 = vrot.slane %v6436, %v6451
    %v6454 = vunpack.c.l.s4 1966171168
    %v6455 = vunpack.c.0.s8 %v6454
    %v6456 = vlaneseq
    %v6457 = vshrl.u32 %v6456, 7
    %v6458 = vsub.s32 %v6455, %v6457
    %v6459 = vrot.slane %v6437, %v6458
    %v6461 = vunpack.c.l.s4 1966171168
    %v6462 = vunpack.c.0.s8 %v6461
    %v6463 = vlaneseq
    %v6464 = vshrl.u32 %v6463, 7
    %v6465 = vsub.s32 %v6462, %v6464
    %v6466 = vrot.slane %v6438, %v6465
    %v6467 = vcombine.low %v6445, %v6452
    %v6468 = vcombine.low %v6459, %v6466
    %v6470 = vunpack.c.l.s4 1966171168
    %v6471 = vunpack.c.0.s8 %v6470
    %v6472 = vlaneseq
    %v6473 = vshrl.u32 %v6472, 7
    %v6474 = vsub.s32 %v6471, %v6473
    %v6475 = vrot.slane %v6467, %v6474
    %v6477 = vunpack.c.l.s4 1966171168
    %v6478 = vunpack.c.0.s8 %v6477
    %v6479 = vlaneseq
    %v6480 = vshrl.u32 %v6479, 7
    %v6481 = vsub.s32 %v6478, %v6480
    %v6482 = vrot.slane %v6468, %v6481
    %v6483 = vcombine.low %v6475, %v6482
    %v6484 = vcombine.low %v3470, %v3474
    %v6485 = vcombine.low %v3478, %v3482
    %v6486 = vcombine.low %v3486, %v3490
    %v6487 = vcombine.low %v3494, %v3498
    %v6489 = vunpack.c.l.s4 1966171168
    %v6490 = vunpack.c.0.s8 %v6489
    %v6491 = vlaneseq
    %v6492 = vshrl.u32 %v6491, 7
    %v6493 = vsub.s32 %v6490, %v6492
    %v6494 = vrot.slane %v6484, %v6493
    %v6496 = vunpack.c.l.s4 1966171168
    %v6497 = vunpack.c.0.s8 %v6496
    %v6498 = vlaneseq
    %v6499 = vshrl.u32 %v6498, 7
    %v6500 = vsub.s32 %v6497, %v6499
    %v6501 = vrot.slane %v6485, %v6500
    %v6503 = vunpack.c.l.s4 1966171168
    %v6504 = vunpack.c.0.s8 %v6503
    %v6505 = vlaneseq
    %v6506 = vshrl.u32 %v6505, 7
    %v6507 = vsub.s32 %v6504, %v6506
    %v6508 = vrot.slane %v6486, %v6507
    %v6510 = vunpack.c.l.s4 1966171168
    %v6511 = vunpack.c.0.s8 %v6510
    %v6512 = vlaneseq
    %v6513 = vshrl.u32 %v6512, 7
    %v6514 = vsub.s32 %v6511, %v6513
    %v6515 = vrot.slane %v6487, %v6514
    %v6516 = vcombine.low %v6494, %v6501
    %v6517 = vcombine.low %v6508, %v6515
    %v6519 = vunpack.c.l.s4 1966171168
    %v6520 = vunpack.c.0.s8 %v6519
    %v6521 = vlaneseq
    %v6522 = vshrl.u32 %v6521, 7
    %v6523 = vsub.s32 %v6520, %v6522
    %v6524 = vrot.slane %v6516, %v6523
    %v6526 = vunpack.c.l.s4 1966171168
    %v6527 = vunpack.c.0.s8 %v6526
    %v6528 = vlaneseq
    %v6529 = vshrl.u32 %v6528, 7
    %v6530 = vsub.s32 %v6527, %v6529
    %v6531 = vrot.slane %v6517, %v6530
    %v6532 = vcombine.low %v6524, %v6531
    %v6533 = vcombine.low %v3502, %v3506
    %v6534 = vcombine.low %v3510, %v3514
    %v6535 = vcombine.low %v3518, %v3522
    %v6536 = vcombine.low %v3526, %v3530
    %v6538 = vunpack.c.l.s4 1966171168
    %v6539 = vunpack.c.0.s8 %v6538
    %v6540 = vlaneseq
    %v6541 = vshrl.u32 %v6540, 7
    %v6542 = vsub.s32 %v6539, %v6541
    %v6543 = vrot.slane %v6533, %v6542
    %v6545 = vunpack.c.l.s4 1966171168
    %v6546 = vunpack.c.0.s8 %v6545
    %v6547 = vlaneseq
    %v6548 = vshrl.u32 %v6547, 7
    %v6549 = vsub.s32 %v6546, %v6548
    %v6550 = vrot.slane %v6534, %v6549
    %v6552 = vunpack.c.l.s4 1966171168
    %v6553 = vunpack.c.0.s8 %v6552
    %v6554 = vlaneseq
    %v6555 = vshrl.u32 %v6554, 7
    %v6556 = vsub.s32 %v6553, %v6555
    %v6557 = vrot.slane %v6535, %v6556
    %v6559 = vunpack.c.l.s4 1966171168
    %v6560 = vunpack.c.0.s8 %v6559
    %v6561 = vlaneseq
    %v6562 = vshrl.u32 %v6561, 7
    %v6563 = vsub.s32 %v6560, %v6562
    %v6564 = vrot.slane %v6536, %v6563
    %v6565 = vcombine.low %v6543, %v6550
    %v6566 = vcombine.low %v6557, %v6564
    %v6568 = vunpack.c.l.s4 1966171168
    %v6569 = vunpack.c.0.s8 %v6568
    %v6570 = vlaneseq
    %v6571 = vshrl.u32 %v6570, 7
    %v6572 = vsub.s32 %v6569, %v6571
    %v6573 = vrot.slane %v6565, %v6572
    %v6575 = vunpack.c.l.s4 1966171168
    %v6576 = vunpack.c.0.s8 %v6575
    %v6577 = vlaneseq
    %v6578 = vshrl.u32 %v6577, 7
    %v6579 = vsub.s32 %v6576, %v6578
    %v6580 = vrot.slane %v6566, %v6579
    %v6581 = vcombine.low %v6573, %v6580
    %v6582 = vcombine.low %v3534, %v3538
    %v6583 = vcombine.low %v3542, %v3546
    %v6584 = vcombine.low %v3550, %v3554
    %v6585 = vcombine.low %v3558, %v3562
    %v6587 = vunpack.c.l.s4 1966171168
    %v6588 = vunpack.c.0.s8 %v6587
    %v6589 = vlaneseq
    %v6590 = vshrl.u32 %v6589, 7
    %v6591 = vsub.s32 %v6588, %v6590
    %v6592 = vrot.slane %v6582, %v6591
    %v6594 = vunpack.c.l.s4 1966171168
    %v6595 = vunpack.c.0.s8 %v6594
    %v6596 = vlaneseq
    %v6597 = vshrl.u32 %v6596, 7
    %v6598 = vsub.s32 %v6595, %v6597
    %v6599 = vrot.slane %v6583, %v6598
    %v6601 = vunpack.c.l.s4 1966171168
    %v6602 = vunpack.c.0.s8 %v6601
    %v6603 = vlaneseq
    %v6604 = vshrl.u32 %v6603, 7
    %v6605 = vsub.s32 %v6602, %v6604
    %v6606 = vrot.slane %v6584, %v6605
    %v6608 = vunpack.c.l.s4 1966171168
    %v6609 = vunpack.c.0.s8 %v6608
    %v6610 = vlaneseq
    %v6611 = vshrl.u32 %v6610, 7
    %v6612 = vsub.s32 %v6609, %v6611
    %v6613 = vrot.slane %v6585, %v6612
    %v6614 = vcombine.low %v6592, %v6599
    %v6615 = vcombine.low %v6606, %v6613
    %v6617 = vunpack.c.l.s4 1966171168
    %v6618 = vunpack.c.0.s8 %v6617
    %v6619 = vlaneseq
    %v6620 = vshrl.u32 %v6619, 7
    %v6621 = vsub.s32 %v6618, %v6620
    %v6622 = vrot.slane %v6614, %v6621
    %v6624 = vunpack.c.l.s4 1966171168
    %v6625 = vunpack.c.0.s8 %v6624
    %v6626 = vlaneseq
    %v6627 = vshrl.u32 %v6626, 7
    %v6628 = vsub.s32 %v6625, %v6627
    %v6629 = vrot.slane %v6615, %v6628
    %v6630 = vcombine.low %v6622, %v6629
    %v6631 = vcombine.low %v3566, %v3570
    %v6632 = vcombine.low %v3574, %v3578
    %v6633 = vcombine.low %v3582, %v3586
    %v6634 = vcombine.low %v3590, %v3594
    %v6636 = vunpack.c.l.s4 1966171168
    %v6637 = vunpack.c.0.s8 %v6636
    %v6638 = vlaneseq
    %v6639 = vshrl.u32 %v6638, 7
    %v6640 = vsub.s32 %v6637, %v6639
    %v6641 = vrot.slane %v6631, %v6640
    %v6643 = vunpack.c.l.s4 1966171168
    %v6644 = vunpack.c.0.s8 %v6643
    %v6645 = vlaneseq
    %v6646 = vshrl.u32 %v6645, 7
    %v6647 = vsub.s32 %v6644, %v6646
    %v6648 = vrot.slane %v6632, %v6647
    %v6650 = vunpack.c.l.s4 1966171168
    %v6651 = vunpack.c.0.s8 %v6650
    %v6652 = vlaneseq
    %v6653 = vshrl.u32 %v6652, 7
    %v6654 = vsub.s32 %v6651, %v6653
    %v6655 = vrot.slane %v6633, %v6654
    %v6657 = vunpack.c.l.s4 1966171168
    %v6658 = vunpack.c.0.s8 %v6657
    %v6659 = vlaneseq
    %v6660 = vshrl.u32 %v6659, 7
    %v6661 = vsub.s32 %v6658, %v6660
    %v6662 = vrot.slane %v6634, %v6661
    %v6663 = vcombine.low %v6641, %v6648
    %v6664 = vcombine.low %v6655, %v6662
    %v6666 = vunpack.c.l.s4 1966171168
    %v6667 = vunpack.c.0.s8 %v6666
    %v6668 = vlaneseq
    %v6669 = vshrl.u32 %v6668, 7
    %v6670 = vsub.s32 %v6667, %v6669
    %v6671 = vrot.slane %v6663, %v6670
    %v6673 = vunpack.c.l.s4 1966171168
    %v6674 = vunpack.c.0.s8 %v6673
    %v6675 = vlaneseq
    %v6676 = vshrl.u32 %v6675, 7
    %v6677 = vsub.s32 %v6674, %v6676
    %v6678 = vrot.slane %v6664, %v6677
    %v6679 = vcombine.low %v6671, %v6678
    %v6680 = vcombine.low %v3598, %v3602
    %v6681 = vcombine.low %v3606, %v3610
    %v6682 = vcombine.low %v3614, %v3618
    %v6683 = vcombine.low %v3622, %v3626
    %v6685 = vunpack.c.l.s4 1966171168
    %v6686 = vunpack.c.0.s8 %v6685
    %v6687 = vlaneseq
    %v6688 = vshrl.u32 %v6687, 7
    %v6689 = vsub.s32 %v6686, %v6688
    %v6690 = vrot.slane %v6680, %v6689
    %v6692 = vunpack.c.l.s4 1966171168
    %v6693 = vunpack.c.0.s8 %v6692
    %v6694 = vlaneseq
    %v6695 = vshrl.u32 %v6694, 7
    %v6696 = vsub.s32 %v6693, %v6695
    %v6697 = vrot.slane %v6681, %v6696
    %v6699 = vunpack.c.l.s4 1966171168
    %v6700 = vunpack.c.0.s8 %v6699
    %v6701 = vlaneseq
    %v6702 = vshrl.u32 %v6701, 7
    %v6703 = vsub.s32 %v6700, %v6702
    %v6704 = vrot.slane %v6682, %v6703
    %v6706 = vunpack.c.l.s4 1966171168
    %v6707 = vunpack.c.0.s8 %v6706
    %v6708 = vlaneseq
    %v6709 = vshrl.u32 %v6708, 7
    %v6710 = vsub.s32 %v6707, %v6709
    %v6711 = vrot.slane %v6683, %v6710
    %v6712 = vcombine.low %v6690, %v6697
    %v6713 = vcombine.low %v6704, %v6711
    %v6715 = vunpack.c.l.s4 1966171168
    %v6716 = vunpack.c.0.s8 %v6715
    %v6717 = vlaneseq
    %v6718 = vshrl.u32 %v6717, 7
    %v6719 = vsub.s32 %v6716, %v6718
    %v6720 = vrot.slane %v6712, %v6719
    %v6722 = vunpack.c.l.s4 1966171168
    %v6723 = vunpack.c.0.s8 %v6722
    %v6724 = vlaneseq
    %v6725 = vshrl.u32 %v6724, 7
    %v6726 = vsub.s32 %v6723, %v6725
    %v6727 = vrot.slane %v6713, %v6726
    %v6728 = vcombine.low %v6720, %v6727
    %v6729 = vcombine.low %v3630, %v3634
    %v6730 = vcombine.low %v3638, %v3642
    %v6731 = vcombine.low %v3646, %v3650
    %v6732 = vcombine.low %v3654, %v3658
    %v6734 = vunpack.c.l.s4 1966171168
    %v6735 = vunpack.c.0.s8 %v6734
    %v6736 = vlaneseq
    %v6737 = vshrl.u32 %v6736, 7
    %v6738 = vsub.s32 %v6735, %v6737
    %v6739 = vrot.slane %v6729, %v6738
    %v6741 = vunpack.c.l.s4 1966171168
    %v6742 = vunpack.c.0.s8 %v6741
    %v6743 = vlaneseq
    %v6744 = vshrl.u32 %v6743, 7
    %v6745 = vsub.s32 %v6742, %v6744
    %v6746 = vrot.slane %v6730, %v6745
    %v6748 = vunpack.c.l.s4 1966171168
    %v6749 = vunpack.c.0.s8 %v6748
    %v6750 = vlaneseq
    %v6751 = vshrl.u32 %v6750, 7
    %v6752 = vsub.s32 %v6749, %v6751
    %v6753 = vrot.slane %v6731, %v6752
    %v6755 = vunpack.c.l.s4 1966171168
    %v6756 = vunpack.c.0.s8 %v6755
    %v6757 = vlaneseq
    %v6758 = vshrl.u32 %v6757, 7
    %v6759 = vsub.s32 %v6756, %v6758
    %v6760 = vrot.slane %v6732, %v6759
    %v6761 = vcombine.low %v6739, %v6746
    %v6762 = vcombine.low %v6753, %v6760
    %v6764 = vunpack.c.l.s4 1966171168
    %v6765 = vunpack.c.0.s8 %v6764
    %v6766 = vlaneseq
    %v6767 = vshrl.u32 %v6766, 7
    %v6768 = vsub.s32 %v6765, %v6767
    %v6769 = vrot.slane %v6761, %v6768
    %v6771 = vunpack.c.l.s4 1966171168
    %v6772 = vunpack.c.0.s8 %v6771
    %v6773 = vlaneseq
    %v6774 = vshrl.u32 %v6773, 7
    %v6775 = vsub.s32 %v6772, %v6774
    %v6776 = vrot.slane %v6762, %v6775
    %v6777 = vcombine.low %v6769, %v6776
    %v6778 = vcombine.low %v3662, %v3666
    %v6779 = vcombine.low %v3670, %v3674
    %v6780 = vcombine.low %v3678, %v3682
    %v6781 = vcombine.low %v3686, %v3690
    %v6783 = vunpack.c.l.s4 1966171168
    %v6784 = vunpack.c.0.s8 %v6783
    %v6785 = vlaneseq
    %v6786 = vshrl.u32 %v6785, 7
    %v6787 = vsub.s32 %v6784, %v6786
    %v6788 = vrot.slane %v6778, %v6787
    %v6790 = vunpack.c.l.s4 1966171168
    %v6791 = vunpack.c.0.s8 %v6790
    %v6792 = vlaneseq
    %v6793 = vshrl.u32 %v6792, 7
    %v6794 = vsub.s32 %v6791, %v6793
    %v6795 = vrot.slane %v6779, %v6794
    %v6797 = vunpack.c.l.s4 1966171168
    %v6798 = vunpack.c.0.s8 %v6797
    %v6799 = vlaneseq
    %v6800 = vshrl.u32 %v6799, 7
    %v6801 = vsub.s32 %v6798, %v6800
    %v6802 = vrot.slane %v6780, %v6801
    %v6804 = vunpack.c.l.s4 1966171168
    %v6805 = vunpack.c.0.s8 %v6804
    %v6806 = vlaneseq
    %v6807 = vshrl.u32 %v6806, 7
    %v6808 = vsub.s32 %v6805, %v6807
    %v6809 = vrot.slane %v6781, %v6808
    %v6810 = vcombine.low %v6788, %v6795
    %v6811 = vcombine.low %v6802, %v6809
    %v6813 = vunpack.c.l.s4 1966171168
    %v6814 = vunpack.c.0.s8 %v6813
    %v6815 = vlaneseq
    %v6816 = vshrl.u32 %v6815, 7
    %v6817 = vsub.s32 %v6814, %v6816
    %v6818 = vrot.slane %v6810, %v6817
    %v6820 = vunpack.c.l.s4 1966171168
    %v6821 = vunpack.c.0.s8 %v6820
    %v6822 = vlaneseq
    %v6823 = vshrl.u32 %v6822, 7
    %v6824 = vsub.s32 %v6821, %v6823
    %v6825 = vrot.slane %v6811, %v6824
    %v6826 = vcombine.low %v6818, %v6825
    %6827 = vset.pattern.permute.xlu0 0
    %6828 = vperm.xlu0 %6827, %v3739
    %v6829 = vpop.permute.xlu0 %6828
    %6830 = vset.pattern.permute.xlu0 0
    %6831 = vperm.xlu0 %6830, %v3788
    %v6832 = vpop.permute.xlu0 %6831
    %6833 = vset.pattern.permute.xlu0 0
    %6834 = vperm.xlu0 %6833, %v3837
    %v6835 = vpop.permute.xlu0 %6834
    %6836 = vset.pattern.permute.xlu0 0
    %6837 = vperm.xlu0 %6836, %v3886
    %v6838 = vpop.permute.xlu0 %6837
    %6839 = vset.pattern.permute.xlu0 0
    %6840 = vperm.xlu0 %6839, %v3935
    %v6841 = vpop.permute.xlu0 %6840
    %6842 = vset.pattern.permute.xlu0 0
    %6843 = vperm.xlu0 %6842, %v3984
    %v6844 = vpop.permute.xlu0 %6843
    %6845 = vset.pattern.permute.xlu0 0
    %6846 = vperm.xlu0 %6845, %v4033
    %v6847 = vpop.permute.xlu0 %6846
    %6848 = vset.pattern.permute.xlu0 0
    %6849 = vperm.xlu0 %6848, %v4082
    %v6850 = vpop.permute.xlu0 %6849
    %6851 = vset.pattern.permute.xlu0 0
    %6852 = vperm.xlu0 %6851, %v4131
    %v6853 = vpop.permute.xlu0 %6852
    %6854 = vset.pattern.permute.xlu0 0
    %6855 = vperm.xlu0 %6854, %v4180
    %v6856 = vpop.permute.xlu0 %6855
    %6857 = vset.pattern.permute.xlu0 0
    %6858 = vperm.xlu0 %6857, %v4229
    %v6859 = vpop.permute.xlu0 %6858
    %6860 = vset.pattern.permute.xlu0 0
    %6861 = vperm.xlu0 %6860, %v4278
    %v6862 = vpop.permute.xlu0 %6861
    %6863 = vset.pattern.permute.xlu0 0
    %6864 = vperm.xlu0 %6863, %v4327
    %v6865 = vpop.permute.xlu0 %6864
    %6866 = vset.pattern.permute.xlu0 0
    %6867 = vperm.xlu0 %6866, %v4376
    %v6868 = vpop.permute.xlu0 %6867
    %6869 = vset.pattern.permute.xlu0 0
    %6870 = vperm.xlu0 %6869, %v4425
    %v6871 = vpop.permute.xlu0 %6870
    %6872 = vset.pattern.permute.xlu0 0
    %6873 = vperm.xlu0 %6872, %v4474
    %v6874 = vpop.permute.xlu0 %6873
    %6875 = vset.pattern.permute.xlu0 0
    %6876 = vperm.xlu0 %6875, %v4523
    %v6877 = vpop.permute.xlu0 %6876
    %6878 = vset.pattern.permute.xlu0 0
    %6879 = vperm.xlu0 %6878, %v4572
    %v6880 = vpop.permute.xlu0 %6879
    %6881 = vset.pattern.permute.xlu0 0
    %6882 = vperm.xlu0 %6881, %v4621
    %v6883 = vpop.permute.xlu0 %6882
    %6884 = vset.pattern.permute.xlu0 0
    %6885 = vperm.xlu0 %6884, %v4670
    %v6886 = vpop.permute.xlu0 %6885
    %6887 = vset.pattern.permute.xlu0 0
    %6888 = vperm.xlu0 %6887, %v4719
    %v6889 = vpop.permute.xlu0 %6888
    %6890 = vset.pattern.permute.xlu0 0
    %6891 = vperm.xlu0 %6890, %v4768
    %v6892 = vpop.permute.xlu0 %6891
    %6893 = vset.pattern.permute.xlu0 0
    %6894 = vperm.xlu0 %6893, %v4817
    %v6895 = vpop.permute.xlu0 %6894
    %6896 = vset.pattern.permute.xlu0 0
    %6897 = vperm.xlu0 %6896, %v4866
    %v6898 = vpop.permute.xlu0 %6897
    %6899 = vset.pattern.permute.xlu0 0
    %6900 = vperm.xlu0 %6899, %v4915
    %v6901 = vpop.permute.xlu0 %6900
    %6902 = vset.pattern.permute.xlu0 0
    %6903 = vperm.xlu0 %6902, %v4964
    %v6904 = vpop.permute.xlu0 %6903
    %6905 = vset.pattern.permute.xlu0 0
    %6906 = vperm.xlu0 %6905, %v5013
    %v6907 = vpop.permute.xlu0 %6906
    %6908 = vset.pattern.permute.xlu0 0
    %6909 = vperm.xlu0 %6908, %v5062
    %v6910 = vpop.permute.xlu0 %6909
    %6911 = vset.pattern.permute.xlu0 0
    %6912 = vperm.xlu0 %6911, %v5111
    %v6913 = vpop.permute.xlu0 %6912
    %6914 = vset.pattern.permute.xlu0 0
    %6915 = vperm.xlu0 %6914, %v5160
    %v6916 = vpop.permute.xlu0 %6915
    %6917 = vset.pattern.permute.xlu0 0
    %6918 = vperm.xlu0 %6917, %v5209
    %v6919 = vpop.permute.xlu0 %6918
    %6920 = vset.pattern.permute.xlu0 0
    %6921 = vperm.xlu0 %6920, %v5258
    %v6922 = vpop.permute.xlu0 %6921
    %6923 = vset.pattern.permute.xlu0 0
    %6924 = vperm.xlu0 %6923, %v5307
    %v6925 = vpop.permute.xlu0 %6924
    %6926 = vset.pattern.permute.xlu0 0
    %6927 = vperm.xlu0 %6926, %v5356
    %v6928 = vpop.permute.xlu0 %6927
    %6929 = vset.pattern.permute.xlu0 0
    %6930 = vperm.xlu0 %6929, %v5405
    %v6931 = vpop.permute.xlu0 %6930
    %6932 = vset.pattern.permute.xlu0 0
    %6933 = vperm.xlu0 %6932, %v5454
    %v6934 = vpop.permute.xlu0 %6933
    %6935 = vset.pattern.permute.xlu0 0
    %6936 = vperm.xlu0 %6935, %v5503
    %v6937 = vpop.permute.xlu0 %6936
    %6938 = vset.pattern.permute.xlu0 0
    %6939 = vperm.xlu0 %6938, %v5552
    %v6940 = vpop.permute.xlu0 %6939
    %6941 = vset.pattern.permute.xlu0 0
    %6942 = vperm.xlu0 %6941, %v5601
    %v6943 = vpop.permute.xlu0 %6942
    %6944 = vset.pattern.permute.xlu0 0
    %6945 = vperm.xlu0 %6944, %v5650
    %v6946 = vpop.permute.xlu0 %6945
    %6947 = vset.pattern.permute.xlu0 0
    %6948 = vperm.xlu0 %6947, %v5699
    %v6949 = vpop.permute.xlu0 %6948
    %6950 = vset.pattern.permute.xlu0 0
    %6951 = vperm.xlu0 %6950, %v5748
    %v6952 = vpop.permute.xlu0 %6951
    %6953 = vset.pattern.permute.xlu0 0
    %6954 = vperm.xlu0 %6953, %v5797
    %v6955 = vpop.permute.xlu0 %6954
    %6956 = vset.pattern.permute.xlu0 0
    %6957 = vperm.xlu0 %6956, %v5846
    %v6958 = vpop.permute.xlu0 %6957
    %6959 = vset.pattern.permute.xlu0 0
    %6960 = vperm.xlu0 %6959, %v5895
    %v6961 = vpop.permute.xlu0 %6960
    %6962 = vset.pattern.permute.xlu0 0
    %6963 = vperm.xlu0 %6962, %v5944
    %v6964 = vpop.permute.xlu0 %6963
    %6965 = vset.pattern.permute.xlu0 0
    %6966 = vperm.xlu0 %6965, %v5993
    %v6967 = vpop.permute.xlu0 %6966
    %6968 = vset.pattern.permute.xlu0 0
    %6969 = vperm.xlu0 %6968, %v6042
    %v6970 = vpop.permute.xlu0 %6969
    %6971 = vset.pattern.permute.xlu0 0
    %6972 = vperm.xlu0 %6971, %v6091
    %v6973 = vpop.permute.xlu0 %6972
    %6974 = vset.pattern.permute.xlu0 0
    %6975 = vperm.xlu0 %6974, %v6140
    %v6976 = vpop.permute.xlu0 %6975
    %6977 = vset.pattern.permute.xlu0 0
    %6978 = vperm.xlu0 %6977, %v6189
    %v6979 = vpop.permute.xlu0 %6978
    %6980 = vset.pattern.permute.xlu0 0
    %6981 = vperm.xlu0 %6980, %v6238
    %v6982 = vpop.permute.xlu0 %6981
    %6983 = vset.pattern.permute.xlu0 0
    %6984 = vperm.xlu0 %6983, %v6287
    %v6985 = vpop.permute.xlu0 %6984
    %6986 = vset.pattern.permute.xlu0 0
    %6987 = vperm.xlu0 %6986, %v6336
    %v6988 = vpop.permute.xlu0 %6987
    %6989 = vset.pattern.permute.xlu0 0
    %6990 = vperm.xlu0 %6989, %v6385
    %v6991 = vpop.permute.xlu0 %6990
    %6992 = vset.pattern.permute.xlu0 0
    %6993 = vperm.xlu0 %6992, %v6434
    %v6994 = vpop.permute.xlu0 %6993
    %6995 = vset.pattern.permute.xlu0 0
    %6996 = vperm.xlu0 %6995, %v6483
    %v6997 = vpop.permute.xlu0 %6996
    %6998 = vset.pattern.permute.xlu0 0
    %6999 = vperm.xlu0 %6998, %v6532
    %v7000 = vpop.permute.xlu0 %6999
    %7001 = vset.pattern.permute.xlu0 0
    %7002 = vperm.xlu0 %7001, %v6581
    %v7003 = vpop.permute.xlu0 %7002
    %7004 = vset.pattern.permute.xlu0 0
    %7005 = vperm.xlu0 %7004, %v6630
    %v7006 = vpop.permute.xlu0 %7005
    %7007 = vset.pattern.permute.xlu0 0
    %7008 = vperm.xlu0 %7007, %v6679
    %v7009 = vpop.permute.xlu0 %7008
    %7010 = vset.pattern.permute.xlu0 0
    %7011 = vperm.xlu0 %7010, %v6728
    %v7012 = vpop.permute.xlu0 %7011
    %7013 = vset.pattern.permute.xlu0 0
    %7014 = vperm.xlu0 %7013, %v6777
    %v7015 = vpop.permute.xlu0 %7014
    %7016 = vset.pattern.permute.xlu0 0
    %7017 = vperm.xlu0 %7016, %v6826
    %v7018 = vpop.permute.xlu0 %7017
    %v7019 = vlaneseq
    %v7020 = vand.u32 %v7019, 127
    %v7021 = vlaneseq
    %v7022 = vshrl.u32 %v7021, 7
    %v7023 = vsub.s32 %v7020, %v7022
    %v7024 = vrot.slane %v6829, %v7023
    %v7025 = vadd.s32 %v7020, 4294967288
    %v7026 = vlaneseq
    %v7027 = vshrl.u32 %v7026, 7
    %v7028 = vsub.s32 %v7025, %v7027
    %v7029 = vrot.slane %v6832, %v7028
    %vm7030 = vcmask 130112
    %v7031 = vsel %vm7030, %v7029, %v7024
    %v7032 = vadd.s32 %v7020, 4294967280
    %v7033 = vlaneseq
    %v7034 = vshrl.u32 %v7033, 7
    %v7035 = vsub.s32 %v7032, %v7034
    %v7036 = vrot.slane %v6835, %v7035
    %vm7037 = vcmask 195712
    %v7038 = vsel %vm7037, %v7036, %v7031
    %v7039 = vadd.s32 %v7020, 4294967272
    %v7040 = vlaneseq
    %v7041 = vshrl.u32 %v7040, 7
    %v7042 = vsub.s32 %v7039, %v7041
    %v7043 = vrot.slane %v6838, %v7042
    %vm7044 = vcmask 261312
    %v7045 = vsel %vm7044, %v7043, %v7038
    %v7046 = vadd.s32 %v7020, 4294967264
    %v7047 = vlaneseq
    %v7048 = vshrl.u32 %v7047, 7
    %v7049 = vsub.s32 %v7046, %v7048
    %v7050 = vrot.slane %v6841, %v7049
    %vm7051 = vcmask 326912
    %v7052 = vsel %vm7051, %v7050, %v7045
    %v7053 = vadd.s32 %v7020, 4294967256
    %v7054 = vlaneseq
    %v7055 = vshrl.u32 %v7054, 7
    %v7056 = vsub.s32 %v7053, %v7055
    %v7057 = vrot.slane %v6844, %v7056
    %vm7058 = vcmask 392512
    %v7059 = vsel %vm7058, %v7057, %v7052
    %v7060 = vadd.s32 %v7020, 4294967248
    %v7061 = vlaneseq
    %v7062 = vshrl.u32 %v7061, 7
    %v7063 = vsub.s32 %v7060, %v7062
    %v7064 = vrot.slane %v6847, %v7063
    %vm7065 = vcmask 458112
    %v7066 = vsel %vm7065, %v7064, %v7059
    %v7067 = vadd.s32 %v7020, 4294967240
    %v7068 = vlaneseq
    %v7069 = vshrl.u32 %v7068, 7
    %v7070 = vsub.s32 %v7067, %v7069
    %v7071 = vrot.slane %v6850, %v7070
    %vm7072 = vcmask 523712
    %v7073 = vsel %vm7072, %v7071, %v7066
    %v7074 = vadd.s32 %v7020, 4294967232
    %v7075 = vlaneseq
    %v7076 = vshrl.u32 %v7075, 7
    %v7077 = vsub.s32 %v7074, %v7076
    %v7078 = vrot.slane %v6853, %v7077
    %vm7079 = vcmask 589312
    %v7080 = vsel %vm7079, %v7078, %v7073
    %v7081 = vadd.s32 %v7020, 4294967224
    %v7082 = vlaneseq
    %v7083 = vshrl.u32 %v7082, 7
    %v7084 = vsub.s32 %v7081, %v7083
    %v7085 = vrot.slane %v6856, %v7084
    %vm7086 = vcmask 654912
    %v7087 = vsel %vm7086, %v7085, %v7080
    %v7088 = vadd.s32 %v7020, 4294967216
    %v7089 = vlaneseq
    %v7090 = vshrl.u32 %v7089, 7
    %v7091 = vsub.s32 %v7088, %v7090
    %v7092 = vrot.slane %v6859, %v7091
    %vm7093 = vcmask 720512
    %v7094 = vsel %vm7093, %v7092, %v7087
    %v7095 = vadd.s32 %v7020, 4294967208
    %v7096 = vlaneseq
    %v7097 = vshrl.u32 %v7096, 7
    %v7098 = vsub.s32 %v7095, %v7097
    %v7099 = vrot.slane %v6862, %v7098
    %vm7100 = vcmask 786112
    %v7101 = vsel %vm7100, %v7099, %v7094
    %v7102 = vadd.s32 %v7020, 4294967200
    %v7103 = vlaneseq
    %v7104 = vshrl.u32 %v7103, 7
    %v7105 = vsub.s32 %v7102, %v7104
    %v7106 = vrot.slane %v6865, %v7105
    %vm7107 = vcmask 851712
    %v7108 = vsel %vm7107, %v7106, %v7101
    %v7109 = vadd.s32 %v7020, 4294967192
    %v7110 = vlaneseq
    %v7111 = vshrl.u32 %v7110, 7
    %v7112 = vsub.s32 %v7109, %v7111
    %v7113 = vrot.slane %v6868, %v7112
    %vm7114 = vcmask 917312
    %v7115 = vsel %vm7114, %v7113, %v7108
    %v7116 = vadd.s32 %v7020, 4294967184
    %v7117 = vlaneseq
    %v7118 = vshrl.u32 %v7117, 7
    %v7119 = vsub.s32 %v7116, %v7118
    %v7120 = vrot.slane %v6871, %v7119
    %vm7121 = vcmask 982912
    %v7122 = vsel %vm7121, %v7120, %v7115
    %v7123 = vadd.s32 %v7020, 4294967176
    %v7124 = vlaneseq
    %v7125 = vshrl.u32 %v7124, 7
    %v7126 = vsub.s32 %v7123, %v7125
    %v7127 = vrot.slane %v6874, %v7126
    %vm7128 = vcmask 1048512
    %v7129 = vsel %vm7128, %v7127, %v7122
    %v7130 = vlaneseq
    %v7131 = vshrl.u32 %v7130, 7
    %v7132 = vsub.s32 %v7020, %v7131
    %v7133 = vrot.slane %v6877, %v7132
    %v7134 = vlaneseq
    %v7135 = vshrl.u32 %v7134, 7
    %v7136 = vsub.s32 %v7025, %v7135
    %v7137 = vrot.slane %v6880, %v7136
    %v7138 = vsel %vm7030, %v7137, %v7133
    %v7139 = vlaneseq
    %v7140 = vshrl.u32 %v7139, 7
    %v7141 = vsub.s32 %v7032, %v7140
    %v7142 = vrot.slane %v6883, %v7141
    %v7143 = vsel %vm7037, %v7142, %v7138
    %v7144 = vlaneseq
    %v7145 = vshrl.u32 %v7144, 7
    %v7146 = vsub.s32 %v7039, %v7145
    %v7147 = vrot.slane %v6886, %v7146
    %v7148 = vsel %vm7044, %v7147, %v7143
    %v7149 = vlaneseq
    %v7150 = vshrl.u32 %v7149, 7
    %v7151 = vsub.s32 %v7046, %v7150
    %v7152 = vrot.slane %v6889, %v7151
    %v7153 = vsel %vm7051, %v7152, %v7148
    %v7154 = vlaneseq
    %v7155 = vshrl.u32 %v7154, 7
    %v7156 = vsub.s32 %v7053, %v7155
    %v7157 = vrot.slane %v6892, %v7156
    %v7158 = vsel %vm7058, %v7157, %v7153
    %v7159 = vlaneseq
    %v7160 = vshrl.u32 %v7159, 7
    %v7161 = vsub.s32 %v7060, %v7160
    %v7162 = vrot.slane %v6895, %v7161
    %v7163 = vsel %vm7065, %v7162, %v7158
    %v7164 = vlaneseq
    %v7165 = vshrl.u32 %v7164, 7
    %v7166 = vsub.s32 %v7067, %v7165
    %v7167 = vrot.slane %v6898, %v7166
    %v7168 = vsel %vm7072, %v7167, %v7163
    %v7169 = vlaneseq
    %v7170 = vshrl.u32 %v7169, 7
    %v7171 = vsub.s32 %v7074, %v7170
    %v7172 = vrot.slane %v6901, %v7171
    %v7173 = vsel %vm7079, %v7172, %v7168
    %v7174 = vlaneseq
    %v7175 = vshrl.u32 %v7174, 7
    %v7176 = vsub.s32 %v7081, %v7175
    %v7177 = vrot.slane %v6904, %v7176
    %v7178 = vsel %vm7086, %v7177, %v7173
    %v7179 = vlaneseq
    %v7180 = vshrl.u32 %v7179, 7
    %v7181 = vsub.s32 %v7088, %v7180
    %v7182 = vrot.slane %v6907, %v7181
    %v7183 = vsel %vm7093, %v7182, %v7178
    %v7184 = vlaneseq
    %v7185 = vshrl.u32 %v7184, 7
    %v7186 = vsub.s32 %v7095, %v7185
    %v7187 = vrot.slane %v6910, %v7186
    %v7188 = vsel %vm7100, %v7187, %v7183
    %v7189 = vlaneseq
    %v7190 = vshrl.u32 %v7189, 7
    %v7191 = vsub.s32 %v7102, %v7190
    %v7192 = vrot.slane %v6913, %v7191
    %v7193 = vsel %vm7107, %v7192, %v7188
    %v7194 = vlaneseq
    %v7195 = vshrl.u32 %v7194, 7
    %v7196 = vsub.s32 %v7109, %v7195
    %v7197 = vrot.slane %v6916, %v7196
    %v7198 = vsel %vm7114, %v7197, %v7193
    %v7199 = vlaneseq
    %v7200 = vshrl.u32 %v7199, 7
    %v7201 = vsub.s32 %v7116, %v7200
    %v7202 = vrot.slane %v6919, %v7201
    %v7203 = vsel %vm7121, %v7202, %v7198
    %v7204 = vlaneseq
    %v7205 = vshrl.u32 %v7204, 7
    %v7206 = vsub.s32 %v7123, %v7205
    %v7207 = vrot.slane %v6922, %v7206
    %v7208 = vsel %vm7128, %v7207, %v7203
    %v7209 = vlaneseq
    %v7210 = vshrl.u32 %v7209, 7
    %v7211 = vsub.s32 %v7020, %v7210
    %v7212 = vrot.slane %v6925, %v7211
    %v7213 = vlaneseq
    %v7214 = vshrl.u32 %v7213, 7
    %v7215 = vsub.s32 %v7025, %v7214
    %v7216 = vrot.slane %v6928, %v7215
    %v7217 = vsel %vm7030, %v7216, %v7212
    %v7218 = vlaneseq
    %v7219 = vshrl.u32 %v7218, 7
    %v7220 = vsub.s32 %v7032, %v7219
    %v7221 = vrot.slane %v6931, %v7220
    %v7222 = vsel %vm7037, %v7221, %v7217
    %v7223 = vlaneseq
    %v7224 = vshrl.u32 %v7223, 7
    %v7225 = vsub.s32 %v7039, %v7224
    %v7226 = vrot.slane %v6934, %v7225
    %v7227 = vsel %vm7044, %v7226, %v7222
    %v7228 = vlaneseq
    %v7229 = vshrl.u32 %v7228, 7
    %v7230 = vsub.s32 %v7046, %v7229
    %v7231 = vrot.slane %v6937, %v7230
    %v7232 = vsel %vm7051, %v7231, %v7227
    %v7233 = vlaneseq
    %v7234 = vshrl.u32 %v7233, 7
    %v7235 = vsub.s32 %v7053, %v7234
    %v7236 = vrot.slane %v6940, %v7235
    %v7237 = vsel %vm7058, %v7236, %v7232
    %v7238 = vlaneseq
    %v7239 = vshrl.u32 %v7238, 7
    %v7240 = vsub.s32 %v7060, %v7239
    %v7241 = vrot.slane %v6943, %v7240
    %v7242 = vsel %vm7065, %v7241, %v7237
    %v7243 = vlaneseq
    %v7244 = vshrl.u32 %v7243, 7
    %v7245 = vsub.s32 %v7067, %v7244
    %v7246 = vrot.slane %v6946, %v7245
    %v7247 = vsel %vm7072, %v7246, %v7242
    %v7248 = vlaneseq
    %v7249 = vshrl.u32 %v7248, 7
    %v7250 = vsub.s32 %v7074, %v7249
    %v7251 = vrot.slane %v6949, %v7250
    %v7252 = vsel %vm7079, %v7251, %v7247
    %v7253 = vlaneseq
    %v7254 = vshrl.u32 %v7253, 7
    %v7255 = vsub.s32 %v7081, %v7254
    %v7256 = vrot.slane %v6952, %v7255
    %v7257 = vsel %vm7086, %v7256, %v7252
    %v7258 = vlaneseq
    %v7259 = vshrl.u32 %v7258, 7
    %v7260 = vsub.s32 %v7088, %v7259
    %v7261 = vrot.slane %v6955, %v7260
    %v7262 = vsel %vm7093, %v7261, %v7257
    %v7263 = vlaneseq
    %v7264 = vshrl.u32 %v7263, 7
    %v7265 = vsub.s32 %v7095, %v7264
    %v7266 = vrot.slane %v6958, %v7265
    %v7267 = vsel %vm7100, %v7266, %v7262
    %v7268 = vlaneseq
    %v7269 = vshrl.u32 %v7268, 7
    %v7270 = vsub.s32 %v7102, %v7269
    %v7271 = vrot.slane %v6961, %v7270
    %v7272 = vsel %vm7107, %v7271, %v7267
    %v7273 = vlaneseq
    %v7274 = vshrl.u32 %v7273, 7
    %v7275 = vsub.s32 %v7109, %v7274
    %v7276 = vrot.slane %v6964, %v7275
    %v7277 = vsel %vm7114, %v7276, %v7272
    %v7278 = vlaneseq
    %v7279 = vshrl.u32 %v7278, 7
    %v7280 = vsub.s32 %v7116, %v7279
    %v7281 = vrot.slane %v6967, %v7280
    %v7282 = vsel %vm7121, %v7281, %v7277
    %v7283 = vlaneseq
    %v7284 = vshrl.u32 %v7283, 7
    %v7285 = vsub.s32 %v7123, %v7284
    %v7286 = vrot.slane %v6970, %v7285
    %v7287 = vsel %vm7128, %v7286, %v7282
    %v7288 = vlaneseq
    %v7289 = vshrl.u32 %v7288, 7
    %v7290 = vsub.s32 %v7020, %v7289
    %v7291 = vrot.slane %v6973, %v7290
    %v7292 = vlaneseq
    %v7293 = vshrl.u32 %v7292, 7
    %v7294 = vsub.s32 %v7025, %v7293
    %v7295 = vrot.slane %v6976, %v7294
    %v7296 = vsel %vm7030, %v7295, %v7291
    %v7297 = vlaneseq
    %v7298 = vshrl.u32 %v7297, 7
    %v7299 = vsub.s32 %v7032, %v7298
    %v7300 = vrot.slane %v6979, %v7299
    %v7301 = vsel %vm7037, %v7300, %v7296
    %v7302 = vlaneseq
    %v7303 = vshrl.u32 %v7302, 7
    %v7304 = vsub.s32 %v7039, %v7303
    %v7305 = vrot.slane %v6982, %v7304
    %v7306 = vsel %vm7044, %v7305, %v7301
    %v7307 = vlaneseq
    %v7308 = vshrl.u32 %v7307, 7
    %v7309 = vsub.s32 %v7046, %v7308
    %v7310 = vrot.slane %v6985, %v7309
    %v7311 = vsel %vm7051, %v7310, %v7306
    %v7312 = vlaneseq
    %v7313 = vshrl.u32 %v7312, 7
    %v7314 = vsub.s32 %v7053, %v7313
    %v7315 = vrot.slane %v6988, %v7314
    %v7316 = vsel %vm7058, %v7315, %v7311
    %v7317 = vlaneseq
    %v7318 = vshrl.u32 %v7317, 7
    %v7319 = vsub.s32 %v7060, %v7318
    %v7320 = vrot.slane %v6991, %v7319
    %v7321 = vsel %vm7065, %v7320, %v7316
    %v7322 = vlaneseq
    %v7323 = vshrl.u32 %v7322, 7
    %v7324 = vsub.s32 %v7067, %v7323
    %v7325 = vrot.slane %v6994, %v7324
    %v7326 = vsel %vm7072, %v7325, %v7321
    %v7327 = vlaneseq
    %v7328 = vshrl.u32 %v7327, 7
    %v7329 = vsub.s32 %v7074, %v7328
    %v7330 = vrot.slane %v6997, %v7329
    %v7331 = vsel %vm7079, %v7330, %v7326
    %v7332 = vlaneseq
    %v7333 = vshrl.u32 %v7332, 7
    %v7334 = vsub.s32 %v7081, %v7333
    %v7335 = vrot.slane %v7000, %v7334
    %v7336 = vsel %vm7086, %v7335, %v7331
    %v7337 = vlaneseq
    %v7338 = vshrl.u32 %v7337, 7
    %v7339 = vsub.s32 %v7088, %v7338
    %v7340 = vrot.slane %v7003, %v7339
    %v7341 = vsel %vm7093, %v7340, %v7336
    %v7342 = vlaneseq
    %v7343 = vshrl.u32 %v7342, 7
    %v7344 = vsub.s32 %v7095, %v7343
    %v7345 = vrot.slane %v7006, %v7344
    %v7346 = vsel %vm7100, %v7345, %v7341
    %v7347 = vlaneseq
    %v7348 = vshrl.u32 %v7347, 7
    %v7349 = vsub.s32 %v7102, %v7348
    %v7350 = vrot.slane %v7009, %v7349
    %v7351 = vsel %vm7107, %v7350, %v7346
    %v7352 = vlaneseq
    %v7353 = vshrl.u32 %v7352, 7
    %v7354 = vsub.s32 %v7109, %v7353
    %v7355 = vrot.slane %v7012, %v7354
    %v7356 = vsel %vm7114, %v7355, %v7351
    %v7357 = vlaneseq
    %v7358 = vshrl.u32 %v7357, 7
    %v7359 = vsub.s32 %v7116, %v7358
    %v7360 = vrot.slane %v7015, %v7359
    %v7361 = vsel %vm7121, %v7360, %v7356
    %v7362 = vlaneseq
    %v7363 = vshrl.u32 %v7362, 7
    %v7364 = vsub.s32 %v7123, %v7363
    %v7365 = vrot.slane %v7018, %v7364
    %v7366 = vsel %vm7128, %v7365, %v7361
    %v7367 = vcombine.low %v7129, %v7208
    %v7368 = vcombine.low %v7287, %v7366
    %v7370 = vunpack.c.l.s4 1966171168
    %v7371 = vunpack.c.0.s8 %v7370
    %v7372 = vlaneseq
    %v7373 = vshrl.u32 %v7372, 7
    %v7374 = vsub.s32 %v7371, %v7373
    %v7375 = vrot.slane %v7367, %v7374
    %v7377 = vunpack.c.l.s4 1966171168
    %v7378 = vunpack.c.0.s8 %v7377
    %v7379 = vlaneseq
    %v7380 = vshrl.u32 %v7379, 7
    %v7381 = vsub.s32 %v7378, %v7380
    %v7382 = vrot.slane %v7368, %v7381
    %v7383 = vcombine.low %v7375, %v7382
    %v7385 = vunpack.c.l.s4 1966171168
    %v7386 = vunpack.c.0.s8 %v7385
    %v7387 = vlaneseq
    %v7388 = vshrl.u32 %v7387, 7
    %v7389 = vsub.s32 %v7386, %v7388
    %v7390 = vrot.slane %v7383, %v7389
    %v7392 = vlaneseq
    %vm7393 = vcmp.ge.s32.totalorder %v7392, 0
    %vm7394 = vcmp.lt.s32.totalorder %v7392, 512
    %vm7395 = vmand %vm7393, %vm7394
    %7396 = vst.msk [vmem:[#allocation3] sm:$0xf] %vm7395, %v7390
    // Predicated region
    $region22: #{tpu_custom_call.1} parent=1 // pred_check
      _
    $region23: #{tpu_custom_call.1} parent=1 // pred_check_branch
      %7398 = sbr.rel (0) target = $region25
    $region24: #{tpu_custom_call.1} parent=1 // pred_region
      %s7400 = ssub.s32 64, 64
      %7401 = vsyncadd [#allocation4], %s7400
      %s7403 = sshll.u32 [#allocation3], 4
      %s7404 = int_to_ptr.vmem [resolvable:$true] %s7403
      %7406 = dma.vmem_to_hbm [thread:$0]  %s7404, 64, %s5, [#allocation4]
    $region25: #{tpu_custom_call.1} parent=1 // pred_fallthru
      _
    // Predicated region
    $region26: #{tpu_custom_call.1} parent=1 // pred_check
      _
    $region27: #{tpu_custom_call.1} parent=1 // pred_check_branch
      %7408 = sbr.rel (0) target = $region29
    $region28: #{tpu_custom_call.1} parent=1 // pred_region
      %7409 = dma.done [#allocation4], 64
    $region29: #{tpu_custom_call.1} parent=1 // pred_fallthru
      _
    %7410 = vsyncpa [#allocation4], 1

</llo_original>
